<compile_context>
chip_gen: v5e
topology: v5e:2x2
jax: 0.10.0
libtpu: 0.0.40
codegen_flags: <defaults>
</compile_context>

<pallas_src>
import functools

import jax
import jax.numpy as jnp
from jax.experimental import pallas as pl
from jax.experimental.pallas import tpu as pltpu


def _fused_disc_block_kernel(x_ref, w0_ref, b0_ref, w1_ref, b1_ref, o_ref,
                             xpad_ref, ypad_ref, *, negative_slope):
    """One batch element per grid step.

    x_ref:    (1, H, W, Cin)         unpadded NHWC input block
    w0_ref:   (9*Cin,  Cout)         conv0 weights, (kh, kw, cin) merged into K
    b0_ref:   (1, Cout)
    w1_ref:   (9*Cout, Cout)         conv1 weights, (kh, kw, cout) merged into K
    b1_ref:   (1, Cout)
    o_ref:    (1, H, W, Cout)        NHWC output block
    xpad_ref: VMEM (H+2, W+2, Cin)   zero-haloed conv0 input (scratch)
    ypad_ref: VMEM (H+2, W+2, Cout)  zero-haloed conv0 output = conv1 input (scratch, f32)
    """
    H = o_ref.shape[1]
    W = o_ref.shape[2]
    Cout = o_ref.shape[3]

    def conv3x3_lrelu(inp_pad, w_ref, b_ref):
        """inp_pad: (H+2, W+2, C) zero-padded activation value. Returns (H*W, Cout) f32."""
        c = inp_pad.shape[-1]
        taps = []
        for kh in range(3):
            rows = inp_pad[kh:kh + H]                  # (H, W+2, C) leading-dim slice
            for kw in range(3):
                taps.append(rows[:, kw:kw + W, :])     # (H, W, C)
        # Full im2col: one MXU matmul per conv (K = 9*C), accumulation stays in the MXU.
        lhs = jnp.concatenate(taps, axis=-1).reshape(H * W, 9 * c)
        acc = jnp.dot(lhs, w_ref[...], preferred_element_type=jnp.float32)
        acc = acc + b_ref[...].astype(jnp.float32)
        # LeakyReLU(0.2) == max(x, 0.2*x): one mul + one max on the VPU.
        return jnp.maximum(acc, negative_slope * acc)

    # ---- conv0: build the padded input directly in VMEM (no jnp.pad, no extra HBM pass) ----
    xpad_ref[...] = jnp.zeros_like(xpad_ref)
    xpad_ref[pl.ds(1, H), pl.ds(1, W), :] = x_ref[0]
    y = conv3x3_lrelu(xpad_ref[...], w0_ref, b0_ref)

    # ---- conv1: intermediate activation stays in VMEM (f32); its halo is already zero ----
    ypad_ref[...] = jnp.zeros_like(ypad_ref)
    ypad_ref[pl.ds(1, H), pl.ds(1, W), :] = y.reshape(H, W, Cout)
    z = conv3x3_lrelu(ypad_ref[...], w1_ref, b1_ref)

    o_ref[0] = z.reshape(H, W, Cout).astype(o_ref.dtype)


def disc_conv_block(x_nchw, params, *, negative_slope=0.2):
    """Forward pass of DiscConvBlock. Input/output follow the PyTorch NCHW convention."""
    N, Cin, H, W = x_nchw.shape
    Cout = params["b0"].shape[0]

    # NCHW -> NHWC once at the kernel boundary (weights are already stored as HWIO).
    x = jnp.transpose(x_nchw, (0, 2, 3, 1))

    # Merge (kh, kw, cin) into a single contraction axis of size 9*Cin / 9*Cout.
    w0 = params["w0"].reshape(9 * Cin, Cout)
    w1 = params["w1"].reshape(9 * Cout, Cout)
    b0 = params["b0"].reshape(1, Cout)
    b1 = params["b1"].reshape(1, Cout)

    kernel = functools.partial(_fused_disc_block_kernel,
                               negative_slope=negative_slope)

    flops = 2 * N * H * W * 9 * (Cin * Cout + Cout * Cout)
    bytes_accessed = 4 * (N * H * W * (Cin + Cout)
                          + 9 * Cin * Cout + 9 * Cout * Cout + 2 * Cout)

    out = pl.pallas_call(
        kernel,
        out_shape=jax.ShapeDtypeStruct((N, H, W, Cout), x.dtype),
        grid_spec=pltpu.PrefetchScalarGridSpec(
            num_scalar_prefetch=0,
            grid=(N,),
            in_specs=[
                pl.BlockSpec((1, H, W, Cin), lambda n: (n, 0, 0, 0)),
                pl.BlockSpec((9 * Cin, Cout), lambda n: (0, 0)),
                pl.BlockSpec((1, Cout), lambda n: (0, 0)),
                pl.BlockSpec((9 * Cout, Cout), lambda n: (0, 0)),
                pl.BlockSpec((1, Cout), lambda n: (0, 0)),
            ],
            out_specs=pl.BlockSpec((1, H, W, Cout), lambda n: (n, 0, 0, 0)),
            scratch_shapes=[
                pltpu.VMEM((H + 2, W + 2, Cin), x.dtype),       # padded conv0 input
                pltpu.VMEM((H + 2, W + 2, Cout), jnp.float32),  # padded conv0 output
            ],
        ),
        compiler_params=pltpu.CompilerParams(
            dimension_semantics=("parallel",),
            vmem_limit_bytes=32 * 1024 * 1024,
        ),
        cost_estimate=pl.CostEstimate(
            flops=flops, transcendentals=0, bytes_accessed=bytes_accessed),
    )(x, w0, b0, w1, b1)

    # NHWC -> NCHW back to the PyTorch convention.
    return jnp.transpose(out, (0, 3, 1, 2))


def init_params(key, input_size, output_size, dtype=jnp.float32):
    """Deterministic synthetic parameters (same shapes as nn.Conv2d, stored as HWIO)."""
    k0, k1, k2, k3 = jax.random.split(key, 4)
    scale0 = 1.0 / jnp.sqrt(input_size * 9.0)
    scale1 = 1.0 / jnp.sqrt(output_size * 9.0)
    return {
        "w0": (jax.random.normal(k0, (3, 3, input_size, output_size), dtype) * scale0),
        "b0": (jax.random.normal(k1, (output_size,), dtype) * scale0),
        "w1": (jax.random.normal(k2, (3, 3, output_size, output_size), dtype) * scale1),
        "b1": (jax.random.normal(k3, (output_size,), dtype) * scale1),
    }


def _reference(x_nchw, params):
    """Pure-JAX reference (lax conv) for correctness check."""
    def conv(x, w, b):
        y = jax.lax.conv_general_dilated(
            x, w, window_strides=(1, 1), padding="SAME",
            dimension_numbers=("NCHW", "HWIO", "NCHW"))
        y = y + b[None, :, None, None]
        return jnp.where(y >= 0, y, 0.2 * y)

    x = conv(x_nchw, params["w0"], params["b0"])
    x = conv(x, params["w1"], params["b1"])
    return x


if __name__ == "__main__":
    N, Cin, Cout, S = 2, 4, 8, 16
    key = jax.random.PRNGKey(0)
    kx, kp = jax.random.split(key)
    x = jax.random.normal(kx, (N, Cin, S, S), jnp.float32)
    params = init_params(kp, Cin, Cout)

    out = jax.block_until_ready(disc_conv_block(x, params))
    ref = jax.block_until_ready(_reference(x, params))

    assert out.shape == (N, Cout, S, S), out.shape
    err = float(jnp.max(jnp.abs(out - ref)))
    assert jnp.allclose(out, ref, atol=1e-4, rtol=1e-4), err
    print("KERNEL_OK")
</pallas_src>

<mosaic_0001>
module attributes {stable_mosaic.version = 11 : i64} {
  func.func @_fused_disc_block_kernel(%arg0: i32, %arg1: memref<1x16x16x4xf32, #tpu.memory_space<vmem>>, %arg2: memref<36x8xf32, #tpu.memory_space<vmem>>, %arg3: memref<1x8xf32, #tpu.memory_space<vmem>>, %arg4: memref<72x8xf32, #tpu.memory_space<vmem>>, %arg5: memref<1x8xf32, #tpu.memory_space<vmem>>, %arg6: memref<1x16x16x8xf32, #tpu.memory_space<vmem>>, %arg7: memref<18x18x4xf32, #tpu.memory_space<vmem>>, %arg8: memref<18x18x8xf32, #tpu.memory_space<vmem>>) attributes {dimension_semantics = [#tpu.dimension_semantics<parallel>], iteration_bounds = array<i64: 2>, scalar_prefetch = 0 : i64, scratch_operands = 2 : i64, tpu.core_type = #tpu.core_type<tc>, window_params = [{transform_indices = @transform_0, window_bounds = array<i64: 1, 16, 16, 4>}, {pipeline_mode = #tpu.pipeline_mode<synchronous>, transform_indices = @transform_1, window_bounds = array<i64: 36, 8>}, {pipeline_mode = #tpu.pipeline_mode<synchronous>, transform_indices = @transform_2, window_bounds = array<i64: 1, 8>}, {pipeline_mode = #tpu.pipeline_mode<synchronous>, transform_indices = @transform_3, window_bounds = array<i64: 72, 8>}, {pipeline_mode = #tpu.pipeline_mode<synchronous>, transform_indices = @transform_4, window_bounds = array<i64: 1, 8>}, {transform_indices = @transform_5, window_bounds = array<i64: 1, 16, 16, 8>}]} {
    %cst = arith.constant 0.000000e+00 : f32
    %0 = vector.broadcast %cst : f32 to vector<18x18x4xf32>
    %c0 = arith.constant 0 : index
    %c0_0 = arith.constant 0 : index
    %c0_1 = arith.constant 0 : index
    %1 = vector.load %arg7[%c0, %c0_0, %c0_1] : memref<18x18x4xf32, #tpu.memory_space<vmem>>, vector<18x18x4xf32>
    tpu.vector_store %arg7[%c0, %c0_0, %c0_1], %0 {strides = array<i32>} : memref<18x18x4xf32, #tpu.memory_space<vmem>>, vector<18x18x4xf32>,
    %c0_2 = arith.constant 0 : index
    %c0_3 = arith.constant 0 : index
    %c0_4 = arith.constant 0 : index
    %c0_5 = arith.constant 0 : index
    %2 = vector.load %arg1[%c0_2, %c0_3, %c0_4, %c0_5] : memref<1x16x16x4xf32, #tpu.memory_space<vmem>>, vector<1x16x16x4xf32>
    %3 = vector.shape_cast %2 : vector<1x16x16x4xf32> to vector<16x16x4xf32>
    %c1 = arith.constant 1 : index
    %c1_6 = arith.constant 1 : index
    %c0_7 = arith.constant 0 : index
    %4 = vector.load %arg7[%c1, %c1_6, %c0_7] : memref<18x18x4xf32, #tpu.memory_space<vmem>>, vector<16x16x4xf32>
    tpu.vector_store %arg7[%c1, %c1_6, %c0_7], %3 {strides = array<i32>} : memref<18x18x4xf32, #tpu.memory_space<vmem>>, vector<16x16x4xf32>,
    %c0_8 = arith.constant 0 : index
    %c0_9 = arith.constant 0 : index
    %c0_10 = arith.constant 0 : index
    %5 = vector.load %arg7[%c0_8, %c0_9, %c0_10] : memref<18x18x4xf32, #tpu.memory_space<vmem>>, vector<18x18x4xf32>
    %6 = vector.extract_strided_slice %5 {offsets = [0, 0, 0], sizes = [16, 18, 4], strides = [1, 1, 1]} : vector<18x18x4xf32> to vector<16x18x4xf32>
    %7 = vector.extract_strided_slice %6 {offsets = [0, 0, 0], sizes = [16, 16, 4], strides = [1, 1, 1]} : vector<16x18x4xf32> to vector<16x16x4xf32>
    %8 = vector.extract_strided_slice %6 {offsets = [0, 1, 0], sizes = [16, 16, 4], strides = [1, 1, 1]} : vector<16x18x4xf32> to vector<16x16x4xf32>
    %9 = vector.extract_strided_slice %6 {offsets = [0, 2, 0], sizes = [16, 16, 4], strides = [1, 1, 1]} : vector<16x18x4xf32> to vector<16x16x4xf32>
    %10 = vector.extract_strided_slice %5 {offsets = [1, 0, 0], sizes = [16, 18, 4], strides = [1, 1, 1]} : vector<18x18x4xf32> to vector<16x18x4xf32>
    %11 = vector.extract_strided_slice %10 {offsets = [0, 0, 0], sizes = [16, 16, 4], strides = [1, 1, 1]} : vector<16x18x4xf32> to vector<16x16x4xf32>
    %12 = vector.extract_strided_slice %10 {offsets = [0, 1, 0], sizes = [16, 16, 4], strides = [1, 1, 1]} : vector<16x18x4xf32> to vector<16x16x4xf32>
    %13 = vector.extract_strided_slice %10 {offsets = [0, 2, 0], sizes = [16, 16, 4], strides = [1, 1, 1]} : vector<16x18x4xf32> to vector<16x16x4xf32>
    %14 = vector.extract_strided_slice %5 {offsets = [2, 0, 0], sizes = [16, 18, 4], strides = [1, 1, 1]} : vector<18x18x4xf32> to vector<16x18x4xf32>
    %15 = vector.extract_strided_slice %14 {offsets = [0, 0, 0], sizes = [16, 16, 4], strides = [1, 1, 1]} : vector<16x18x4xf32> to vector<16x16x4xf32>
    %16 = vector.extract_strided_slice %14 {offsets = [0, 1, 0], sizes = [16, 16, 4], strides = [1, 1, 1]} : vector<16x18x4xf32> to vector<16x16x4xf32>
    %17 = vector.extract_strided_slice %14 {offsets = [0, 2, 0], sizes = [16, 16, 4], strides = [1, 1, 1]} : vector<16x18x4xf32> to vector<16x16x4xf32>
    %18 = tpu.concatenate %7, %8, %9, %11, %12, %13, %15, %16, %17 in 2 : vector<16x16x4xf32>, vector<16x16x4xf32>, vector<16x16x4xf32>, vector<16x16x4xf32>, vector<16x16x4xf32>, vector<16x16x4xf32>, vector<16x16x4xf32>, vector<16x16x4xf32>, vector<16x16x4xf32> -> vector<16x16x36xf32>
    %19 = vector.shape_cast %18 : vector<16x16x36xf32> to vector<256x36xf32>
    %c0_11 = arith.constant 0 : index
    %c0_12 = arith.constant 0 : index
    %20 = vector.load %arg2[%c0_11, %c0_12] : memref<36x8xf32, #tpu.memory_space<vmem>>, vector<36x8xf32>
    %cst_13 = arith.constant dense<0.000000e+00> : vector<256x8xf32>
    %21 = tpu.matmul %19, %20, %cst_13 {dimension_numbers = #tpu.dot_dimension_numbers<[1], [0], [0], [1], [0, 0, 1, 1], [], []>} : vector<256x36xf32>, vector<36x8xf32>, vector<256x8xf32> -> vector<256x8xf32>
    %c0_14 = arith.constant 0 : index
    %c0_15 = arith.constant 0 : index
    %22 = vector.load %arg3[%c0_14, %c0_15] : memref<1x8xf32, #tpu.memory_space<vmem>>, vector<1x8xf32>
    %23 = vector.broadcast %22 : vector<1x8xf32> to vector<256x8xf32>
    %24 = arith.addf %21, %23 : vector<256x8xf32>
    %cst_16 = arith.constant 2.000000e-01 : f32
    %25 = vector.broadcast %cst_16 : f32 to vector<256x8xf32>
    %26 = arith.mulf %25, %24 : vector<256x8xf32>
    %27 = arith.maximumf %24, %26 : vector<256x8xf32>
    %cst_17 = arith.constant 0.000000e+00 : f32
    %28 = vector.broadcast %cst_17 : f32 to vector<18x18x8xf32>
    %c0_18 = arith.constant 0 : index
    %c0_19 = arith.constant 0 : index
    %c0_20 = arith.constant 0 : index
    %29 = vector.load %arg8[%c0_18, %c0_19, %c0_20] : memref<18x18x8xf32, #tpu.memory_space<vmem>>, vector<18x18x8xf32>
    tpu.vector_store %arg8[%c0_18, %c0_19, %c0_20], %28 {strides = array<i32>} : memref<18x18x8xf32, #tpu.memory_space<vmem>>, vector<18x18x8xf32>,
    %30 = vector.shape_cast %27 : vector<256x8xf32> to vector<16x16x8xf32>
    %c1_21 = arith.constant 1 : index
    %c1_22 = arith.constant 1 : index
    %c0_23 = arith.constant 0 : index
    %31 = vector.load %arg8[%c1_21, %c1_22, %c0_23] : memref<18x18x8xf32, #tpu.memory_space<vmem>>, vector<16x16x8xf32>
    tpu.vector_store %arg8[%c1_21, %c1_22, %c0_23], %30 {strides = array<i32>} : memref<18x18x8xf32, #tpu.memory_space<vmem>>, vector<16x16x8xf32>,
    %c0_24 = arith.constant 0 : index
    %c0_25 = arith.constant 0 : index
    %c0_26 = arith.constant 0 : index
    %32 = vector.load %arg8[%c0_24, %c0_25, %c0_26] : memref<18x18x8xf32, #tpu.memory_space<vmem>>, vector<18x18x8xf32>
    %33 = vector.extract_strided_slice %32 {offsets = [0, 0, 0], sizes = [16, 18, 8], strides = [1, 1, 1]} : vector<18x18x8xf32> to vector<16x18x8xf32>
    %34 = vector.extract_strided_slice %33 {offsets = [0, 0, 0], sizes = [16, 16, 8], strides = [1, 1, 1]} : vector<16x18x8xf32> to vector<16x16x8xf32>
    %35 = vector.extract_strided_slice %33 {offsets = [0, 1, 0], sizes = [16, 16, 8], strides = [1, 1, 1]} : vector<16x18x8xf32> to vector<16x16x8xf32>
    %36 = vector.extract_strided_slice %33 {offsets = [0, 2, 0], sizes = [16, 16, 8], strides = [1, 1, 1]} : vector<16x18x8xf32> to vector<16x16x8xf32>
    %37 = vector.extract_strided_slice %32 {offsets = [1, 0, 0], sizes = [16, 18, 8], strides = [1, 1, 1]} : vector<18x18x8xf32> to vector<16x18x8xf32>
    %38 = vector.extract_strided_slice %37 {offsets = [0, 0, 0], sizes = [16, 16, 8], strides = [1, 1, 1]} : vector<16x18x8xf32> to vector<16x16x8xf32>
    %39 = vector.extract_strided_slice %37 {offsets = [0, 1, 0], sizes = [16, 16, 8], strides = [1, 1, 1]} : vector<16x18x8xf32> to vector<16x16x8xf32>
    %40 = vector.extract_strided_slice %37 {offsets = [0, 2, 0], sizes = [16, 16, 8], strides = [1, 1, 1]} : vector<16x18x8xf32> to vector<16x16x8xf32>
    %41 = vector.extract_strided_slice %32 {offsets = [2, 0, 0], sizes = [16, 18, 8], strides = [1, 1, 1]} : vector<18x18x8xf32> to vector<16x18x8xf32>
    %42 = vector.extract_strided_slice %41 {offsets = [0, 0, 0], sizes = [16, 16, 8], strides = [1, 1, 1]} : vector<16x18x8xf32> to vector<16x16x8xf32>
    %43 = vector.extract_strided_slice %41 {offsets = [0, 1, 0], sizes = [16, 16, 8], strides = [1, 1, 1]} : vector<16x18x8xf32> to vector<16x16x8xf32>
    %44 = vector.extract_strided_slice %41 {offsets = [0, 2, 0], sizes = [16, 16, 8], strides = [1, 1, 1]} : vector<16x18x8xf32> to vector<16x16x8xf32>
    %45 = tpu.concatenate %34, %35, %36, %38, %39, %40, %42, %43, %44 in 2 : vector<16x16x8xf32>, vector<16x16x8xf32>, vector<16x16x8xf32>, vector<16x16x8xf32>, vector<16x16x8xf32>, vector<16x16x8xf32>, vector<16x16x8xf32>, vector<16x16x8xf32>, vector<16x16x8xf32> -> vector<16x16x72xf32>
    %46 = vector.shape_cast %45 : vector<16x16x72xf32> to vector<256x72xf32>
    %c0_27 = arith.constant 0 : index
    %c0_28 = arith.constant 0 : index
    %47 = vector.load %arg4[%c0_27, %c0_28] : memref<72x8xf32, #tpu.memory_space<vmem>>, vector<72x8xf32>
    %cst_29 = arith.constant dense<0.000000e+00> : vector<256x8xf32>
    %48 = tpu.matmul %46, %47, %cst_29 {dimension_numbers = #tpu.dot_dimension_numbers<[1], [0], [0], [1], [0, 0, 1, 1], [], []>} : vector<256x72xf32>, vector<72x8xf32>, vector<256x8xf32> -> vector<256x8xf32>
    %c0_30 = arith.constant 0 : index
    %c0_31 = arith.constant 0 : index
    %49 = vector.load %arg5[%c0_30, %c0_31] : memref<1x8xf32, #tpu.memory_space<vmem>>, vector<1x8xf32>
    %50 = vector.broadcast %49 : vector<1x8xf32> to vector<256x8xf32>
    %51 = arith.addf %48, %50 : vector<256x8xf32>
    %cst_32 = arith.constant 2.000000e-01 : f32
    %52 = vector.broadcast %cst_32 : f32 to vector<256x8xf32>
    %53 = arith.mulf %52, %51 : vector<256x8xf32>
    %54 = arith.maximumf %51, %53 : vector<256x8xf32>
    %55 = vector.shape_cast %54 : vector<256x8xf32> to vector<16x16x8xf32>
    %c0_33 = arith.constant 0 : index
    %c0_34 = arith.constant 0 : index
    %c0_35 = arith.constant 0 : index
    %c0_36 = arith.constant 0 : index
    %56 = vector.load %arg6[%c0_33, %c0_34, %c0_35, %c0_36] : memref<1x16x16x8xf32, #tpu.memory_space<vmem>>, vector<1x16x16x8xf32>
    %57 = vector.shape_cast %56 : vector<1x16x16x8xf32> to vector<16x16x8xf32>
    %58 = vector.shape_cast %55 : vector<16x16x8xf32> to vector<1x16x16x8xf32>
    tpu.vector_store %arg6[%c0_33, %c0_34, %c0_35, %c0_36], %58 {strides = array<i32>} : memref<1x16x16x8xf32, #tpu.memory_space<vmem>>, vector<1x16x16x8xf32>,
    return
  }
  func.func @transform_0(%arg0: i32) -> (i32, i32, i32, i32) {
    %c0_i32 = arith.constant 0 : i32
    %c0_i32_0 = arith.constant 0 : i32
    %c0_i32_1 = arith.constant 0 : i32
    %c0_i32_2 = arith.constant 0 : i32
    return %arg0, %c0_i32, %c0_i32_0, %c0_i32_1 : i32, i32, i32, i32
  }
  func.func @transform_1(%arg0: i32) -> (i32, i32) {
    %c0_i32 = arith.constant 0 : i32
    %c0_i32_0 = arith.constant 0 : i32
    %c0_i32_1 = arith.constant 0 : i32
    return %c0_i32, %c0_i32_0 : i32, i32
  }
  func.func @transform_2(%arg0: i32) -> (i32, i32) {
    %c0_i32 = arith.constant 0 : i32
    %c0_i32_0 = arith.constant 0 : i32
    %c0_i32_1 = arith.constant 0 : i32
    return %c0_i32, %c0_i32_0 : i32, i32
  }
  func.func @transform_3(%arg0: i32) -> (i32, i32) {
    %c0_i32 = arith.constant 0 : i32
    %c0_i32_0 = arith.constant 0 : i32
    %c0_i32_1 = arith.constant 0 : i32
    return %c0_i32, %c0_i32_0 : i32, i32
  }
  func.func @transform_4(%arg0: i32) -> (i32, i32) {
    %c0_i32 = arith.constant 0 : i32
    %c0_i32_0 = arith.constant 0 : i32
    %c0_i32_1 = arith.constant 0 : i32
    return %c0_i32, %c0_i32_0 : i32, i32
  }
  func.func @transform_5(%arg0: i32) -> (i32, i32, i32, i32) {
    %c0_i32 = arith.constant 0 : i32
    %c0_i32_0 = arith.constant 0 : i32
    %c0_i32_1 = arith.constant 0 : i32
    %c0_i32_2 = arith.constant 0 : i32
    return %arg0, %c0_i32, %c0_i32_0, %c0_i32_1 : i32, i32, i32, i32
  }
}

</mosaic_0001>

<llo_original>
// kernel: tpu_custom_call.1
$region0: #{tpu_custom_call.1}
  #allocation0 [shape = 'u32[]', space=smem, size = 0x4, offset = 0x4, fixed_abs, tag = 'smem constant byte address 0x4 - core index']
  #allocation1 [shape = 'u32[72,128]{1,0:T(1,128)}', space=vmem, size = 0x9000, scoped, tag = 'internal scratch']
  #allocation2 [shape = 'f32[18,18,4]{2,1,0:T(8,128)}', space=vmem, size = 0x36000, scoped, tag = 'scratch operand']
  #allocation3 [shape = 'f32[18,18,8]{2,1,0:T(8,128)}', space=vmem, size = 0x36000, scoped, tag = 'scratch operand']
  %s0 = inlined_call_operand.vmem [shape: f32[2,16,16,4], index: 0, kind: input, shape index: {}]
  %s1 = inlined_call_operand.vmem [shape: f32[36,8], index: 1, kind: input, shape index: {}]
  %s2 = inlined_call_operand.vmem [shape: f32[1,8], index: 2, kind: input, shape index: {}]
  %s3 = inlined_call_operand.vmem [shape: f32[72,8], index: 3, kind: input, shape index: {}]
  %s4 = inlined_call_operand.vmem [shape: f32[1,8], index: 4, kind: input, shape index: {}]
  %s5 = inlined_call_operand.vmem [shape: f32[2,16,16,8], index: 5, kind: output, shape index: {}]
  %s6 = sld [smem:[#allocation0]]
  $region53: #{tpu_custom_call.1} parent=0
    _
  %s8 = ssub.s32 1, %s6
  %s9 = scalar_select 0, %s8, %s6
  loop: start=0, step=1, limit=4
  $region2: #{tpu_custom_call.1} parent=0 // loop_pre_header
    _
  $region3: #{tpu_custom_call.1} parent=0 // loop_header
    %s11 = sphi 0, %s15
    %p12 = scmp.ge.s32.totalorder %s11, 4
    %s21 = sphi 0, %s23
    %s24 = sphi 0, %s21
    %s25 = sphi 0, %s24
    %s41 = sphi 0, %s25
    %s45 = sphi 0, %s45
    %s47 = sphi 0, %s45
    %s48 = sphi 0, %s47
    %s62 = sphi 0, %s48
    %s66 = sphi 0, %s66
    %s68 = sphi 0, %s66
    %s69 = sphi 0, %s68
    %s83 = sphi 0, %s69
    %s87 = sphi 0, %s87
    %s89 = sphi 0, %s87
    %s90 = sphi 0, %s89
    %s104 = sphi 0, %s90
    %s108 = sphi 0, %s108
    %s110 = sphi 0, %s108
    %s111 = sphi 0, %s110
    %s125 = sphi 0, %s111
    %s131 = sphi 0, %s133
    %s134 = sphi 0, %s131
    %s135 = sphi 0, %s134
    %s151 = sphi 0, %s135
  $region4: #{tpu_custom_call.1} parent=0 // loop_header_branch
    %14 = sbr.rel (%p12) target = $region8
  $region5: #{tpu_custom_call.1} parent=0 // loop_body
    %s16 = ssub.s32 %s11, 1
    %s17 = ssub.s32 %s11, 2
    %s18 = sadd.s32 %s11, 1
    %s19 = ssub.s32 %s11, %s18
    %p20 = scmp.eq.s32.totalorder %s19, 0
    %s22 = sadd.s32 %s21, 1
    %s23 = scalar_select %p20, %s21, %s22
    %p26 = pneg %p20
    %p27 = scmp.eq.s32.totalorder %s11, 1
    %p28 = por %p26, %p27
    %p29 = scmp.ne.s32.totalorder %s21, %s24
    %p30 = scmp.eq.s32.totalorder %s11, 0
    %p31 = por %p29, %p30
    %p32 = scmp.ne.s32.totalorder %s21, %s24
    %p33 = scmp.eq.s32.totalorder %s16, 1
    %p34 = por %p32, %p33
    %p35 = scmp.ne.s32.totalorder %s24, %s25
    %p36 = scmp.eq.s32.totalorder %s16, 0
    %p37 = por %p35, %p36
    %p38 = scmp.ne.s32.totalorder %s24, %s25
    %p39 = scmp.eq.s32.totalorder %s17, 1
    %p40 = por %p38, %p39
    %p42 = scmp.ne.s32.totalorder %s25, %s41
    %p43 = scmp.eq.s32.totalorder %s17, 0
    %p44 = por %p42, %p43
    %s46 = sadd.s32 %s45, 1
    %p49 = scmp.eq.s32.totalorder %s11, 1
    %p50 = scmp.ne.s32.totalorder %s45, %s47
    %p51 = scmp.eq.s32.totalorder %s11, 0
    %p52 = por %p50, %p51
    %p53 = scmp.ne.s32.totalorder %s45, %s47
    %p54 = scmp.eq.s32.totalorder %s16, 1
    %p55 = por %p53, %p54
    %p56 = scmp.ne.s32.totalorder %s47, %s48
    %p57 = scmp.eq.s32.totalorder %s16, 0
    %p58 = por %p56, %p57
    %p59 = scmp.ne.s32.totalorder %s47, %s48
    %p60 = scmp.eq.s32.totalorder %s17, 1
    %p61 = por %p59, %p60
    %p63 = scmp.ne.s32.totalorder %s48, %s62
    %p64 = scmp.eq.s32.totalorder %s17, 0
    %p65 = por %p63, %p64
    %s67 = sadd.s32 %s66, 1
    %p70 = scmp.eq.s32.totalorder %s11, 1
    %p71 = scmp.ne.s32.totalorder %s66, %s68
    %p72 = scmp.eq.s32.totalorder %s11, 0
    %p73 = por %p71, %p72
    %p74 = scmp.ne.s32.totalorder %s66, %s68
    %p75 = scmp.eq.s32.totalorder %s16, 1
    %p76 = por %p74, %p75
    %p77 = scmp.ne.s32.totalorder %s68, %s69
    %p78 = scmp.eq.s32.totalorder %s16, 0
    %p79 = por %p77, %p78
    %p80 = scmp.ne.s32.totalorder %s68, %s69
    %p81 = scmp.eq.s32.totalorder %s17, 1
    %p82 = por %p80, %p81
    %p84 = scmp.ne.s32.totalorder %s69, %s83
    %p85 = scmp.eq.s32.totalorder %s17, 0
    %p86 = por %p84, %p85
    %s88 = sadd.s32 %s87, 1
    %p91 = scmp.eq.s32.totalorder %s11, 1
    %p92 = scmp.ne.s32.totalorder %s87, %s89
    %p93 = scmp.eq.s32.totalorder %s11, 0
    %p94 = por %p92, %p93
    %p95 = scmp.ne.s32.totalorder %s87, %s89
    %p96 = scmp.eq.s32.totalorder %s16, 1
    %p97 = por %p95, %p96
    %p98 = scmp.ne.s32.totalorder %s89, %s90
    %p99 = scmp.eq.s32.totalorder %s16, 0
    %p100 = por %p98, %p99
    %p101 = scmp.ne.s32.totalorder %s89, %s90
    %p102 = scmp.eq.s32.totalorder %s17, 1
    %p103 = por %p101, %p102
    %p105 = scmp.ne.s32.totalorder %s90, %s104
    %p106 = scmp.eq.s32.totalorder %s17, 0
    %p107 = por %p105, %p106
    %s109 = sadd.s32 %s108, 1
    %p112 = scmp.eq.s32.totalorder %s11, 1
    %p113 = scmp.ne.s32.totalorder %s108, %s110
    %p114 = scmp.eq.s32.totalorder %s11, 0
    %p115 = por %p113, %p114
    %p116 = scmp.ne.s32.totalorder %s108, %s110
    %p117 = scmp.eq.s32.totalorder %s16, 1
    %p118 = por %p116, %p117
    %p119 = scmp.ne.s32.totalorder %s110, %s111
    %p120 = scmp.eq.s32.totalorder %s16, 0
    %p121 = por %p119, %p120
    %p122 = scmp.ne.s32.totalorder %s110, %s111
    %p123 = scmp.eq.s32.totalorder %s17, 1
    %p124 = por %p122, %p123
    %p126 = scmp.ne.s32.totalorder %s111, %s125
    %p127 = scmp.eq.s32.totalorder %s17, 0
    %p128 = por %p126, %p127
    %s129 = ssub.s32 %s11, %s18
    %p130 = scmp.eq.s32.totalorder %s129, 0
    %s132 = sadd.s32 %s131, 1
    %s133 = scalar_select %p130, %s131, %s132
    %p136 = pneg %p130
    %p137 = scmp.eq.s32.totalorder %s11, 1
    %p138 = por %p136, %p137
    %p139 = scmp.ne.s32.totalorder %s131, %s134
    %p140 = scmp.eq.s32.totalorder %s11, 0
    %p141 = por %p139, %p140
    %p142 = scmp.ne.s32.totalorder %s131, %s134
    %p143 = scmp.eq.s32.totalorder %s16, 1
    %p144 = por %p142, %p143
    %p145 = scmp.ne.s32.totalorder %s134, %s135
    %p146 = scmp.eq.s32.totalorder %s16, 0
    %p147 = por %p145, %p146
    %p148 = scmp.ne.s32.totalorder %s134, %s135
    %p149 = scmp.eq.s32.totalorder %s17, 1
    %p150 = por %p148, %p149
    %p152 = scmp.ne.s32.totalorder %s135, %s151
    %p153 = scmp.eq.s32.totalorder %s17, 0
    %p154 = por %p152, %p153
    %p155 = scmp.le.s32.totalorder 1, %s11
    %p156 = scmp.lt.s32.totalorder %s11, 3
    %p157 = pnand %p155, %p156
    %p158 = pneg %p157
    // Predicated region
    $region9: #{tpu_custom_call.1} parent=5 // pred_check
      _
    $region10: #{tpu_custom_call.1} parent=5 // pred_check_branch
      %160 = sbr.rel (%p157) target = $region12
    $region11: #{tpu_custom_call.1} parent=5 // pred_region
      %s161 = ssub.s32 %s11, 1
      // Predicated region
      $region13: #{tpu_custom_call.1} parent=11 // pred_check
        %p162 = pneg %p58
      $region14: #{tpu_custom_call.1} parent=11 // pred_check_branch
        %164 = sbr.rel (%p162) target = $region16
      $region15: #{tpu_custom_call.1} parent=11 // pred_region
        _
      $region16: #{tpu_custom_call.1} parent=11 // pred_fallthru
        _
      // Predicated region
      $region17: #{tpu_custom_call.1} parent=11 // pred_check
        %p165 = pneg %p79
      $region18: #{tpu_custom_call.1} parent=11 // pred_check_branch
        %167 = sbr.rel (%p165) target = $region20
      $region19: #{tpu_custom_call.1} parent=11 // pred_region
        _
      $region20: #{tpu_custom_call.1} parent=11 // pred_fallthru
        _
      // Predicated region
      $region21: #{tpu_custom_call.1} parent=11 // pred_check
        %p168 = pneg %p100
      $region22: #{tpu_custom_call.1} parent=11 // pred_check_branch
        %170 = sbr.rel (%p168) target = $region24
      $region23: #{tpu_custom_call.1} parent=11 // pred_region
        _
      $region24: #{tpu_custom_call.1} parent=11 // pred_fallthru
        _
      // Predicated region
      $region25: #{tpu_custom_call.1} parent=11 // pred_check
        %p171 = pneg %p121
      $region26: #{tpu_custom_call.1} parent=11 // pred_check_branch
        %173 = sbr.rel (%p171) target = $region28
      $region27: #{tpu_custom_call.1} parent=11 // pred_region
        _
      $region28: #{tpu_custom_call.1} parent=11 // pred_fallthru
        _
    $region12: #{tpu_custom_call.1} parent=5 // pred_fallthru
      _
    %p174 = scmp.lt.s32.totalorder %s11, 2
    // Predicated region
    $region29: #{tpu_custom_call.1} parent=5 // pred_check
      %p175 = pneg %p174
    $region30: #{tpu_custom_call.1} parent=5 // pred_check_branch
      %177 = sbr.rel (%p175) target = $region32
    $region31: #{tpu_custom_call.1} parent=5 // pred_region
      // Predicated region
      $region33: #{tpu_custom_call.1} parent=31 // pred_check
        %p178 = pneg %p31
      $region34: #{tpu_custom_call.1} parent=31 // pred_check_branch
        %180 = sbr.rel (%p178) target = $region36
      $region35: #{tpu_custom_call.1} parent=31 // pred_region
        %p181 = scmp.lt.s32.totalorder %s11, 1
        %s182 = scalar_select %p181, %s11, 1
        %s183 = smul.addr %s182, 32
        %s184 = smul.addr %s183, 8
        %s185 = scalar_lea.vmem %s0, %s184
      $region36: #{tpu_custom_call.1} parent=31 // pred_fallthru
        _
    $region32: #{tpu_custom_call.1} parent=5 // pred_fallthru
      _
    %p186 = scmp.le.s32.totalorder 1, %s11
    %p187 = scmp.lt.s32.totalorder %s11, 3
    %p188 = pnand %p186, %p187
    %p189 = pneg %p188
    // Predicated region
    $region37: #{tpu_custom_call.1} parent=5 // pred_check
      _
    $region38: #{tpu_custom_call.1} parent=5 // pred_check_branch
      %191 = sbr.rel (%p188) target = $region40
    $region39: #{tpu_custom_call.1} parent=5 // pred_region
      %s192 = ssub.s32 %s11, 1
      %p193 = scmp.lt.s32.totalorder %s16, 1
      %s194 = scalar_select %p193, %s16, 1
      %s195 = smul.addr %s194, 32
      %s196 = smul.addr %s195, 8
      %s197 = scalar_lea.vmem %s0, %s196
      %p198 = pneg %p37
      %p199 = pneg %p34
      %p200 = pneg %p58
      %p201 = pneg %p55
      %p202 = pneg %p79
      %p203 = pneg %p76
      %p204 = pneg %p100
      %p205 = pneg %p97
      %p206 = pneg %p121
      %p207 = pneg %p118
      %p208 = pneg %p147
      %p209 = pneg %p144
      %p210 = scmp.lt.s32.totalorder %s16, 1
      %s211 = scalar_select %p210, %s16, 1
      %s212 = smul.addr %s211, 32
      %s213 = smul.addr %s212, 8
      %s214 = scalar_lea.vmem %s5, %s213
      %p215 = scmp.lt.s32.totalorder %s16, 1
      %s216 = scalar_select %p215, %s16, 1
      %s217 = smul.addr %s216, 32
      %s218 = smul.addr %s217, 8
      %s219 = scalar_lea.vmem %s0, %s218
      %p220 = scmp.lt.s32.totalorder %s16, 1
      %s221 = scalar_select %p220, %s16, 1
      %s222 = smul.addr %s221, 32
      %s223 = smul.addr %s222, 8
      %s224 = scalar_lea.vmem %s5, %s223
      %vm225 = vcmask 31744
      %226 = vst.msk [vmem:[#allocation2] sm:$0xff] %vm225, 0.0
      %227 = vst.msk [vmem:[#allocation2 + $0x8] sm:$0xff] %vm225, 0.0
      %vm228 = vcmask 25600
      %229 = vst.msk [vmem:[#allocation2 + $0x10] sm:$0x3] %vm228, 0.0
      %230 = vst.msk [vmem:[#allocation2 + $0x18] sm:$0xff] %vm225, 0.0
      %231 = vst.msk [vmem:[#allocation2 + $0x20] sm:$0xff] %vm225, 0.0
      %232 = vst.msk [vmem:[#allocation2 + $0x28] sm:$0x3] %vm228, 0.0
      %233 = vst.msk [vmem:[#allocation2 + $0x30] sm:$0xff] %vm225, 0.0
      %234 = vst.msk [vmem:[#allocation2 + $0x38] sm:$0xff] %vm225, 0.0
      %235 = vst.msk [vmem:[#allocation2 + $0x40] sm:$0x3] %vm228, 0.0
      %236 = vst.msk [vmem:[#allocation2 + $0x48] sm:$0xff] %vm225, 0.0
      %237 = vst.msk [vmem:[#allocation2 + $0x50] sm:$0xff] %vm225, 0.0
      %238 = vst.msk [vmem:[#allocation2 + $0x58] sm:$0x3] %vm228, 0.0
      %239 = vst.msk [vmem:[#allocation2 + $0x60] sm:$0xff] %vm225, 0.0
      %240 = vst.msk [vmem:[#allocation2 + $0x68] sm:$0xff] %vm225, 0.0
      %241 = vst.msk [vmem:[#allocation2 + $0x70] sm:$0x3] %vm228, 0.0
      %242 = vst.msk [vmem:[#allocation2 + $0x78] sm:$0xff] %vm225, 0.0
      %243 = vst.msk [vmem:[#allocation2 + $0x80] sm:$0xff] %vm225, 0.0
      %244 = vst.msk [vmem:[#allocation2 + $0x88] sm:$0x3] %vm228, 0.0
      %245 = vst.msk [vmem:[#allocation2 + $0x90] sm:$0xff] %vm225, 0.0
      %246 = vst.msk [vmem:[#allocation2 + $0x98] sm:$0xff] %vm225, 0.0
      %247 = vst.msk [vmem:[#allocation2 + $0xa0] sm:$0x3] %vm228, 0.0
      %248 = vst.msk [vmem:[#allocation2 + $0xa8] sm:$0xff] %vm225, 0.0
      %249 = vst.msk [vmem:[#allocation2 + $0xb0] sm:$0xff] %vm225, 0.0
      %250 = vst.msk [vmem:[#allocation2 + $0xb8] sm:$0x3] %vm228, 0.0
      %251 = vst.msk [vmem:[#allocation2 + $0xc0] sm:$0xff] %vm225, 0.0
      %252 = vst.msk [vmem:[#allocation2 + $0xc8] sm:$0xff] %vm225, 0.0
      %253 = vst.msk [vmem:[#allocation2 + $0xd0] sm:$0x3] %vm228, 0.0
      %254 = vst.msk [vmem:[#allocation2 + $0xd8] sm:$0xff] %vm225, 0.0
      %255 = vst.msk [vmem:[#allocation2 + $0xe0] sm:$0xff] %vm225, 0.0
      %256 = vst.msk [vmem:[#allocation2 + $0xe8] sm:$0x3] %vm228, 0.0
      %257 = vst.msk [vmem:[#allocation2 + $0xf0] sm:$0xff] %vm225, 0.0
      %258 = vst.msk [vmem:[#allocation2 + $0xf8] sm:$0xff] %vm225, 0.0
      %259 = vst.msk [vmem:[#allocation2 + $0x100] sm:$0x3] %vm228, 0.0
      %260 = vst.msk [vmem:[#allocation2 + $0x108] sm:$0xff] %vm225, 0.0
      %261 = vst.msk [vmem:[#allocation2 + $0x110] sm:$0xff] %vm225, 0.0
      %262 = vst.msk [vmem:[#allocation2 + $0x118] sm:$0x3] %vm228, 0.0
      %263 = vst.msk [vmem:[#allocation2 + $0x120] sm:$0xff] %vm225, 0.0
      %264 = vst.msk [vmem:[#allocation2 + $0x128] sm:$0xff] %vm225, 0.0
      %265 = vst.msk [vmem:[#allocation2 + $0x130] sm:$0x3] %vm228, 0.0
      %266 = vst.msk [vmem:[#allocation2 + $0x138] sm:$0xff] %vm225, 0.0
      %267 = vst.msk [vmem:[#allocation2 + $0x140] sm:$0xff] %vm225, 0.0
      %268 = vst.msk [vmem:[#allocation2 + $0x148] sm:$0x3] %vm228, 0.0
      %269 = vst.msk [vmem:[#allocation2 + $0x150] sm:$0xff] %vm225, 0.0
      %270 = vst.msk [vmem:[#allocation2 + $0x158] sm:$0xff] %vm225, 0.0
      %271 = vst.msk [vmem:[#allocation2 + $0x160] sm:$0x3] %vm228, 0.0
      %272 = vst.msk [vmem:[#allocation2 + $0x168] sm:$0xff] %vm225, 0.0
      %273 = vst.msk [vmem:[#allocation2 + $0x170] sm:$0xff] %vm225, 0.0
      %274 = vst.msk [vmem:[#allocation2 + $0x178] sm:$0x3] %vm228, 0.0
      %275 = vst.msk [vmem:[#allocation2 + $0x180] sm:$0xff] %vm225, 0.0
      %276 = vst.msk [vmem:[#allocation2 + $0x188] sm:$0xff] %vm225, 0.0
      %277 = vst.msk [vmem:[#allocation2 + $0x190] sm:$0x3] %vm228, 0.0
      %278 = vst.msk [vmem:[#allocation2 + $0x198] sm:$0xff] %vm225, 0.0
      %279 = vst.msk [vmem:[#allocation2 + $0x1a0] sm:$0xff] %vm225, 0.0
      %280 = vst.msk [vmem:[#allocation2 + $0x1a8] sm:$0x3] %vm228, 0.0
      %v281 = vld [vmem:[%s219] sm:$0xff]
      %v282 = vld [vmem:[%s219 + $0x8] sm:$0xff]
      %v283 = vld [vmem:[%s219 + $0x10] sm:$0xff]
      %v284 = vld [vmem:[%s219 + $0x18] sm:$0xff]
      %v285 = vld [vmem:[%s219 + $0x20] sm:$0xff]
      %v286 = vld [vmem:[%s219 + $0x28] sm:$0xff]
      %v287 = vld [vmem:[%s219 + $0x30] sm:$0xff]
      %v288 = vld [vmem:[%s219 + $0x38] sm:$0xff]
      %v289 = vld [vmem:[%s219 + $0x40] sm:$0xff]
      %v290 = vld [vmem:[%s219 + $0x48] sm:$0xff]
      %v291 = vld [vmem:[%s219 + $0x50] sm:$0xff]
      %v292 = vld [vmem:[%s219 + $0x58] sm:$0xff]
      %v293 = vld [vmem:[%s219 + $0x60] sm:$0xff]
      %v294 = vld [vmem:[%s219 + $0x68] sm:$0xff]
      %v295 = vld [vmem:[%s219 + $0x70] sm:$0xff]
      %v296 = vld [vmem:[%s219 + $0x78] sm:$0xff]
      %v297 = vld [vmem:[%s219 + $0x80] sm:$0xff]
      %v298 = vld [vmem:[%s219 + $0x88] sm:$0xff]
      %v299 = vld [vmem:[%s219 + $0x90] sm:$0xff]
      %v300 = vld [vmem:[%s219 + $0x98] sm:$0xff]
      %v301 = vld [vmem:[%s219 + $0xa0] sm:$0xff]
      %v302 = vld [vmem:[%s219 + $0xa8] sm:$0xff]
      %v303 = vld [vmem:[%s219 + $0xb0] sm:$0xff]
      %v304 = vld [vmem:[%s219 + $0xb8] sm:$0xff]
      %v305 = vld [vmem:[%s219 + $0xc0] sm:$0xff]
      %v306 = vld [vmem:[%s219 + $0xc8] sm:$0xff]
      %v307 = vld [vmem:[%s219 + $0xd0] sm:$0xff]
      %v308 = vld [vmem:[%s219 + $0xd8] sm:$0xff]
      %v309 = vld [vmem:[%s219 + $0xe0] sm:$0xff]
      %v310 = vld [vmem:[%s219 + $0xe8] sm:$0xff]
      %v311 = vld [vmem:[%s219 + $0xf0] sm:$0xff]
      %v312 = vld [vmem:[%s219 + $0xf8] sm:$0xff]
      %s313 = scalar_lea.vmem [#allocation2], 24
      %314 = vst.msk [vmem:[%s313 + $0x1] sm:$0xff] %vm225, %v281
      %315 = vst.msk [vmem:[%s313 + $0x9] sm:$0xff] %vm225, %v282
      %316 = vst.msk [vmem:[%s313 + $0x19] sm:$0xff] %vm225, %v283
      %317 = vst.msk [vmem:[%s313 + $0x21] sm:$0xff] %vm225, %v284
      %318 = vst.msk [vmem:[%s313 + $0x31] sm:$0xff] %vm225, %v285
      %319 = vst.msk [vmem:[%s313 + $0x39] sm:$0xff] %vm225, %v286
      %320 = vst.msk [vmem:[%s313 + $0x49] sm:$0xff] %vm225, %v287
      %321 = vst.msk [vmem:[%s313 + $0x51] sm:$0xff] %vm225, %v288
      %322 = vst.msk [vmem:[%s313 + $0x61] sm:$0xff] %vm225, %v289
      %323 = vst.msk [vmem:[%s313 + $0x69] sm:$0xff] %vm225, %v290
      %324 = vst.msk [vmem:[%s313 + $0x79] sm:$0xff] %vm225, %v291
      %325 = vst.msk [vmem:[%s313 + $0x81] sm:$0xff] %vm225, %v292
      %326 = vst.msk [vmem:[%s313 + $0x91] sm:$0xff] %vm225, %v293
      %327 = vst.msk [vmem:[%s313 + $0x99] sm:$0xff] %vm225, %v294
      %328 = vst.msk [vmem:[%s313 + $0xa9] sm:$0xff] %vm225, %v295
      %329 = vst.msk [vmem:[%s313 + $0xb1] sm:$0xff] %vm225, %v296
      %330 = vst.msk [vmem:[%s313 + $0xc1] sm:$0xff] %vm225, %v297
      %331 = vst.msk [vmem:[%s313 + $0xc9] sm:$0xff] %vm225, %v298
      %332 = vst.msk [vmem:[%s313 + $0xd9] sm:$0xff] %vm225, %v299
      %333 = vst.msk [vmem:[%s313 + $0xe1] sm:$0xff] %vm225, %v300
      %334 = vst.msk [vmem:[%s313 + $0xf1] sm:$0xff] %vm225, %v301
      %335 = vst.msk [vmem:[%s313 + $0xf9] sm:$0xff] %vm225, %v302
      %336 = vst.msk [vmem:[%s313 + $0x109] sm:$0xff] %vm225, %v303
      %337 = vst.msk [vmem:[%s313 + $0x111] sm:$0xff] %vm225, %v304
      %338 = vst.msk [vmem:[%s313 + $0x121] sm:$0xff] %vm225, %v305
      %339 = vst.msk [vmem:[%s313 + $0x129] sm:$0xff] %vm225, %v306
      %340 = vst.msk [vmem:[%s313 + $0x139] sm:$0xff] %vm225, %v307
      %341 = vst.msk [vmem:[%s313 + $0x141] sm:$0xff] %vm225, %v308
      %342 = vst.msk [vmem:[%s313 + $0x151] sm:$0xff] %vm225, %v309
      %343 = vst.msk [vmem:[%s313 + $0x159] sm:$0xff] %vm225, %v310
      %344 = vst.msk [vmem:[%s313 + $0x169] sm:$0xff] %vm225, %v311
      %345 = vst.msk [vmem:[%s313 + $0x171] sm:$0xff] %vm225, %v312
      %v346 = vld [vmem:[#allocation2] sm:$0xff]
      %v347 = vld [vmem:[#allocation2 + $0x8] sm:$0xff]
      %v348 = vld [vmem:[#allocation2 + $0x10] sm:$0x3]
      %v349 = vld [vmem:[#allocation2 + $0x18] sm:$0xff]
      %v350 = vld [vmem:[#allocation2 + $0x20] sm:$0xff]
      %v351 = vld [vmem:[#allocation2 + $0x28] sm:$0x3]
      %v352 = vld [vmem:[#allocation2 + $0x30] sm:$0xff]
      %v353 = vld [vmem:[#allocation2 + $0x38] sm:$0xff]
      %v354 = vld [vmem:[#allocation2 + $0x40] sm:$0x3]
      %v355 = vld [vmem:[#allocation2 + $0x48] sm:$0xff]
      %v356 = vld [vmem:[#allocation2 + $0x50] sm:$0xff]
      %v357 = vld [vmem:[#allocation2 + $0x58] sm:$0x3]
      %v358 = vld [vmem:[#allocation2 + $0x60] sm:$0xff]
      %v359 = vld [vmem:[#allocation2 + $0x68] sm:$0xff]
      %v360 = vld [vmem:[#allocation2 + $0x70] sm:$0x3]
      %v361 = vld [vmem:[#allocation2 + $0x78] sm:$0xff]
      %v362 = vld [vmem:[#allocation2 + $0x80] sm:$0xff]
      %v363 = vld [vmem:[#allocation2 + $0x88] sm:$0x3]
      %v364 = vld [vmem:[#allocation2 + $0x90] sm:$0xff]
      %v365 = vld [vmem:[#allocation2 + $0x98] sm:$0xff]
      %v366 = vld [vmem:[#allocation2 + $0xa0] sm:$0x3]
      %v367 = vld [vmem:[#allocation2 + $0xa8] sm:$0xff]
      %v368 = vld [vmem:[#allocation2 + $0xb0] sm:$0xff]
      %v369 = vld [vmem:[#allocation2 + $0xb8] sm:$0x3]
      %v370 = vld [vmem:[#allocation2 + $0xc0] sm:$0xff]
      %v371 = vld [vmem:[#allocation2 + $0xc8] sm:$0xff]
      %v372 = vld [vmem:[#allocation2 + $0xd0] sm:$0x3]
      %v373 = vld [vmem:[#allocation2 + $0xd8] sm:$0xff]
      %v374 = vld [vmem:[#allocation2 + $0xe0] sm:$0xff]
      %v375 = vld [vmem:[#allocation2 + $0xe8] sm:$0x3]
      %v376 = vld [vmem:[#allocation2 + $0xf0] sm:$0xff]
      %v377 = vld [vmem:[#allocation2 + $0xf8] sm:$0xff]
      %v378 = vld [vmem:[#allocation2 + $0x100] sm:$0x3]
      %v379 = vld [vmem:[#allocation2 + $0x108] sm:$0xff]
      %v380 = vld [vmem:[#allocation2 + $0x110] sm:$0xff]
      %v381 = vld [vmem:[#allocation2 + $0x118] sm:$0x3]
      %v382 = vld [vmem:[#allocation2 + $0x120] sm:$0xff]
      %v383 = vld [vmem:[#allocation2 + $0x128] sm:$0xff]
      %v384 = vld [vmem:[#allocation2 + $0x130] sm:$0x3]
      %v385 = vld [vmem:[#allocation2 + $0x138] sm:$0xff]
      %v386 = vld [vmem:[#allocation2 + $0x140] sm:$0xff]
      %v387 = vld [vmem:[#allocation2 + $0x148] sm:$0x3]
      %v388 = vld [vmem:[#allocation2 + $0x150] sm:$0xff]
      %v389 = vld [vmem:[#allocation2 + $0x158] sm:$0xff]
      %v390 = vld [vmem:[#allocation2 + $0x160] sm:$0x3]
      %v391 = vld [vmem:[#allocation2 + $0x168] sm:$0xff]
      %v392 = vld [vmem:[#allocation2 + $0x170] sm:$0xff]
      %v393 = vld [vmem:[#allocation2 + $0x178] sm:$0x3]
      %v394 = vld [vmem:[#allocation2 + $0x180] sm:$0xff]
      %v395 = vld [vmem:[#allocation2 + $0x188] sm:$0xff]
      %v396 = vld [vmem:[#allocation2 + $0x190] sm:$0x3]
      %v397 = vld [vmem:[#allocation2 + $0x198] sm:$0xff]
      %v398 = vld [vmem:[#allocation2 + $0x1a0] sm:$0xff]
      %v399 = vld [vmem:[#allocation2 + $0x1a8] sm:$0x3]
      %vm448 = vcmask 1046528
      %v449 = vrot.slane %v346, 1
      %v450 = vrot.slane %v347, 1
      %v451 = vsel %vm448, %v449, %v450
      %v452 = vrot.slane %v348, 1
      %v453 = vsel %vm448, %v450, %v452
      %v454 = vrot.slane %v349, 1
      %v455 = vrot.slane %v350, 1
      %v456 = vsel %vm448, %v454, %v455
      %v457 = vrot.slane %v351, 1
      %v458 = vsel %vm448, %v455, %v457
      %v459 = vrot.slane %v352, 1
      %v460 = vrot.slane %v353, 1
      %v461 = vsel %vm448, %v459, %v460
      %v462 = vrot.slane %v354, 1
      %v463 = vsel %vm448, %v460, %v462
      %v464 = vrot.slane %v355, 1
      %v465 = vrot.slane %v356, 1
      %v466 = vsel %vm448, %v464, %v465
      %v467 = vrot.slane %v357, 1
      %v468 = vsel %vm448, %v465, %v467
      %v469 = vrot.slane %v358, 1
      %v470 = vrot.slane %v359, 1
      %v471 = vsel %vm448, %v469, %v470
      %v472 = vrot.slane %v360, 1
      %v473 = vsel %vm448, %v470, %v472
      %v474 = vrot.slane %v361, 1
      %v475 = vrot.slane %v362, 1
      %v476 = vsel %vm448, %v474, %v475
      %v477 = vrot.slane %v363, 1
      %v478 = vsel %vm448, %v475, %v477
      %v479 = vrot.slane %v364, 1
      %v480 = vrot.slane %v365, 1
      %v481 = vsel %vm448, %v479, %v480
      %v482 = vrot.slane %v366, 1
      %v483 = vsel %vm448, %v480, %v482
      %v484 = vrot.slane %v367, 1
      %v485 = vrot.slane %v368, 1
      %v486 = vsel %vm448, %v484, %v485
      %v487 = vrot.slane %v369, 1
      %v488 = vsel %vm448, %v485, %v487
      %v489 = vrot.slane %v370, 1
      %v490 = vrot.slane %v371, 1
      %v491 = vsel %vm448, %v489, %v490
      %v492 = vrot.slane %v372, 1
      %v493 = vsel %vm448, %v490, %v492
      %v494 = vrot.slane %v373, 1
      %v495 = vrot.slane %v374, 1
      %v496 = vsel %vm448, %v494, %v495
      %v497 = vrot.slane %v375, 1
      %v498 = vsel %vm448, %v495, %v497
      %v499 = vrot.slane %v376, 1
      %v500 = vrot.slane %v377, 1
      %v501 = vsel %vm448, %v499, %v500
      %v502 = vrot.slane %v378, 1
      %v503 = vsel %vm448, %v500, %v502
      %v504 = vrot.slane %v379, 1
      %v505 = vrot.slane %v380, 1
      %v506 = vsel %vm448, %v504, %v505
      %v507 = vrot.slane %v381, 1
      %v508 = vsel %vm448, %v505, %v507
      %v509 = vrot.slane %v382, 1
      %v510 = vrot.slane %v383, 1
      %v511 = vsel %vm448, %v509, %v510
      %v512 = vrot.slane %v384, 1
      %v513 = vsel %vm448, %v510, %v512
      %v514 = vrot.slane %v385, 1
      %v515 = vrot.slane %v386, 1
      %v516 = vsel %vm448, %v514, %v515
      %v517 = vrot.slane %v387, 1
      %v518 = vsel %vm448, %v515, %v517
      %v519 = vrot.slane %v388, 1
      %v520 = vrot.slane %v389, 1
      %v521 = vsel %vm448, %v519, %v520
      %v522 = vrot.slane %v390, 1
      %v523 = vsel %vm448, %v520, %v522
      %v524 = vrot.slane %v391, 1
      %v525 = vrot.slane %v392, 1
      %v526 = vsel %vm448, %v524, %v525
      %v527 = vrot.slane %v393, 1
      %v528 = vsel %vm448, %v525, %v527
      %529 = vrot.lane.b32.xlu0 %v451, 4
      %v530 = vpop.permute.xlu0 %529
      %531 = vrot.lane.b32.xlu0 %v453, 4
      %v532 = vpop.permute.xlu0 %531
      %533 = vrot.lane.b32.xlu0 %v456, 4
      %v534 = vpop.permute.xlu0 %533
      %535 = vrot.lane.b32.xlu0 %v458, 4
      %v536 = vpop.permute.xlu0 %535
      %537 = vrot.lane.b32.xlu0 %v461, 4
      %v538 = vpop.permute.xlu0 %537
      %539 = vrot.lane.b32.xlu0 %v463, 4
      %v540 = vpop.permute.xlu0 %539
      %541 = vrot.lane.b32.xlu0 %v466, 4
      %v542 = vpop.permute.xlu0 %541
      %543 = vrot.lane.b32.xlu0 %v468, 4
      %v544 = vpop.permute.xlu0 %543
      %545 = vrot.lane.b32.xlu0 %v471, 4
      %v546 = vpop.permute.xlu0 %545
      %547 = vrot.lane.b32.xlu0 %v473, 4
      %v548 = vpop.permute.xlu0 %547
      %549 = vrot.lane.b32.xlu0 %v476, 4
      %v550 = vpop.permute.xlu0 %549
      %551 = vrot.lane.b32.xlu0 %v478, 4
      %v552 = vpop.permute.xlu0 %551
      %553 = vrot.lane.b32.xlu0 %v481, 4
      %v554 = vpop.permute.xlu0 %553
      %555 = vrot.lane.b32.xlu0 %v483, 4
      %v556 = vpop.permute.xlu0 %555
      %557 = vrot.lane.b32.xlu0 %v486, 4
      %v558 = vpop.permute.xlu0 %557
      %559 = vrot.lane.b32.xlu0 %v488, 4
      %v560 = vpop.permute.xlu0 %559
      %561 = vrot.lane.b32.xlu0 %v491, 4
      %v562 = vpop.permute.xlu0 %561
      %563 = vrot.lane.b32.xlu0 %v493, 4
      %v564 = vpop.permute.xlu0 %563
      %565 = vrot.lane.b32.xlu0 %v496, 4
      %v566 = vpop.permute.xlu0 %565
      %567 = vrot.lane.b32.xlu0 %v498, 4
      %v568 = vpop.permute.xlu0 %567
      %569 = vrot.lane.b32.xlu0 %v501, 4
      %v570 = vpop.permute.xlu0 %569
      %571 = vrot.lane.b32.xlu0 %v503, 4
      %v572 = vpop.permute.xlu0 %571
      %573 = vrot.lane.b32.xlu0 %v506, 4
      %v574 = vpop.permute.xlu0 %573
      %575 = vrot.lane.b32.xlu0 %v508, 4
      %v576 = vpop.permute.xlu0 %575
      %577 = vrot.lane.b32.xlu0 %v511, 4
      %v578 = vpop.permute.xlu0 %577
      %579 = vrot.lane.b32.xlu0 %v513, 4
      %v580 = vpop.permute.xlu0 %579
      %581 = vrot.lane.b32.xlu0 %v516, 4
      %v582 = vpop.permute.xlu0 %581
      %583 = vrot.lane.b32.xlu0 %v518, 4
      %v584 = vpop.permute.xlu0 %583
      %585 = vrot.lane.b32.xlu0 %v521, 4
      %v586 = vpop.permute.xlu0 %585
      %587 = vrot.lane.b32.xlu0 %v523, 4
      %v588 = vpop.permute.xlu0 %587
      %589 = vrot.lane.b32.xlu0 %v526, 4
      %v590 = vpop.permute.xlu0 %589
      %591 = vrot.lane.b32.xlu0 %v528, 4
      %v592 = vpop.permute.xlu0 %591
      %vm625 = vcmask 1045504
      %v626 = vrot.slane %v346, 2
      %v627 = vrot.slane %v347, 2
      %v628 = vsel %vm625, %v626, %v627
      %v629 = vrot.slane %v348, 2
      %v630 = vsel %vm625, %v627, %v629
      %v631 = vrot.slane %v349, 2
      %v632 = vrot.slane %v350, 2
      %v633 = vsel %vm625, %v631, %v632
      %v634 = vrot.slane %v351, 2
      %v635 = vsel %vm625, %v632, %v634
      %v636 = vrot.slane %v352, 2
      %v637 = vrot.slane %v353, 2
      %v638 = vsel %vm625, %v636, %v637
      %v639 = vrot.slane %v354, 2
      %v640 = vsel %vm625, %v637, %v639
      %v641 = vrot.slane %v355, 2
      %v642 = vrot.slane %v356, 2
      %v643 = vsel %vm625, %v641, %v642
      %v644 = vrot.slane %v357, 2
      %v645 = vsel %vm625, %v642, %v644
      %v646 = vrot.slane %v358, 2
      %v647 = vrot.slane %v359, 2
      %v648 = vsel %vm625, %v646, %v647
      %v649 = vrot.slane %v360, 2
      %v650 = vsel %vm625, %v647, %v649
      %v651 = vrot.slane %v361, 2
      %v652 = vrot.slane %v362, 2
      %v653 = vsel %vm625, %v651, %v652
      %v654 = vrot.slane %v363, 2
      %v655 = vsel %vm625, %v652, %v654
      %v656 = vrot.slane %v364, 2
      %v657 = vrot.slane %v365, 2
      %v658 = vsel %vm625, %v656, %v657
      %v659 = vrot.slane %v366, 2
      %v660 = vsel %vm625, %v657, %v659
      %v661 = vrot.slane %v367, 2
      %v662 = vrot.slane %v368, 2
      %v663 = vsel %vm625, %v661, %v662
      %v664 = vrot.slane %v369, 2
      %v665 = vsel %vm625, %v662, %v664
      %v666 = vrot.slane %v370, 2
      %v667 = vrot.slane %v371, 2
      %v668 = vsel %vm625, %v666, %v667
      %v669 = vrot.slane %v372, 2
      %v670 = vsel %vm625, %v667, %v669
      %v671 = vrot.slane %v373, 2
      %v672 = vrot.slane %v374, 2
      %v673 = vsel %vm625, %v671, %v672
      %v674 = vrot.slane %v375, 2
      %v675 = vsel %vm625, %v672, %v674
      %v676 = vrot.slane %v376, 2
      %v677 = vrot.slane %v377, 2
      %v678 = vsel %vm625, %v676, %v677
      %v679 = vrot.slane %v378, 2
      %v680 = vsel %vm625, %v677, %v679
      %v681 = vrot.slane %v379, 2
      %v682 = vrot.slane %v380, 2
      %v683 = vsel %vm625, %v681, %v682
      %v684 = vrot.slane %v381, 2
      %v685 = vsel %vm625, %v682, %v684
      %v686 = vrot.slane %v382, 2
      %v687 = vrot.slane %v383, 2
      %v688 = vsel %vm625, %v686, %v687
      %v689 = vrot.slane %v384, 2
      %v690 = vsel %vm625, %v687, %v689
      %v691 = vrot.slane %v385, 2
      %v692 = vrot.slane %v386, 2
      %v693 = vsel %vm625, %v691, %v692
      %v694 = vrot.slane %v387, 2
      %v695 = vsel %vm625, %v692, %v694
      %v696 = vrot.slane %v388, 2
      %v697 = vrot.slane %v389, 2
      %v698 = vsel %vm625, %v696, %v697
      %v699 = vrot.slane %v390, 2
      %v700 = vsel %vm625, %v697, %v699
      %v701 = vrot.slane %v391, 2
      %v702 = vrot.slane %v392, 2
      %v703 = vsel %vm625, %v701, %v702
      %v704 = vrot.slane %v393, 2
      %v705 = vsel %vm625, %v702, %v704
      %706 = vrot.lane.b32.xlu0 %v628, 8
      %v707 = vpop.permute.xlu0 %706
      %708 = vrot.lane.b32.xlu0 %v630, 8
      %v709 = vpop.permute.xlu0 %708
      %710 = vrot.lane.b32.xlu0 %v633, 8
      %v711 = vpop.permute.xlu0 %710
      %712 = vrot.lane.b32.xlu0 %v635, 8
      %v713 = vpop.permute.xlu0 %712
      %714 = vrot.lane.b32.xlu0 %v638, 8
      %v715 = vpop.permute.xlu0 %714
      %716 = vrot.lane.b32.xlu0 %v640, 8
      %v717 = vpop.permute.xlu0 %716
      %718 = vrot.lane.b32.xlu0 %v643, 8
      %v719 = vpop.permute.xlu0 %718
      %720 = vrot.lane.b32.xlu0 %v645, 8
      %v721 = vpop.permute.xlu0 %720
      %722 = vrot.lane.b32.xlu0 %v648, 8
      %v723 = vpop.permute.xlu0 %722
      %724 = vrot.lane.b32.xlu0 %v650, 8
      %v725 = vpop.permute.xlu0 %724
      %726 = vrot.lane.b32.xlu0 %v653, 8
      %v727 = vpop.permute.xlu0 %726
      %728 = vrot.lane.b32.xlu0 %v655, 8
      %v729 = vpop.permute.xlu0 %728
      %730 = vrot.lane.b32.xlu0 %v658, 8
      %v731 = vpop.permute.xlu0 %730
      %732 = vrot.lane.b32.xlu0 %v660, 8
      %v733 = vpop.permute.xlu0 %732
      %734 = vrot.lane.b32.xlu0 %v663, 8
      %v735 = vpop.permute.xlu0 %734
      %736 = vrot.lane.b32.xlu0 %v665, 8
      %v737 = vpop.permute.xlu0 %736
      %738 = vrot.lane.b32.xlu0 %v668, 8
      %v739 = vpop.permute.xlu0 %738
      %740 = vrot.lane.b32.xlu0 %v670, 8
      %v741 = vpop.permute.xlu0 %740
      %742 = vrot.lane.b32.xlu0 %v673, 8
      %v743 = vpop.permute.xlu0 %742
      %744 = vrot.lane.b32.xlu0 %v675, 8
      %v745 = vpop.permute.xlu0 %744
      %746 = vrot.lane.b32.xlu0 %v678, 8
      %v747 = vpop.permute.xlu0 %746
      %748 = vrot.lane.b32.xlu0 %v680, 8
      %v749 = vpop.permute.xlu0 %748
      %750 = vrot.lane.b32.xlu0 %v683, 8
      %v751 = vpop.permute.xlu0 %750
      %752 = vrot.lane.b32.xlu0 %v685, 8
      %v753 = vpop.permute.xlu0 %752
      %754 = vrot.lane.b32.xlu0 %v688, 8
      %v755 = vpop.permute.xlu0 %754
      %756 = vrot.lane.b32.xlu0 %v690, 8
      %v757 = vpop.permute.xlu0 %756
      %758 = vrot.lane.b32.xlu0 %v693, 8
      %v759 = vpop.permute.xlu0 %758
      %760 = vrot.lane.b32.xlu0 %v695, 8
      %v761 = vpop.permute.xlu0 %760
      %762 = vrot.lane.b32.xlu0 %v698, 8
      %v763 = vpop.permute.xlu0 %762
      %764 = vrot.lane.b32.xlu0 %v700, 8
      %v765 = vpop.permute.xlu0 %764
      %766 = vrot.lane.b32.xlu0 %v703, 8
      %v767 = vpop.permute.xlu0 %766
      %768 = vrot.lane.b32.xlu0 %v705, 8
      %v769 = vpop.permute.xlu0 %768
      %804 = vrot.lane.b32.xlu0 %v349, 12
      %v805 = vpop.permute.xlu0 %804
      %806 = vrot.lane.b32.xlu0 %v350, 12
      %v807 = vpop.permute.xlu0 %806
      %808 = vrot.lane.b32.xlu0 %v352, 12
      %v809 = vpop.permute.xlu0 %808
      %810 = vrot.lane.b32.xlu0 %v353, 12
      %v811 = vpop.permute.xlu0 %810
      %812 = vrot.lane.b32.xlu0 %v355, 12
      %v813 = vpop.permute.xlu0 %812
      %814 = vrot.lane.b32.xlu0 %v356, 12
      %v815 = vpop.permute.xlu0 %814
      %816 = vrot.lane.b32.xlu0 %v358, 12
      %v817 = vpop.permute.xlu0 %816
      %818 = vrot.lane.b32.xlu0 %v359, 12
      %v819 = vpop.permute.xlu0 %818
      %820 = vrot.lane.b32.xlu0 %v361, 12
      %v821 = vpop.permute.xlu0 %820
      %822 = vrot.lane.b32.xlu0 %v362, 12
      %v823 = vpop.permute.xlu0 %822
      %824 = vrot.lane.b32.xlu0 %v364, 12
      %v825 = vpop.permute.xlu0 %824
      %826 = vrot.lane.b32.xlu0 %v365, 12
      %v827 = vpop.permute.xlu0 %826
      %828 = vrot.lane.b32.xlu0 %v367, 12
      %v829 = vpop.permute.xlu0 %828
      %830 = vrot.lane.b32.xlu0 %v368, 12
      %v831 = vpop.permute.xlu0 %830
      %832 = vrot.lane.b32.xlu0 %v370, 12
      %v833 = vpop.permute.xlu0 %832
      %834 = vrot.lane.b32.xlu0 %v371, 12
      %v835 = vpop.permute.xlu0 %834
      %836 = vrot.lane.b32.xlu0 %v373, 12
      %v837 = vpop.permute.xlu0 %836
      %838 = vrot.lane.b32.xlu0 %v374, 12
      %v839 = vpop.permute.xlu0 %838
      %840 = vrot.lane.b32.xlu0 %v376, 12
      %v841 = vpop.permute.xlu0 %840
      %842 = vrot.lane.b32.xlu0 %v377, 12
      %v843 = vpop.permute.xlu0 %842
      %844 = vrot.lane.b32.xlu0 %v379, 12
      %v845 = vpop.permute.xlu0 %844
      %846 = vrot.lane.b32.xlu0 %v380, 12
      %v847 = vpop.permute.xlu0 %846
      %848 = vrot.lane.b32.xlu0 %v382, 12
      %v849 = vpop.permute.xlu0 %848
      %850 = vrot.lane.b32.xlu0 %v383, 12
      %v851 = vpop.permute.xlu0 %850
      %852 = vrot.lane.b32.xlu0 %v385, 12
      %v853 = vpop.permute.xlu0 %852
      %854 = vrot.lane.b32.xlu0 %v386, 12
      %v855 = vpop.permute.xlu0 %854
      %856 = vrot.lane.b32.xlu0 %v388, 12
      %v857 = vpop.permute.xlu0 %856
      %858 = vrot.lane.b32.xlu0 %v389, 12
      %v859 = vpop.permute.xlu0 %858
      %860 = vrot.lane.b32.xlu0 %v391, 12
      %v861 = vpop.permute.xlu0 %860
      %862 = vrot.lane.b32.xlu0 %v392, 12
      %v863 = vpop.permute.xlu0 %862
      %864 = vrot.lane.b32.xlu0 %v394, 12
      %v865 = vpop.permute.xlu0 %864
      %866 = vrot.lane.b32.xlu0 %v395, 12
      %v867 = vpop.permute.xlu0 %866
      %v901 = vrot.slane %v394, 1
      %v902 = vrot.slane %v395, 1
      %v903 = vsel %vm448, %v901, %v902
      %v904 = vrot.slane %v396, 1
      %v905 = vsel %vm448, %v902, %v904
      %906 = vrot.lane.b32.xlu0 %v456, 16
      %v907 = vpop.permute.xlu0 %906
      %908 = vrot.lane.b32.xlu0 %v458, 16
      %v909 = vpop.permute.xlu0 %908
      %910 = vrot.lane.b32.xlu0 %v461, 16
      %v911 = vpop.permute.xlu0 %910
      %912 = vrot.lane.b32.xlu0 %v463, 16
      %v913 = vpop.permute.xlu0 %912
      %914 = vrot.lane.b32.xlu0 %v466, 16
      %v915 = vpop.permute.xlu0 %914
      %916 = vrot.lane.b32.xlu0 %v468, 16
      %v917 = vpop.permute.xlu0 %916
      %918 = vrot.lane.b32.xlu0 %v471, 16
      %v919 = vpop.permute.xlu0 %918
      %920 = vrot.lane.b32.xlu0 %v473, 16
      %v921 = vpop.permute.xlu0 %920
      %922 = vrot.lane.b32.xlu0 %v476, 16
      %v923 = vpop.permute.xlu0 %922
      %924 = vrot.lane.b32.xlu0 %v478, 16
      %v925 = vpop.permute.xlu0 %924
      %926 = vrot.lane.b32.xlu0 %v481, 16
      %v927 = vpop.permute.xlu0 %926
      %928 = vrot.lane.b32.xlu0 %v483, 16
      %v929 = vpop.permute.xlu0 %928
      %930 = vrot.lane.b32.xlu0 %v486, 16
      %v931 = vpop.permute.xlu0 %930
      %932 = vrot.lane.b32.xlu0 %v488, 16
      %v933 = vpop.permute.xlu0 %932
      %934 = vrot.lane.b32.xlu0 %v491, 16
      %v935 = vpop.permute.xlu0 %934
      %936 = vrot.lane.b32.xlu0 %v493, 16
      %v937 = vpop.permute.xlu0 %936
      %938 = vrot.lane.b32.xlu0 %v496, 16
      %v939 = vpop.permute.xlu0 %938
      %940 = vrot.lane.b32.xlu0 %v498, 16
      %v941 = vpop.permute.xlu0 %940
      %942 = vrot.lane.b32.xlu0 %v501, 16
      %v943 = vpop.permute.xlu0 %942
      %944 = vrot.lane.b32.xlu0 %v503, 16
      %v945 = vpop.permute.xlu0 %944
      %946 = vrot.lane.b32.xlu0 %v506, 16
      %v947 = vpop.permute.xlu0 %946
      %948 = vrot.lane.b32.xlu0 %v508, 16
      %v949 = vpop.permute.xlu0 %948
      %950 = vrot.lane.b32.xlu0 %v511, 16
      %v951 = vpop.permute.xlu0 %950
      %952 = vrot.lane.b32.xlu0 %v513, 16
      %v953 = vpop.permute.xlu0 %952
      %954 = vrot.lane.b32.xlu0 %v516, 16
      %v955 = vpop.permute.xlu0 %954
      %956 = vrot.lane.b32.xlu0 %v518, 16
      %v957 = vpop.permute.xlu0 %956
      %958 = vrot.lane.b32.xlu0 %v521, 16
      %v959 = vpop.permute.xlu0 %958
      %960 = vrot.lane.b32.xlu0 %v523, 16
      %v961 = vpop.permute.xlu0 %960
      %962 = vrot.lane.b32.xlu0 %v526, 16
      %v963 = vpop.permute.xlu0 %962
      %964 = vrot.lane.b32.xlu0 %v528, 16
      %v965 = vpop.permute.xlu0 %964
      %966 = vrot.lane.b32.xlu0 %v903, 16
      %v967 = vpop.permute.xlu0 %966
      %968 = vrot.lane.b32.xlu0 %v905, 16
      %v969 = vpop.permute.xlu0 %968
      %v1002 = vrot.slane %v394, 2
      %v1003 = vrot.slane %v395, 2
      %v1004 = vsel %vm625, %v1002, %v1003
      %v1005 = vrot.slane %v396, 2
      %v1006 = vsel %vm625, %v1003, %v1005
      %1007 = vrot.lane.b32.xlu0 %v633, 20
      %v1008 = vpop.permute.xlu0 %1007
      %1009 = vrot.lane.b32.xlu0 %v635, 20
      %v1010 = vpop.permute.xlu0 %1009
      %1011 = vrot.lane.b32.xlu0 %v638, 20
      %v1012 = vpop.permute.xlu0 %1011
      %1013 = vrot.lane.b32.xlu0 %v640, 20
      %v1014 = vpop.permute.xlu0 %1013
      %1015 = vrot.lane.b32.xlu0 %v643, 20
      %v1016 = vpop.permute.xlu0 %1015
      %1017 = vrot.lane.b32.xlu0 %v645, 20
      %v1018 = vpop.permute.xlu0 %1017
      %1019 = vrot.lane.b32.xlu0 %v648, 20
      %v1020 = vpop.permute.xlu0 %1019
      %1021 = vrot.lane.b32.xlu0 %v650, 20
      %v1022 = vpop.permute.xlu0 %1021
      %1023 = vrot.lane.b32.xlu0 %v653, 20
      %v1024 = vpop.permute.xlu0 %1023
      %1025 = vrot.lane.b32.xlu0 %v655, 20
      %v1026 = vpop.permute.xlu0 %1025
      %1027 = vrot.lane.b32.xlu0 %v658, 20
      %v1028 = vpop.permute.xlu0 %1027
      %1029 = vrot.lane.b32.xlu0 %v660, 20
      %v1030 = vpop.permute.xlu0 %1029
      %1031 = vrot.lane.b32.xlu0 %v663, 20
      %v1032 = vpop.permute.xlu0 %1031
      %1033 = vrot.lane.b32.xlu0 %v665, 20
      %v1034 = vpop.permute.xlu0 %1033
      %1035 = vrot.lane.b32.xlu0 %v668, 20
      %v1036 = vpop.permute.xlu0 %1035
      %1037 = vrot.lane.b32.xlu0 %v670, 20
      %v1038 = vpop.permute.xlu0 %1037
      %1039 = vrot.lane.b32.xlu0 %v673, 20
      %v1040 = vpop.permute.xlu0 %1039
      %1041 = vrot.lane.b32.xlu0 %v675, 20
      %v1042 = vpop.permute.xlu0 %1041
      %1043 = vrot.lane.b32.xlu0 %v678, 20
      %v1044 = vpop.permute.xlu0 %1043
      %1045 = vrot.lane.b32.xlu0 %v680, 20
      %v1046 = vpop.permute.xlu0 %1045
      %1047 = vrot.lane.b32.xlu0 %v683, 20
      %v1048 = vpop.permute.xlu0 %1047
      %1049 = vrot.lane.b32.xlu0 %v685, 20
      %v1050 = vpop.permute.xlu0 %1049
      %1051 = vrot.lane.b32.xlu0 %v688, 20
      %v1052 = vpop.permute.xlu0 %1051
      %1053 = vrot.lane.b32.xlu0 %v690, 20
      %v1054 = vpop.permute.xlu0 %1053
      %1055 = vrot.lane.b32.xlu0 %v693, 20
      %v1056 = vpop.permute.xlu0 %1055
      %1057 = vrot.lane.b32.xlu0 %v695, 20
      %v1058 = vpop.permute.xlu0 %1057
      %1059 = vrot.lane.b32.xlu0 %v698, 20
      %v1060 = vpop.permute.xlu0 %1059
      %1061 = vrot.lane.b32.xlu0 %v700, 20
      %v1062 = vpop.permute.xlu0 %1061
      %1063 = vrot.lane.b32.xlu0 %v703, 20
      %v1064 = vpop.permute.xlu0 %1063
      %1065 = vrot.lane.b32.xlu0 %v705, 20
      %v1066 = vpop.permute.xlu0 %1065
      %1067 = vrot.lane.b32.xlu0 %v1004, 20
      %v1068 = vpop.permute.xlu0 %1067
      %1069 = vrot.lane.b32.xlu0 %v1006, 20
      %v1070 = vpop.permute.xlu0 %1069
      %1105 = vrot.lane.b32.xlu0 %v352, 24
      %v1106 = vpop.permute.xlu0 %1105
      %1107 = vrot.lane.b32.xlu0 %v353, 24
      %v1108 = vpop.permute.xlu0 %1107
      %1109 = vrot.lane.b32.xlu0 %v355, 24
      %v1110 = vpop.permute.xlu0 %1109
      %1111 = vrot.lane.b32.xlu0 %v356, 24
      %v1112 = vpop.permute.xlu0 %1111
      %1113 = vrot.lane.b32.xlu0 %v358, 24
      %v1114 = vpop.permute.xlu0 %1113
      %1115 = vrot.lane.b32.xlu0 %v359, 24
      %v1116 = vpop.permute.xlu0 %1115
      %1117 = vrot.lane.b32.xlu0 %v361, 24
      %v1118 = vpop.permute.xlu0 %1117
      %1119 = vrot.lane.b32.xlu0 %v362, 24
      %v1120 = vpop.permute.xlu0 %1119
      %1121 = vrot.lane.b32.xlu0 %v364, 24
      %v1122 = vpop.permute.xlu0 %1121
      %1123 = vrot.lane.b32.xlu0 %v365, 24
      %v1124 = vpop.permute.xlu0 %1123
      %1125 = vrot.lane.b32.xlu0 %v367, 24
      %v1126 = vpop.permute.xlu0 %1125
      %1127 = vrot.lane.b32.xlu0 %v368, 24
      %v1128 = vpop.permute.xlu0 %1127
      %1129 = vrot.lane.b32.xlu0 %v370, 24
      %v1130 = vpop.permute.xlu0 %1129
      %1131 = vrot.lane.b32.xlu0 %v371, 24
      %v1132 = vpop.permute.xlu0 %1131
      %1133 = vrot.lane.b32.xlu0 %v373, 24
      %v1134 = vpop.permute.xlu0 %1133
      %1135 = vrot.lane.b32.xlu0 %v374, 24
      %v1136 = vpop.permute.xlu0 %1135
      %1137 = vrot.lane.b32.xlu0 %v376, 24
      %v1138 = vpop.permute.xlu0 %1137
      %1139 = vrot.lane.b32.xlu0 %v377, 24
      %v1140 = vpop.permute.xlu0 %1139
      %1141 = vrot.lane.b32.xlu0 %v379, 24
      %v1142 = vpop.permute.xlu0 %1141
      %1143 = vrot.lane.b32.xlu0 %v380, 24
      %v1144 = vpop.permute.xlu0 %1143
      %1145 = vrot.lane.b32.xlu0 %v382, 24
      %v1146 = vpop.permute.xlu0 %1145
      %1147 = vrot.lane.b32.xlu0 %v383, 24
      %v1148 = vpop.permute.xlu0 %1147
      %1149 = vrot.lane.b32.xlu0 %v385, 24
      %v1150 = vpop.permute.xlu0 %1149
      %1151 = vrot.lane.b32.xlu0 %v386, 24
      %v1152 = vpop.permute.xlu0 %1151
      %1153 = vrot.lane.b32.xlu0 %v388, 24
      %v1154 = vpop.permute.xlu0 %1153
      %1155 = vrot.lane.b32.xlu0 %v389, 24
      %v1156 = vpop.permute.xlu0 %1155
      %1157 = vrot.lane.b32.xlu0 %v391, 24
      %v1158 = vpop.permute.xlu0 %1157
      %1159 = vrot.lane.b32.xlu0 %v392, 24
      %v1160 = vpop.permute.xlu0 %1159
      %1161 = vrot.lane.b32.xlu0 %v394, 24
      %v1162 = vpop.permute.xlu0 %1161
      %1163 = vrot.lane.b32.xlu0 %v395, 24
      %v1164 = vpop.permute.xlu0 %1163
      %1165 = vrot.lane.b32.xlu0 %v397, 24
      %v1166 = vpop.permute.xlu0 %1165
      %1167 = vrot.lane.b32.xlu0 %v398, 24
      %v1168 = vpop.permute.xlu0 %1167
      %v1202 = vrot.slane %v397, 1
      %v1203 = vrot.slane %v398, 1
      %v1204 = vsel %vm448, %v1202, %v1203
      %v1205 = vrot.slane %v399, 1
      %v1206 = vsel %vm448, %v1203, %v1205
      %1207 = vrot.lane.b32.xlu0 %v461, 28
      %v1208 = vpop.permute.xlu0 %1207
      %1209 = vrot.lane.b32.xlu0 %v463, 28
      %v1210 = vpop.permute.xlu0 %1209
      %1211 = vrot.lane.b32.xlu0 %v466, 28
      %v1212 = vpop.permute.xlu0 %1211
      %1213 = vrot.lane.b32.xlu0 %v468, 28
      %v1214 = vpop.permute.xlu0 %1213
      %1215 = vrot.lane.b32.xlu0 %v471, 28
      %v1216 = vpop.permute.xlu0 %1215
      %1217 = vrot.lane.b32.xlu0 %v473, 28
      %v1218 = vpop.permute.xlu0 %1217
      %1219 = vrot.lane.b32.xlu0 %v476, 28
      %v1220 = vpop.permute.xlu0 %1219
      %1221 = vrot.lane.b32.xlu0 %v478, 28
      %v1222 = vpop.permute.xlu0 %1221
      %1223 = vrot.lane.b32.xlu0 %v481, 28
      %v1224 = vpop.permute.xlu0 %1223
      %1225 = vrot.lane.b32.xlu0 %v483, 28
      %v1226 = vpop.permute.xlu0 %1225
      %1227 = vrot.lane.b32.xlu0 %v486, 28
      %v1228 = vpop.permute.xlu0 %1227
      %1229 = vrot.lane.b32.xlu0 %v488, 28
      %v1230 = vpop.permute.xlu0 %1229
      %1231 = vrot.lane.b32.xlu0 %v491, 28
      %v1232 = vpop.permute.xlu0 %1231
      %1233 = vrot.lane.b32.xlu0 %v493, 28
      %v1234 = vpop.permute.xlu0 %1233
      %1235 = vrot.lane.b32.xlu0 %v496, 28
      %v1236 = vpop.permute.xlu0 %1235
      %1237 = vrot.lane.b32.xlu0 %v498, 28
      %v1238 = vpop.permute.xlu0 %1237
      %1239 = vrot.lane.b32.xlu0 %v501, 28
      %v1240 = vpop.permute.xlu0 %1239
      %1241 = vrot.lane.b32.xlu0 %v503, 28
      %v1242 = vpop.permute.xlu0 %1241
      %1243 = vrot.lane.b32.xlu0 %v506, 28
      %v1244 = vpop.permute.xlu0 %1243
      %1245 = vrot.lane.b32.xlu0 %v508, 28
      %v1246 = vpop.permute.xlu0 %1245
      %1247 = vrot.lane.b32.xlu0 %v511, 28
      %v1248 = vpop.permute.xlu0 %1247
      %1249 = vrot.lane.b32.xlu0 %v513, 28
      %v1250 = vpop.permute.xlu0 %1249
      %1251 = vrot.lane.b32.xlu0 %v516, 28
      %v1252 = vpop.permute.xlu0 %1251
      %1253 = vrot.lane.b32.xlu0 %v518, 28
      %v1254 = vpop.permute.xlu0 %1253
      %1255 = vrot.lane.b32.xlu0 %v521, 28
      %v1256 = vpop.permute.xlu0 %1255
      %1257 = vrot.lane.b32.xlu0 %v523, 28
      %v1258 = vpop.permute.xlu0 %1257
      %1259 = vrot.lane.b32.xlu0 %v526, 28
      %v1260 = vpop.permute.xlu0 %1259
      %1261 = vrot.lane.b32.xlu0 %v528, 28
      %v1262 = vpop.permute.xlu0 %1261
      %1263 = vrot.lane.b32.xlu0 %v903, 28
      %v1264 = vpop.permute.xlu0 %1263
      %1265 = vrot.lane.b32.xlu0 %v905, 28
      %v1266 = vpop.permute.xlu0 %1265
      %1267 = vrot.lane.b32.xlu0 %v1204, 28
      %v1268 = vpop.permute.xlu0 %1267
      %1269 = vrot.lane.b32.xlu0 %v1206, 28
      %v1270 = vpop.permute.xlu0 %1269
      %v1303 = vrot.slane %v397, 2
      %v1304 = vrot.slane %v398, 2
      %v1305 = vsel %vm625, %v1303, %v1304
      %v1306 = vrot.slane %v399, 2
      %v1307 = vsel %vm625, %v1304, %v1306
      %1308 = vrot.lane.b32.xlu0 %v638, 32
      %v1309 = vpop.permute.xlu0 %1308
      %1310 = vrot.lane.b32.xlu0 %v640, 32
      %v1311 = vpop.permute.xlu0 %1310
      %1312 = vrot.lane.b32.xlu0 %v643, 32
      %v1313 = vpop.permute.xlu0 %1312
      %1314 = vrot.lane.b32.xlu0 %v645, 32
      %v1315 = vpop.permute.xlu0 %1314
      %1316 = vrot.lane.b32.xlu0 %v648, 32
      %v1317 = vpop.permute.xlu0 %1316
      %1318 = vrot.lane.b32.xlu0 %v650, 32
      %v1319 = vpop.permute.xlu0 %1318
      %1320 = vrot.lane.b32.xlu0 %v653, 32
      %v1321 = vpop.permute.xlu0 %1320
      %1322 = vrot.lane.b32.xlu0 %v655, 32
      %v1323 = vpop.permute.xlu0 %1322
      %1324 = vrot.lane.b32.xlu0 %v658, 32
      %v1325 = vpop.permute.xlu0 %1324
      %1326 = vrot.lane.b32.xlu0 %v660, 32
      %v1327 = vpop.permute.xlu0 %1326
      %1328 = vrot.lane.b32.xlu0 %v663, 32
      %v1329 = vpop.permute.xlu0 %1328
      %1330 = vrot.lane.b32.xlu0 %v665, 32
      %v1331 = vpop.permute.xlu0 %1330
      %1332 = vrot.lane.b32.xlu0 %v668, 32
      %v1333 = vpop.permute.xlu0 %1332
      %1334 = vrot.lane.b32.xlu0 %v670, 32
      %v1335 = vpop.permute.xlu0 %1334
      %1336 = vrot.lane.b32.xlu0 %v673, 32
      %v1337 = vpop.permute.xlu0 %1336
      %1338 = vrot.lane.b32.xlu0 %v675, 32
      %v1339 = vpop.permute.xlu0 %1338
      %1340 = vrot.lane.b32.xlu0 %v678, 32
      %v1341 = vpop.permute.xlu0 %1340
      %1342 = vrot.lane.b32.xlu0 %v680, 32
      %v1343 = vpop.permute.xlu0 %1342
      %1344 = vrot.lane.b32.xlu0 %v683, 32
      %v1345 = vpop.permute.xlu0 %1344
      %1346 = vrot.lane.b32.xlu0 %v685, 32
      %v1347 = vpop.permute.xlu0 %1346
      %1348 = vrot.lane.b32.xlu0 %v688, 32
      %v1349 = vpop.permute.xlu0 %1348
      %1350 = vrot.lane.b32.xlu0 %v690, 32
      %v1351 = vpop.permute.xlu0 %1350
      %1352 = vrot.lane.b32.xlu0 %v693, 32
      %v1353 = vpop.permute.xlu0 %1352
      %1354 = vrot.lane.b32.xlu0 %v695, 32
      %v1355 = vpop.permute.xlu0 %1354
      %1356 = vrot.lane.b32.xlu0 %v698, 32
      %v1357 = vpop.permute.xlu0 %1356
      %1358 = vrot.lane.b32.xlu0 %v700, 32
      %v1359 = vpop.permute.xlu0 %1358
      %1360 = vrot.lane.b32.xlu0 %v703, 32
      %v1361 = vpop.permute.xlu0 %1360
      %1362 = vrot.lane.b32.xlu0 %v705, 32
      %v1363 = vpop.permute.xlu0 %1362
      %1364 = vrot.lane.b32.xlu0 %v1004, 32
      %v1365 = vpop.permute.xlu0 %1364
      %1366 = vrot.lane.b32.xlu0 %v1006, 32
      %v1367 = vpop.permute.xlu0 %1366
      %1368 = vrot.lane.b32.xlu0 %v1305, 32
      %v1369 = vpop.permute.xlu0 %1368
      %1370 = vrot.lane.b32.xlu0 %v1307, 32
      %v1371 = vpop.permute.xlu0 %1370
      %v1404 = vsel %vm225, %v346, %v530
      %v1405 = vsel %vm225, %v347, %v532
      %v1406 = vsel %vm225, %v349, %v534
      %v1407 = vsel %vm225, %v350, %v536
      %v1408 = vsel %vm225, %v352, %v538
      %v1409 = vsel %vm225, %v353, %v540
      %v1410 = vsel %vm225, %v355, %v542
      %v1411 = vsel %vm225, %v356, %v544
      %v1412 = vsel %vm225, %v358, %v546
      %v1413 = vsel %vm225, %v359, %v548
      %v1414 = vsel %vm225, %v361, %v550
      %v1415 = vsel %vm225, %v362, %v552
      %v1416 = vsel %vm225, %v364, %v554
      %v1417 = vsel %vm225, %v365, %v556
      %v1418 = vsel %vm225, %v367, %v558
      %v1419 = vsel %vm225, %v368, %v560
      %v1420 = vsel %vm225, %v370, %v562
      %v1421 = vsel %vm225, %v371, %v564
      %v1422 = vsel %vm225, %v373, %v566
      %v1423 = vsel %vm225, %v374, %v568
      %v1424 = vsel %vm225, %v376, %v570
      %v1425 = vsel %vm225, %v377, %v572
      %v1426 = vsel %vm225, %v379, %v574
      %v1427 = vsel %vm225, %v380, %v576
      %v1428 = vsel %vm225, %v382, %v578
      %v1429 = vsel %vm225, %v383, %v580
      %v1430 = vsel %vm225, %v385, %v582
      %v1431 = vsel %vm225, %v386, %v584
      %v1432 = vsel %vm225, %v388, %v586
      %v1433 = vsel %vm225, %v389, %v588
      %v1434 = vsel %vm225, %v391, %v590
      %v1435 = vsel %vm225, %v392, %v592
      %vm1436 = vcmask 64512
      %v1437 = vsel %vm1436, %v1404, %v707
      %v1438 = vsel %vm1436, %v1405, %v709
      %v1439 = vsel %vm1436, %v1406, %v711
      %v1440 = vsel %vm1436, %v1407, %v713
      %v1441 = vsel %vm1436, %v1408, %v715
      %v1442 = vsel %vm1436, %v1409, %v717
      %v1443 = vsel %vm1436, %v1410, %v719
      %v1444 = vsel %vm1436, %v1411, %v721
      %v1445 = vsel %vm1436, %v1412, %v723
      %v1446 = vsel %vm1436, %v1413, %v725
      %v1447 = vsel %vm1436, %v1414, %v727
      %v1448 = vsel %vm1436, %v1415, %v729
      %v1449 = vsel %vm1436, %v1416, %v731
      %v1450 = vsel %vm1436, %v1417, %v733
      %v1451 = vsel %vm1436, %v1418, %v735
      %v1452 = vsel %vm1436, %v1419, %v737
      %v1453 = vsel %vm1436, %v1420, %v739
      %v1454 = vsel %vm1436, %v1421, %v741
      %v1455 = vsel %vm1436, %v1422, %v743
      %v1456 = vsel %vm1436, %v1423, %v745
      %v1457 = vsel %vm1436, %v1424, %v747
      %v1458 = vsel %vm1436, %v1425, %v749
      %v1459 = vsel %vm1436, %v1426, %v751
      %v1460 = vsel %vm1436, %v1427, %v753
      %v1461 = vsel %vm1436, %v1428, %v755
      %v1462 = vsel %vm1436, %v1429, %v757
      %v1463 = vsel %vm1436, %v1430, %v759
      %v1464 = vsel %vm1436, %v1431, %v761
      %v1465 = vsel %vm1436, %v1432, %v763
      %v1466 = vsel %vm1436, %v1433, %v765
      %v1467 = vsel %vm1436, %v1434, %v767
      %v1468 = vsel %vm1436, %v1435, %v769
      %vm1469 = vcmask 97280
      %v1470 = vsel %vm1469, %v1437, %v805
      %v1471 = vsel %vm1469, %v1438, %v807
      %v1472 = vsel %vm1469, %v1439, %v809
      %v1473 = vsel %vm1469, %v1440, %v811
      %v1474 = vsel %vm1469, %v1441, %v813
      %v1475 = vsel %vm1469, %v1442, %v815
      %v1476 = vsel %vm1469, %v1443, %v817
      %v1477 = vsel %vm1469, %v1444, %v819
      %v1478 = vsel %vm1469, %v1445, %v821
      %v1479 = vsel %vm1469, %v1446, %v823
      %v1480 = vsel %vm1469, %v1447, %v825
      %v1481 = vsel %vm1469, %v1448, %v827
      %v1482 = vsel %vm1469, %v1449, %v829
      %v1483 = vsel %vm1469, %v1450, %v831
      %v1484 = vsel %vm1469, %v1451, %v833
      %v1485 = vsel %vm1469, %v1452, %v835
      %v1486 = vsel %vm1469, %v1453, %v837
      %v1487 = vsel %vm1469, %v1454, %v839
      %v1488 = vsel %vm1469, %v1455, %v841
      %v1489 = vsel %vm1469, %v1456, %v843
      %v1490 = vsel %vm1469, %v1457, %v845
      %v1491 = vsel %vm1469, %v1458, %v847
      %v1492 = vsel %vm1469, %v1459, %v849
      %v1493 = vsel %vm1469, %v1460, %v851
      %v1494 = vsel %vm1469, %v1461, %v853
      %v1495 = vsel %vm1469, %v1462, %v855
      %v1496 = vsel %vm1469, %v1463, %v857
      %v1497 = vsel %vm1469, %v1464, %v859
      %v1498 = vsel %vm1469, %v1465, %v861
      %v1499 = vsel %vm1469, %v1466, %v863
      %v1500 = vsel %vm1469, %v1467, %v865
      %v1501 = vsel %vm1469, %v1468, %v867
      %vm1502 = vcmask 130048
      %v1503 = vsel %vm1502, %v1470, %v907
      %v1504 = vsel %vm1502, %v1471, %v909
      %v1505 = vsel %vm1502, %v1472, %v911
      %v1506 = vsel %vm1502, %v1473, %v913
      %v1507 = vsel %vm1502, %v1474, %v915
      %v1508 = vsel %vm1502, %v1475, %v917
      %v1509 = vsel %vm1502, %v1476, %v919
      %v1510 = vsel %vm1502, %v1477, %v921
      %v1511 = vsel %vm1502, %v1478, %v923
      %v1512 = vsel %vm1502, %v1479, %v925
      %v1513 = vsel %vm1502, %v1480, %v927
      %v1514 = vsel %vm1502, %v1481, %v929
      %v1515 = vsel %vm1502, %v1482, %v931
      %v1516 = vsel %vm1502, %v1483, %v933
      %v1517 = vsel %vm1502, %v1484, %v935
      %v1518 = vsel %vm1502, %v1485, %v937
      %v1519 = vsel %vm1502, %v1486, %v939
      %v1520 = vsel %vm1502, %v1487, %v941
      %v1521 = vsel %vm1502, %v1488, %v943
      %v1522 = vsel %vm1502, %v1489, %v945
      %v1523 = vsel %vm1502, %v1490, %v947
      %v1524 = vsel %vm1502, %v1491, %v949
      %v1525 = vsel %vm1502, %v1492, %v951
      %v1526 = vsel %vm1502, %v1493, %v953
      %v1527 = vsel %vm1502, %v1494, %v955
      %v1528 = vsel %vm1502, %v1495, %v957
      %v1529 = vsel %vm1502, %v1496, %v959
      %v1530 = vsel %vm1502, %v1497, %v961
      %v1531 = vsel %vm1502, %v1498, %v963
      %v1532 = vsel %vm1502, %v1499, %v965
      %v1533 = vsel %vm1502, %v1500, %v967
      %v1534 = vsel %vm1502, %v1501, %v969
      %vm1535 = vcmask 162816
      %v1536 = vsel %vm1535, %v1503, %v1008
      %v1537 = vsel %vm1535, %v1504, %v1010
      %v1538 = vsel %vm1535, %v1505, %v1012
      %v1539 = vsel %vm1535, %v1506, %v1014
      %v1540 = vsel %vm1535, %v1507, %v1016
      %v1541 = vsel %vm1535, %v1508, %v1018
      %v1542 = vsel %vm1535, %v1509, %v1020
      %v1543 = vsel %vm1535, %v1510, %v1022
      %v1544 = vsel %vm1535, %v1511, %v1024
      %v1545 = vsel %vm1535, %v1512, %v1026
      %v1546 = vsel %vm1535, %v1513, %v1028
      %v1547 = vsel %vm1535, %v1514, %v1030
      %v1548 = vsel %vm1535, %v1515, %v1032
      %v1549 = vsel %vm1535, %v1516, %v1034
      %v1550 = vsel %vm1535, %v1517, %v1036
      %v1551 = vsel %vm1535, %v1518, %v1038
      %v1552 = vsel %vm1535, %v1519, %v1040
      %v1553 = vsel %vm1535, %v1520, %v1042
      %v1554 = vsel %vm1535, %v1521, %v1044
      %v1555 = vsel %vm1535, %v1522, %v1046
      %v1556 = vsel %vm1535, %v1523, %v1048
      %v1557 = vsel %vm1535, %v1524, %v1050
      %v1558 = vsel %vm1535, %v1525, %v1052
      %v1559 = vsel %vm1535, %v1526, %v1054
      %v1560 = vsel %vm1535, %v1527, %v1056
      %v1561 = vsel %vm1535, %v1528, %v1058
      %v1562 = vsel %vm1535, %v1529, %v1060
      %v1563 = vsel %vm1535, %v1530, %v1062
      %v1564 = vsel %vm1535, %v1531, %v1064
      %v1565 = vsel %vm1535, %v1532, %v1066
      %v1566 = vsel %vm1535, %v1533, %v1068
      %v1567 = vsel %vm1535, %v1534, %v1070
      %vm1568 = vcmask 195584
      %v1569 = vsel %vm1568, %v1536, %v1106
      %v1570 = vsel %vm1568, %v1537, %v1108
      %v1571 = vsel %vm1568, %v1538, %v1110
      %v1572 = vsel %vm1568, %v1539, %v1112
      %v1573 = vsel %vm1568, %v1540, %v1114
      %v1574 = vsel %vm1568, %v1541, %v1116
      %v1575 = vsel %vm1568, %v1542, %v1118
      %v1576 = vsel %vm1568, %v1543, %v1120
      %v1577 = vsel %vm1568, %v1544, %v1122
      %v1578 = vsel %vm1568, %v1545, %v1124
      %v1579 = vsel %vm1568, %v1546, %v1126
      %v1580 = vsel %vm1568, %v1547, %v1128
      %v1581 = vsel %vm1568, %v1548, %v1130
      %v1582 = vsel %vm1568, %v1549, %v1132
      %v1583 = vsel %vm1568, %v1550, %v1134
      %v1584 = vsel %vm1568, %v1551, %v1136
      %v1585 = vsel %vm1568, %v1552, %v1138
      %v1586 = vsel %vm1568, %v1553, %v1140
      %v1587 = vsel %vm1568, %v1554, %v1142
      %v1588 = vsel %vm1568, %v1555, %v1144
      %v1589 = vsel %vm1568, %v1556, %v1146
      %v1590 = vsel %vm1568, %v1557, %v1148
      %v1591 = vsel %vm1568, %v1558, %v1150
      %v1592 = vsel %vm1568, %v1559, %v1152
      %v1593 = vsel %vm1568, %v1560, %v1154
      %v1594 = vsel %vm1568, %v1561, %v1156
      %v1595 = vsel %vm1568, %v1562, %v1158
      %v1596 = vsel %vm1568, %v1563, %v1160
      %v1597 = vsel %vm1568, %v1564, %v1162
      %v1598 = vsel %vm1568, %v1565, %v1164
      %v1599 = vsel %vm1568, %v1566, %v1166
      %v1600 = vsel %vm1568, %v1567, %v1168
      %vm1601 = vcmask 228352
      %v1602 = vsel %vm1601, %v1569, %v1208
      %v1603 = vsel %vm1601, %v1570, %v1210
      %v1604 = vsel %vm1601, %v1571, %v1212
      %v1605 = vsel %vm1601, %v1572, %v1214
      %v1606 = vsel %vm1601, %v1573, %v1216
      %v1607 = vsel %vm1601, %v1574, %v1218
      %v1608 = vsel %vm1601, %v1575, %v1220
      %v1609 = vsel %vm1601, %v1576, %v1222
      %v1610 = vsel %vm1601, %v1577, %v1224
      %v1611 = vsel %vm1601, %v1578, %v1226
      %v1612 = vsel %vm1601, %v1579, %v1228
      %v1613 = vsel %vm1601, %v1580, %v1230
      %v1614 = vsel %vm1601, %v1581, %v1232
      %v1615 = vsel %vm1601, %v1582, %v1234
      %v1616 = vsel %vm1601, %v1583, %v1236
      %v1617 = vsel %vm1601, %v1584, %v1238
      %v1618 = vsel %vm1601, %v1585, %v1240
      %v1619 = vsel %vm1601, %v1586, %v1242
      %v1620 = vsel %vm1601, %v1587, %v1244
      %v1621 = vsel %vm1601, %v1588, %v1246
      %v1622 = vsel %vm1601, %v1589, %v1248
      %v1623 = vsel %vm1601, %v1590, %v1250
      %v1624 = vsel %vm1601, %v1591, %v1252
      %v1625 = vsel %vm1601, %v1592, %v1254
      %v1626 = vsel %vm1601, %v1593, %v1256
      %v1627 = vsel %vm1601, %v1594, %v1258
      %v1628 = vsel %vm1601, %v1595, %v1260
      %v1629 = vsel %vm1601, %v1596, %v1262
      %v1630 = vsel %vm1601, %v1597, %v1264
      %v1631 = vsel %vm1601, %v1598, %v1266
      %v1632 = vsel %vm1601, %v1599, %v1268
      %v1633 = vsel %vm1601, %v1600, %v1270
      %vm1634 = vcmask 261120
      %v1635 = vsel %vm1634, %v1602, %v1309
      %v1636 = vsel %vm1634, %v1603, %v1311
      %v1637 = vsel %vm1634, %v1604, %v1313
      %v1638 = vsel %vm1634, %v1605, %v1315
      %v1639 = vsel %vm1634, %v1606, %v1317
      %v1640 = vsel %vm1634, %v1607, %v1319
      %v1641 = vsel %vm1634, %v1608, %v1321
      %v1642 = vsel %vm1634, %v1609, %v1323
      %v1643 = vsel %vm1634, %v1610, %v1325
      %v1644 = vsel %vm1634, %v1611, %v1327
      %v1645 = vsel %vm1634, %v1612, %v1329
      %v1646 = vsel %vm1634, %v1613, %v1331
      %v1647 = vsel %vm1634, %v1614, %v1333
      %v1648 = vsel %vm1634, %v1615, %v1335
      %v1649 = vsel %vm1634, %v1616, %v1337
      %v1650 = vsel %vm1634, %v1617, %v1339
      %v1651 = vsel %vm1634, %v1618, %v1341
      %v1652 = vsel %vm1634, %v1619, %v1343
      %v1653 = vsel %vm1634, %v1620, %v1345
      %v1654 = vsel %vm1634, %v1621, %v1347
      %v1655 = vsel %vm1634, %v1622, %v1349
      %v1656 = vsel %vm1634, %v1623, %v1351
      %v1657 = vsel %vm1634, %v1624, %v1353
      %v1658 = vsel %vm1634, %v1625, %v1355
      %v1659 = vsel %vm1634, %v1626, %v1357
      %v1660 = vsel %vm1634, %v1627, %v1359
      %v1661 = vsel %vm1634, %v1628, %v1361
      %v1662 = vsel %vm1634, %v1629, %v1363
      %v1663 = vsel %vm1634, %v1630, %v1365
      %v1664 = vsel %vm1634, %v1631, %v1367
      %v1665 = vsel %vm1634, %v1632, %v1369
      %v1666 = vsel %vm1634, %v1633, %v1371
      %v1667 = vld [vmem:[%s1] sm:$0xff]
      %v1668 = vld [vmem:[%s1 + $0x8] sm:$0xff]
      %v1669 = vld [vmem:[%s1 + $0x10] sm:$0xff]
      %v1670 = vld [vmem:[%s1 + $0x18] sm:$0xff]
      %v1671 = vld [vmem:[%s1 + $0x20] sm:$0xf]
      %v1672 = vld [vmem:[%s2] sm:$0x1]
      %v1674 = vperm.slane %v1672, 0
      %vm1676 = vcmask 293888
      %v1678 = vsel %vm1676, %v1635, 0
      %v1681 = vsel %vm1676, %v1636, 0
      %v1684 = vsel %vm1676, %v1637, 0
      %v1687 = vsel %vm1676, %v1638, 0
      %v1690 = vsel %vm1676, %v1639, 0
      %v1693 = vsel %vm1676, %v1640, 0
      %v1696 = vsel %vm1676, %v1641, 0
      %v1699 = vsel %vm1676, %v1642, 0
      %v1702 = vsel %vm1676, %v1643, 0
      %v1705 = vsel %vm1676, %v1644, 0
      %v1708 = vsel %vm1676, %v1645, 0
      %v1711 = vsel %vm1676, %v1646, 0
      %v1714 = vsel %vm1676, %v1647, 0
      %v1717 = vsel %vm1676, %v1648, 0
      %v1720 = vsel %vm1676, %v1649, 0
      %v1723 = vsel %vm1676, %v1650, 0
      %v1726 = vsel %vm1676, %v1651, 0
      %v1729 = vsel %vm1676, %v1652, 0
      %v1732 = vsel %vm1676, %v1653, 0
      %v1735 = vsel %vm1676, %v1654, 0
      %v1738 = vsel %vm1676, %v1655, 0
      %v1741 = vsel %vm1676, %v1656, 0
      %v1744 = vsel %vm1676, %v1657, 0
      %v1747 = vsel %vm1676, %v1658, 0
      %v1750 = vsel %vm1676, %v1659, 0
      %v1753 = vsel %vm1676, %v1660, 0
      %v1756 = vsel %vm1676, %v1661, 0
      %v1759 = vsel %vm1676, %v1662, 0
      %v1762 = vsel %vm1676, %v1663, 0
      %v1765 = vsel %vm1676, %v1664, 0
      %v1768 = vsel %vm1676, %v1665, 0
      %v1771 = vsel %vm1676, %v1666, 0
      %vm1773 = vcmask 1043456
      %v1775 = vsel %vm1773, %v1671, 0
      %1777 = vmatpush.msra.mxu0 0.0
      %1778 = vmatpush.msra.mxu0 0.0
      %1779 = vmatpush.msra.mxu0 0.0
      %1780 = vmatpush.msra.mxu0 0.0
      %1781 = vmatpush.msra.mxu0 0.0
      %1782 = vmatpush.msra.mxu0 0.0
      %1783 = vmatpush.msra.mxu0 0.0
      %1784 = vmatpush.msra.mxu0 0.0
      %1785 = vmatpush.msra.mxu0 0.0
      %1786 = vmatpush.msra.mxu0 0.0
      %1787 = vmatpush.msra.mxu0 0.0
      %1788 = vmatpush.msra.mxu0 %v1775
      %1789 = vmatpush.msra.mxu0 %v1670
      %1790 = vmatpush.msra.mxu0 %v1669
      %1791 = vmatpush.msra.mxu0 %v1668
      %1792 = vmatpush.msra.mxu0 %v1667
      %1793 = vmatmul.f32.gmra.mxu0 %v1678
      %v1794 = vpop.f32.mrf.mxu0
      %v1795 = vadd.f32 %v1674, %v1794
      %1796 = vmatmul.f32.gmra.mxu0 %v1681
      %v1797 = vpop.f32.mrf.mxu0
      %v1798 = vadd.f32 %v1674, %v1797
      %1799 = vmatmul.f32.gmra.mxu0 %v1684
      %v1800 = vpop.f32.mrf.mxu0
      %v1801 = vadd.f32 %v1674, %v1800
      %1802 = vmatmul.f32.gmra.mxu0 %v1687
      %v1803 = vpop.f32.mrf.mxu0
      %v1804 = vadd.f32 %v1674, %v1803
      %1805 = vmatmul.f32.gmra.mxu0 %v1690
      %v1806 = vpop.f32.mrf.mxu0
      %v1807 = vadd.f32 %v1674, %v1806
      %1808 = vmatmul.f32.gmra.mxu0 %v1693
      %v1809 = vpop.f32.mrf.mxu0
      %v1810 = vadd.f32 %v1674, %v1809
      %1811 = vmatmul.f32.gmra.mxu0 %v1696
      %v1812 = vpop.f32.mrf.mxu0
      %v1813 = vadd.f32 %v1674, %v1812
      %1814 = vmatmul.f32.gmra.mxu0 %v1699
      %v1815 = vpop.f32.mrf.mxu0
      %v1816 = vadd.f32 %v1674, %v1815
      %1817 = vmatmul.f32.gmra.mxu0 %v1702
      %v1818 = vpop.f32.mrf.mxu0
      %v1819 = vadd.f32 %v1674, %v1818
      %1820 = vmatmul.f32.gmra.mxu0 %v1705
      %v1821 = vpop.f32.mrf.mxu0
      %v1822 = vadd.f32 %v1674, %v1821
      %1823 = vmatmul.f32.gmra.mxu0 %v1708
      %v1824 = vpop.f32.mrf.mxu0
      %v1825 = vadd.f32 %v1674, %v1824
      %1826 = vmatmul.f32.gmra.mxu0 %v1711
      %v1827 = vpop.f32.mrf.mxu0
      %v1828 = vadd.f32 %v1674, %v1827
      %1829 = vmatmul.f32.gmra.mxu0 %v1714
      %v1830 = vpop.f32.mrf.mxu0
      %v1831 = vadd.f32 %v1674, %v1830
      %1832 = vmatmul.f32.gmra.mxu0 %v1717
      %v1833 = vpop.f32.mrf.mxu0
      %v1834 = vadd.f32 %v1674, %v1833
      %1835 = vmatmul.f32.gmra.mxu0 %v1720
      %v1836 = vpop.f32.mrf.mxu0
      %v1837 = vadd.f32 %v1674, %v1836
      %1838 = vmatmul.f32.gmra.mxu0 %v1723
      %v1839 = vpop.f32.mrf.mxu0
      %v1840 = vadd.f32 %v1674, %v1839
      %1841 = vmatmul.f32.gmra.mxu0 %v1726
      %v1842 = vpop.f32.mrf.mxu0
      %v1843 = vadd.f32 %v1674, %v1842
      %1844 = vmatmul.f32.gmra.mxu0 %v1729
      %v1845 = vpop.f32.mrf.mxu0
      %v1846 = vadd.f32 %v1674, %v1845
      %1847 = vmatmul.f32.gmra.mxu0 %v1732
      %v1848 = vpop.f32.mrf.mxu0
      %v1849 = vadd.f32 %v1674, %v1848
      %1850 = vmatmul.f32.gmra.mxu0 %v1735
      %v1851 = vpop.f32.mrf.mxu0
      %v1852 = vadd.f32 %v1674, %v1851
      %1853 = vmatmul.f32.gmra.mxu0 %v1738
      %v1854 = vpop.f32.mrf.mxu0
      %v1855 = vadd.f32 %v1674, %v1854
      %1856 = vmatmul.f32.gmra.mxu0 %v1741
      %v1857 = vpop.f32.mrf.mxu0
      %v1858 = vadd.f32 %v1674, %v1857
      %1859 = vmatmul.f32.gmra.mxu0 %v1744
      %v1860 = vpop.f32.mrf.mxu0
      %v1861 = vadd.f32 %v1674, %v1860
      %1862 = vmatmul.f32.gmra.mxu0 %v1747
      %v1863 = vpop.f32.mrf.mxu0
      %v1864 = vadd.f32 %v1674, %v1863
      %1865 = vmatmul.f32.gmra.mxu0 %v1750
      %v1866 = vpop.f32.mrf.mxu0
      %v1867 = vadd.f32 %v1674, %v1866
      %1868 = vmatmul.f32.gmra.mxu0 %v1753
      %v1869 = vpop.f32.mrf.mxu0
      %v1870 = vadd.f32 %v1674, %v1869
      %1871 = vmatmul.f32.gmra.mxu0 %v1756
      %v1872 = vpop.f32.mrf.mxu0
      %v1873 = vadd.f32 %v1674, %v1872
      %1874 = vmatmul.f32.gmra.mxu0 %v1759
      %v1875 = vpop.f32.mrf.mxu0
      %v1876 = vadd.f32 %v1674, %v1875
      %1877 = vmatmul.f32.gmra.mxu0 %v1762
      %v1878 = vpop.f32.mrf.mxu0
      %v1879 = vadd.f32 %v1674, %v1878
      %1880 = vmatmul.f32.gmra.mxu0 %v1765
      %v1881 = vpop.f32.mrf.mxu0
      %v1882 = vadd.f32 %v1674, %v1881
      %1883 = vmatmul.f32.gmra.mxu0 %v1768
      %v1884 = vpop.f32.mrf.mxu0
      %v1885 = vadd.f32 %v1674, %v1884
      %1886 = vmatmul.f32.gmra.mxu0 %v1771
      %v1887 = vpop.f32.mrf.mxu0
      %v1888 = vadd.f32 %v1674, %v1887
      %1889 = vdwg.mxu0
      %v1890 = vmul.f32 %v1795, 0.2
      %v1891 = vmul.f32 %v1798, 0.2
      %v1892 = vmul.f32 %v1801, 0.2
      %v1893 = vmul.f32 %v1804, 0.2
      %v1894 = vmul.f32 %v1807, 0.2
      %v1895 = vmul.f32 %v1810, 0.2
      %v1896 = vmul.f32 %v1813, 0.2
      %v1897 = vmul.f32 %v1816, 0.2
      %v1898 = vmul.f32 %v1819, 0.2
      %v1899 = vmul.f32 %v1822, 0.2
      %v1900 = vmul.f32 %v1825, 0.2
      %v1901 = vmul.f32 %v1828, 0.2
      %v1902 = vmul.f32 %v1831, 0.2
      %v1903 = vmul.f32 %v1834, 0.2
      %v1904 = vmul.f32 %v1837, 0.2
      %v1905 = vmul.f32 %v1840, 0.2
      %v1906 = vmul.f32 %v1843, 0.2
      %v1907 = vmul.f32 %v1846, 0.2
      %v1908 = vmul.f32 %v1849, 0.2
      %v1909 = vmul.f32 %v1852, 0.2
      %v1910 = vmul.f32 %v1855, 0.2
      %v1911 = vmul.f32 %v1858, 0.2
      %v1912 = vmul.f32 %v1861, 0.2
      %v1913 = vmul.f32 %v1864, 0.2
      %v1914 = vmul.f32 %v1867, 0.2
      %v1915 = vmul.f32 %v1870, 0.2
      %v1916 = vmul.f32 %v1873, 0.2
      %v1917 = vmul.f32 %v1876, 0.2
      %v1918 = vmul.f32 %v1879, 0.2
      %v1919 = vmul.f32 %v1882, 0.2
      %v1920 = vmul.f32 %v1885, 0.2
      %v1921 = vmul.f32 %v1888, 0.2
      %v1922 = vmax.f32 %v1795, %v1890
      %v1923 = vmax.f32 %v1798, %v1891
      %v1924 = vmax.f32 %v1801, %v1892
      %v1925 = vmax.f32 %v1804, %v1893
      %v1926 = vmax.f32 %v1807, %v1894
      %v1927 = vmax.f32 %v1810, %v1895
      %v1928 = vmax.f32 %v1813, %v1896
      %v1929 = vmax.f32 %v1816, %v1897
      %v1930 = vmax.f32 %v1819, %v1898
      %v1931 = vmax.f32 %v1822, %v1899
      %v1932 = vmax.f32 %v1825, %v1900
      %v1933 = vmax.f32 %v1828, %v1901
      %v1934 = vmax.f32 %v1831, %v1902
      %v1935 = vmax.f32 %v1834, %v1903
      %v1936 = vmax.f32 %v1837, %v1904
      %v1937 = vmax.f32 %v1840, %v1905
      %v1938 = vmax.f32 %v1843, %v1906
      %v1939 = vmax.f32 %v1846, %v1907
      %v1940 = vmax.f32 %v1849, %v1908
      %v1941 = vmax.f32 %v1852, %v1909
      %v1942 = vmax.f32 %v1855, %v1910
      %v1943 = vmax.f32 %v1858, %v1911
      %v1944 = vmax.f32 %v1861, %v1912
      %v1945 = vmax.f32 %v1864, %v1913
      %v1946 = vmax.f32 %v1867, %v1914
      %v1947 = vmax.f32 %v1870, %v1915
      %v1948 = vmax.f32 %v1873, %v1916
      %v1949 = vmax.f32 %v1876, %v1917
      %v1950 = vmax.f32 %v1879, %v1918
      %v1951 = vmax.f32 %v1882, %v1919
      %v1952 = vmax.f32 %v1885, %v1920
      %v1953 = vmax.f32 %v1888, %v1921
      %1954 = vst.msk [vmem:[#allocation3] sm:$0xff] %vm1436, 0.0
      %1955 = vst.msk [vmem:[#allocation3 + $0x8] sm:$0xff] %vm1436, 0.0
      %vm1956 = vcmask 58368
      %1957 = vst.msk [vmem:[#allocation3 + $0x10] sm:$0x3] %vm1956, 0.0
      %1958 = vst.msk [vmem:[#allocation3 + $0x18] sm:$0xff] %vm1436, 0.0
      %1959 = vst.msk [vmem:[#allocation3 + $0x20] sm:$0xff] %vm1436, 0.0
      %1960 = vst.msk [vmem:[#allocation3 + $0x28] sm:$0x3] %vm1956, 0.0
      %1961 = vst.msk [vmem:[#allocation3 + $0x30] sm:$0xff] %vm1436, 0.0
      %1962 = vst.msk [vmem:[#allocation3 + $0x38] sm:$0xff] %vm1436, 0.0
      %1963 = vst.msk [vmem:[#allocation3 + $0x40] sm:$0x3] %vm1956, 0.0
      %1964 = vst.msk [vmem:[#allocation3 + $0x48] sm:$0xff] %vm1436, 0.0
      %1965 = vst.msk [vmem:[#allocation3 + $0x50] sm:$0xff] %vm1436, 0.0
      %1966 = vst.msk [vmem:[#allocation3 + $0x58] sm:$0x3] %vm1956, 0.0
      %1967 = vst.msk [vmem:[#allocation3 + $0x60] sm:$0xff] %vm1436, 0.0
      %1968 = vst.msk [vmem:[#allocation3 + $0x68] sm:$0xff] %vm1436, 0.0
      %1969 = vst.msk [vmem:[#allocation3 + $0x70] sm:$0x3] %vm1956, 0.0
      %1970 = vst.msk [vmem:[#allocation3 + $0x78] sm:$0xff] %vm1436, 0.0
      %1971 = vst.msk [vmem:[#allocation3 + $0x80] sm:$0xff] %vm1436, 0.0
      %1972 = vst.msk [vmem:[#allocation3 + $0x88] sm:$0x3] %vm1956, 0.0
      %1973 = vst.msk [vmem:[#allocation3 + $0x90] sm:$0xff] %vm1436, 0.0
      %1974 = vst.msk [vmem:[#allocation3 + $0x98] sm:$0xff] %vm1436, 0.0
      %1975 = vst.msk [vmem:[#allocation3 + $0xa0] sm:$0x3] %vm1956, 0.0
      %1976 = vst.msk [vmem:[#allocation3 + $0xa8] sm:$0xff] %vm1436, 0.0
      %1977 = vst.msk [vmem:[#allocation3 + $0xb0] sm:$0xff] %vm1436, 0.0
      %1978 = vst.msk [vmem:[#allocation3 + $0xb8] sm:$0x3] %vm1956, 0.0
      %1979 = vst.msk [vmem:[#allocation3 + $0xc0] sm:$0xff] %vm1436, 0.0
      %1980 = vst.msk [vmem:[#allocation3 + $0xc8] sm:$0xff] %vm1436, 0.0
      %1981 = vst.msk [vmem:[#allocation3 + $0xd0] sm:$0x3] %vm1956, 0.0
      %1982 = vst.msk [vmem:[#allocation3 + $0xd8] sm:$0xff] %vm1436, 0.0
      %1983 = vst.msk [vmem:[#allocation3 + $0xe0] sm:$0xff] %vm1436, 0.0
      %1984 = vst.msk [vmem:[#allocation3 + $0xe8] sm:$0x3] %vm1956, 0.0
      %1985 = vst.msk [vmem:[#allocation3 + $0xf0] sm:$0xff] %vm1436, 0.0
      %1986 = vst.msk [vmem:[#allocation3 + $0xf8] sm:$0xff] %vm1436, 0.0
      %1987 = vst.msk [vmem:[#allocation3 + $0x100] sm:$0x3] %vm1956, 0.0
      %1988 = vst.msk [vmem:[#allocation3 + $0x108] sm:$0xff] %vm1436, 0.0
      %1989 = vst.msk [vmem:[#allocation3 + $0x110] sm:$0xff] %vm1436, 0.0
      %1990 = vst.msk [vmem:[#allocation3 + $0x118] sm:$0x3] %vm1956, 0.0
      %1991 = vst.msk [vmem:[#allocation3 + $0x120] sm:$0xff] %vm1436, 0.0
      %1992 = vst.msk [vmem:[#allocation3 + $0x128] sm:$0xff] %vm1436, 0.0
      %1993 = vst.msk [vmem:[#allocation3 + $0x130] sm:$0x3] %vm1956, 0.0
      %1994 = vst.msk [vmem:[#allocation3 + $0x138] sm:$0xff] %vm1436, 0.0
      %1995 = vst.msk [vmem:[#allocation3 + $0x140] sm:$0xff] %vm1436, 0.0
      %1996 = vst.msk [vmem:[#allocation3 + $0x148] sm:$0x3] %vm1956, 0.0
      %1997 = vst.msk [vmem:[#allocation3 + $0x150] sm:$0xff] %vm1436, 0.0
      %1998 = vst.msk [vmem:[#allocation3 + $0x158] sm:$0xff] %vm1436, 0.0
      %1999 = vst.msk [vmem:[#allocation3 + $0x160] sm:$0x3] %vm1956, 0.0
      %2000 = vst.msk [vmem:[#allocation3 + $0x168] sm:$0xff] %vm1436, 0.0
      %2001 = vst.msk [vmem:[#allocation3 + $0x170] sm:$0xff] %vm1436, 0.0
      %2002 = vst.msk [vmem:[#allocation3 + $0x178] sm:$0x3] %vm1956, 0.0
      %2003 = vst.msk [vmem:[#allocation3 + $0x180] sm:$0xff] %vm1436, 0.0
      %2004 = vst.msk [vmem:[#allocation3 + $0x188] sm:$0xff] %vm1436, 0.0
      %2005 = vst.msk [vmem:[#allocation3 + $0x190] sm:$0x3] %vm1956, 0.0
      %2006 = vst.msk [vmem:[#allocation3 + $0x198] sm:$0xff] %vm1436, 0.0
      %2007 = vst.msk [vmem:[#allocation3 + $0x1a0] sm:$0xff] %vm1436, 0.0
      %2008 = vst.msk [vmem:[#allocation3 + $0x1a8] sm:$0x3] %vm1956, 0.0
      %s2009 = scalar_lea.vmem [#allocation3], 24
      %2010 = vst.msk [vmem:[%s2009 + $0x1] sm:$0xff] %vm1436, %v1922
      %2011 = vst.msk [vmem:[%s2009 + $0x9] sm:$0xff] %vm1436, %v1923
      %2012 = vst.msk [vmem:[%s2009 + $0x19] sm:$0xff] %vm1436, %v1924
      %2013 = vst.msk [vmem:[%s2009 + $0x21] sm:$0xff] %vm1436, %v1925
      %2014 = vst.msk [vmem:[%s2009 + $0x31] sm:$0xff] %vm1436, %v1926
      %2015 = vst.msk [vmem:[%s2009 + $0x39] sm:$0xff] %vm1436, %v1927
      %2016 = vst.msk [vmem:[%s2009 + $0x49] sm:$0xff] %vm1436, %v1928
      %2017 = vst.msk [vmem:[%s2009 + $0x51] sm:$0xff] %vm1436, %v1929
      %2018 = vst.msk [vmem:[%s2009 + $0x61] sm:$0xff] %vm1436, %v1930
      %2019 = vst.msk [vmem:[%s2009 + $0x69] sm:$0xff] %vm1436, %v1931
      %2020 = vst.msk [vmem:[%s2009 + $0x79] sm:$0xff] %vm1436, %v1932
      %2021 = vst.msk [vmem:[%s2009 + $0x81] sm:$0xff] %vm1436, %v1933
      %2022 = vst.msk [vmem:[%s2009 + $0x91] sm:$0xff] %vm1436, %v1934
      %2023 = vst.msk [vmem:[%s2009 + $0x99] sm:$0xff] %vm1436, %v1935
      %2024 = vst.msk [vmem:[%s2009 + $0xa9] sm:$0xff] %vm1436, %v1936
      %2025 = vst.msk [vmem:[%s2009 + $0xb1] sm:$0xff] %vm1436, %v1937
      %2026 = vst.msk [vmem:[%s2009 + $0xc1] sm:$0xff] %vm1436, %v1938
      %2027 = vst.msk [vmem:[%s2009 + $0xc9] sm:$0xff] %vm1436, %v1939
      %2028 = vst.msk [vmem:[%s2009 + $0xd9] sm:$0xff] %vm1436, %v1940
      %2029 = vst.msk [vmem:[%s2009 + $0xe1] sm:$0xff] %vm1436, %v1941
      %2030 = vst.msk [vmem:[%s2009 + $0xf1] sm:$0xff] %vm1436, %v1942
      %2031 = vst.msk [vmem:[%s2009 + $0xf9] sm:$0xff] %vm1436, %v1943
      %2032 = vst.msk [vmem:[%s2009 + $0x109] sm:$0xff] %vm1436, %v1944
      %2033 = vst.msk [vmem:[%s2009 + $0x111] sm:$0xff] %vm1436, %v1945
      %2034 = vst.msk [vmem:[%s2009 + $0x121] sm:$0xff] %vm1436, %v1946
      %2035 = vst.msk [vmem:[%s2009 + $0x129] sm:$0xff] %vm1436, %v1947
      %2036 = vst.msk [vmem:[%s2009 + $0x139] sm:$0xff] %vm1436, %v1948
      %2037 = vst.msk [vmem:[%s2009 + $0x141] sm:$0xff] %vm1436, %v1949
      %2038 = vst.msk [vmem:[%s2009 + $0x151] sm:$0xff] %vm1436, %v1950
      %2039 = vst.msk [vmem:[%s2009 + $0x159] sm:$0xff] %vm1436, %v1951
      %2040 = vst.msk [vmem:[%s2009 + $0x169] sm:$0xff] %vm1436, %v1952
      %2041 = vst.msk [vmem:[%s2009 + $0x171] sm:$0xff] %vm1436, %v1953
      %v2042 = vld [vmem:[#allocation3] sm:$0xff]
      %v2043 = vld [vmem:[#allocation3 + $0x8] sm:$0xff]
      %v2044 = vld [vmem:[#allocation3 + $0x10] sm:$0x3]
      %v2045 = vld [vmem:[#allocation3 + $0x18] sm:$0xff]
      %v2046 = vld [vmem:[#allocation3 + $0x20] sm:$0xff]
      %v2047 = vld [vmem:[#allocation3 + $0x28] sm:$0x3]
      %v2048 = vld [vmem:[#allocation3 + $0x30] sm:$0xff]
      %v2049 = vld [vmem:[#allocation3 + $0x38] sm:$0xff]
      %v2050 = vld [vmem:[#allocation3 + $0x40] sm:$0x3]
      %v2051 = vld [vmem:[#allocation3 + $0x48] sm:$0xff]
      %v2052 = vld [vmem:[#allocation3 + $0x50] sm:$0xff]
      %v2053 = vld [vmem:[#allocation3 + $0x58] sm:$0x3]
      %v2054 = vld [vmem:[#allocation3 + $0x60] sm:$0xff]
      %v2055 = vld [vmem:[#allocation3 + $0x68] sm:$0xff]
      %v2056 = vld [vmem:[#allocation3 + $0x70] sm:$0x3]
      %v2057 = vld [vmem:[#allocation3 + $0x78] sm:$0xff]
      %v2058 = vld [vmem:[#allocation3 + $0x80] sm:$0xff]
      %v2059 = vld [vmem:[#allocation3 + $0x88] sm:$0x3]
      %v2060 = vld [vmem:[#allocation3 + $0x90] sm:$0xff]
      %v2061 = vld [vmem:[#allocation3 + $0x98] sm:$0xff]
      %v2062 = vld [vmem:[#allocation3 + $0xa0] sm:$0x3]
      %v2063 = vld [vmem:[#allocation3 + $0xa8] sm:$0xff]
      %v2064 = vld [vmem:[#allocation3 + $0xb0] sm:$0xff]
      %v2065 = vld [vmem:[#allocation3 + $0xb8] sm:$0x3]
      %v2066 = vld [vmem:[#allocation3 + $0xc0] sm:$0xff]
      %v2067 = vld [vmem:[#allocation3 + $0xc8] sm:$0xff]
      %v2068 = vld [vmem:[#allocation3 + $0xd0] sm:$0x3]
      %v2069 = vld [vmem:[#allocation3 + $0xd8] sm:$0xff]
      %v2070 = vld [vmem:[#allocation3 + $0xe0] sm:$0xff]
      %v2071 = vld [vmem:[#allocation3 + $0xe8] sm:$0x3]
      %v2072 = vld [vmem:[#allocation3 + $0xf0] sm:$0xff]
      %v2073 = vld [vmem:[#allocation3 + $0xf8] sm:$0xff]
      %v2074 = vld [vmem:[#allocation3 + $0x100] sm:$0x3]
      %v2075 = vld [vmem:[#allocation3 + $0x108] sm:$0xff]
      %v2076 = vld [vmem:[#allocation3 + $0x110] sm:$0xff]
      %v2077 = vld [vmem:[#allocation3 + $0x118] sm:$0x3]
      %v2078 = vld [vmem:[#allocation3 + $0x120] sm:$0xff]
      %v2079 = vld [vmem:[#allocation3 + $0x128] sm:$0xff]
      %v2080 = vld [vmem:[#allocation3 + $0x130] sm:$0x3]
      %v2081 = vld [vmem:[#allocation3 + $0x138] sm:$0xff]
      %v2082 = vld [vmem:[#allocation3 + $0x140] sm:$0xff]
      %v2083 = vld [vmem:[#allocation3 + $0x148] sm:$0x3]
      %v2084 = vld [vmem:[#allocation3 + $0x150] sm:$0xff]
      %v2085 = vld [vmem:[#allocation3 + $0x158] sm:$0xff]
      %v2086 = vld [vmem:[#allocation3 + $0x160] sm:$0x3]
      %v2087 = vld [vmem:[#allocation3 + $0x168] sm:$0xff]
      %v2088 = vld [vmem:[#allocation3 + $0x170] sm:$0xff]
      %v2089 = vld [vmem:[#allocation3 + $0x178] sm:$0x3]
      %v2090 = vld [vmem:[#allocation3 + $0x180] sm:$0xff]
      %v2091 = vld [vmem:[#allocation3 + $0x188] sm:$0xff]
      %v2092 = vld [vmem:[#allocation3 + $0x190] sm:$0x3]
      %v2093 = vld [vmem:[#allocation3 + $0x198] sm:$0xff]
      %v2094 = vld [vmem:[#allocation3 + $0x1a0] sm:$0xff]
      %v2095 = vld [vmem:[#allocation3 + $0x1a8] sm:$0x3]
      %v2144 = vrot.slane %v2042, 1
      %v2145 = vrot.slane %v2043, 1
      %v2146 = vsel %vm448, %v2144, %v2145
      %v2147 = vrot.slane %v2044, 1
      %v2148 = vsel %vm448, %v2145, %v2147
      %v2149 = vrot.slane %v2045, 1
      %v2150 = vrot.slane %v2046, 1
      %v2151 = vsel %vm448, %v2149, %v2150
      %v2152 = vrot.slane %v2047, 1
      %v2153 = vsel %vm448, %v2150, %v2152
      %v2154 = vrot.slane %v2048, 1
      %v2155 = vrot.slane %v2049, 1
      %v2156 = vsel %vm448, %v2154, %v2155
      %v2157 = vrot.slane %v2050, 1
      %v2158 = vsel %vm448, %v2155, %v2157
      %v2159 = vrot.slane %v2051, 1
      %v2160 = vrot.slane %v2052, 1
      %v2161 = vsel %vm448, %v2159, %v2160
      %v2162 = vrot.slane %v2053, 1
      %v2163 = vsel %vm448, %v2160, %v2162
      %v2164 = vrot.slane %v2054, 1
      %v2165 = vrot.slane %v2055, 1
      %v2166 = vsel %vm448, %v2164, %v2165
      %v2167 = vrot.slane %v2056, 1
      %v2168 = vsel %vm448, %v2165, %v2167
      %v2169 = vrot.slane %v2057, 1
      %v2170 = vrot.slane %v2058, 1
      %v2171 = vsel %vm448, %v2169, %v2170
      %v2172 = vrot.slane %v2059, 1
      %v2173 = vsel %vm448, %v2170, %v2172
      %v2174 = vrot.slane %v2060, 1
      %v2175 = vrot.slane %v2061, 1
      %v2176 = vsel %vm448, %v2174, %v2175
      %v2177 = vrot.slane %v2062, 1
      %v2178 = vsel %vm448, %v2175, %v2177
      %v2179 = vrot.slane %v2063, 1
      %v2180 = vrot.slane %v2064, 1
      %v2181 = vsel %vm448, %v2179, %v2180
      %v2182 = vrot.slane %v2065, 1
      %v2183 = vsel %vm448, %v2180, %v2182
      %v2184 = vrot.slane %v2066, 1
      %v2185 = vrot.slane %v2067, 1
      %v2186 = vsel %vm448, %v2184, %v2185
      %v2187 = vrot.slane %v2068, 1
      %v2188 = vsel %vm448, %v2185, %v2187
      %v2189 = vrot.slane %v2069, 1
      %v2190 = vrot.slane %v2070, 1
      %v2191 = vsel %vm448, %v2189, %v2190
      %v2192 = vrot.slane %v2071, 1
      %v2193 = vsel %vm448, %v2190, %v2192
      %v2194 = vrot.slane %v2072, 1
      %v2195 = vrot.slane %v2073, 1
      %v2196 = vsel %vm448, %v2194, %v2195
      %v2197 = vrot.slane %v2074, 1
      %v2198 = vsel %vm448, %v2195, %v2197
      %v2199 = vrot.slane %v2075, 1
      %v2200 = vrot.slane %v2076, 1
      %v2201 = vsel %vm448, %v2199, %v2200
      %v2202 = vrot.slane %v2077, 1
      %v2203 = vsel %vm448, %v2200, %v2202
      %v2204 = vrot.slane %v2078, 1
      %v2205 = vrot.slane %v2079, 1
      %v2206 = vsel %vm448, %v2204, %v2205
      %v2207 = vrot.slane %v2080, 1
      %v2208 = vsel %vm448, %v2205, %v2207
      %v2209 = vrot.slane %v2081, 1
      %v2210 = vrot.slane %v2082, 1
      %v2211 = vsel %vm448, %v2209, %v2210
      %v2212 = vrot.slane %v2083, 1
      %v2213 = vsel %vm448, %v2210, %v2212
      %v2214 = vrot.slane %v2084, 1
      %v2215 = vrot.slane %v2085, 1
      %v2216 = vsel %vm448, %v2214, %v2215
      %v2217 = vrot.slane %v2086, 1
      %v2218 = vsel %vm448, %v2215, %v2217
      %v2219 = vrot.slane %v2087, 1
      %v2220 = vrot.slane %v2088, 1
      %v2221 = vsel %vm448, %v2219, %v2220
      %v2222 = vrot.slane %v2089, 1
      %v2223 = vsel %vm448, %v2220, %v2222
      %2224 = vrot.lane.b32.xlu0 %v2146, 8
      %v2225 = vpop.permute.xlu0 %2224
      %2226 = vrot.lane.b32.xlu0 %v2148, 8
      %v2227 = vpop.permute.xlu0 %2226
      %2228 = vrot.lane.b32.xlu0 %v2151, 8
      %v2229 = vpop.permute.xlu0 %2228
      %2230 = vrot.lane.b32.xlu0 %v2153, 8
      %v2231 = vpop.permute.xlu0 %2230
      %2232 = vrot.lane.b32.xlu0 %v2156, 8
      %v2233 = vpop.permute.xlu0 %2232
      %2234 = vrot.lane.b32.xlu0 %v2158, 8
      %v2235 = vpop.permute.xlu0 %2234
      %2236 = vrot.lane.b32.xlu0 %v2161, 8
      %v2237 = vpop.permute.xlu0 %2236
      %2238 = vrot.lane.b32.xlu0 %v2163, 8
      %v2239 = vpop.permute.xlu0 %2238
      %2240 = vrot.lane.b32.xlu0 %v2166, 8
      %v2241 = vpop.permute.xlu0 %2240
      %2242 = vrot.lane.b32.xlu0 %v2168, 8
      %v2243 = vpop.permute.xlu0 %2242
      %2244 = vrot.lane.b32.xlu0 %v2171, 8
      %v2245 = vpop.permute.xlu0 %2244
      %2246 = vrot.lane.b32.xlu0 %v2173, 8
      %v2247 = vpop.permute.xlu0 %2246
      %2248 = vrot.lane.b32.xlu0 %v2176, 8
      %v2249 = vpop.permute.xlu0 %2248
      %2250 = vrot.lane.b32.xlu0 %v2178, 8
      %v2251 = vpop.permute.xlu0 %2250
      %2252 = vrot.lane.b32.xlu0 %v2181, 8
      %v2253 = vpop.permute.xlu0 %2252
      %2254 = vrot.lane.b32.xlu0 %v2183, 8
      %v2255 = vpop.permute.xlu0 %2254
      %2256 = vrot.lane.b32.xlu0 %v2186, 8
      %v2257 = vpop.permute.xlu0 %2256
      %2258 = vrot.lane.b32.xlu0 %v2188, 8
      %v2259 = vpop.permute.xlu0 %2258
      %2260 = vrot.lane.b32.xlu0 %v2191, 8
      %v2261 = vpop.permute.xlu0 %2260
      %2262 = vrot.lane.b32.xlu0 %v2193, 8
      %v2263 = vpop.permute.xlu0 %2262
      %2264 = vrot.lane.b32.xlu0 %v2196, 8
      %v2265 = vpop.permute.xlu0 %2264
      %2266 = vrot.lane.b32.xlu0 %v2198, 8
      %v2267 = vpop.permute.xlu0 %2266
      %2268 = vrot.lane.b32.xlu0 %v2201, 8
      %v2269 = vpop.permute.xlu0 %2268
      %2270 = vrot.lane.b32.xlu0 %v2203, 8
      %v2271 = vpop.permute.xlu0 %2270
      %2272 = vrot.lane.b32.xlu0 %v2206, 8
      %v2273 = vpop.permute.xlu0 %2272
      %2274 = vrot.lane.b32.xlu0 %v2208, 8
      %v2275 = vpop.permute.xlu0 %2274
      %2276 = vrot.lane.b32.xlu0 %v2211, 8
      %v2277 = vpop.permute.xlu0 %2276
      %2278 = vrot.lane.b32.xlu0 %v2213, 8
      %v2279 = vpop.permute.xlu0 %2278
      %2280 = vrot.lane.b32.xlu0 %v2216, 8
      %v2281 = vpop.permute.xlu0 %2280
      %2282 = vrot.lane.b32.xlu0 %v2218, 8
      %v2283 = vpop.permute.xlu0 %2282
      %2284 = vrot.lane.b32.xlu0 %v2221, 8
      %v2285 = vpop.permute.xlu0 %2284
      %2286 = vrot.lane.b32.xlu0 %v2223, 8
      %v2287 = vpop.permute.xlu0 %2286
      %v2320 = vrot.slane %v2042, 2
      %v2321 = vrot.slane %v2043, 2
      %v2322 = vsel %vm625, %v2320, %v2321
      %v2323 = vrot.slane %v2044, 2
      %v2324 = vsel %vm625, %v2321, %v2323
      %v2325 = vrot.slane %v2045, 2
      %v2326 = vrot.slane %v2046, 2
      %v2327 = vsel %vm625, %v2325, %v2326
      %v2328 = vrot.slane %v2047, 2
      %v2329 = vsel %vm625, %v2326, %v2328
      %v2330 = vrot.slane %v2048, 2
      %v2331 = vrot.slane %v2049, 2
      %v2332 = vsel %vm625, %v2330, %v2331
      %v2333 = vrot.slane %v2050, 2
      %v2334 = vsel %vm625, %v2331, %v2333
      %v2335 = vrot.slane %v2051, 2
      %v2336 = vrot.slane %v2052, 2
      %v2337 = vsel %vm625, %v2335, %v2336
      %v2338 = vrot.slane %v2053, 2
      %v2339 = vsel %vm625, %v2336, %v2338
      %v2340 = vrot.slane %v2054, 2
      %v2341 = vrot.slane %v2055, 2
      %v2342 = vsel %vm625, %v2340, %v2341
      %v2343 = vrot.slane %v2056, 2
      %v2344 = vsel %vm625, %v2341, %v2343
      %v2345 = vrot.slane %v2057, 2
      %v2346 = vrot.slane %v2058, 2
      %v2347 = vsel %vm625, %v2345, %v2346
      %v2348 = vrot.slane %v2059, 2
      %v2349 = vsel %vm625, %v2346, %v2348
      %v2350 = vrot.slane %v2060, 2
      %v2351 = vrot.slane %v2061, 2
      %v2352 = vsel %vm625, %v2350, %v2351
      %v2353 = vrot.slane %v2062, 2
      %v2354 = vsel %vm625, %v2351, %v2353
      %v2355 = vrot.slane %v2063, 2
      %v2356 = vrot.slane %v2064, 2
      %v2357 = vsel %vm625, %v2355, %v2356
      %v2358 = vrot.slane %v2065, 2
      %v2359 = vsel %vm625, %v2356, %v2358
      %v2360 = vrot.slane %v2066, 2
      %v2361 = vrot.slane %v2067, 2
      %v2362 = vsel %vm625, %v2360, %v2361
      %v2363 = vrot.slane %v2068, 2
      %v2364 = vsel %vm625, %v2361, %v2363
      %v2365 = vrot.slane %v2069, 2
      %v2366 = vrot.slane %v2070, 2
      %v2367 = vsel %vm625, %v2365, %v2366
      %v2368 = vrot.slane %v2071, 2
      %v2369 = vsel %vm625, %v2366, %v2368
      %v2370 = vrot.slane %v2072, 2
      %v2371 = vrot.slane %v2073, 2
      %v2372 = vsel %vm625, %v2370, %v2371
      %v2373 = vrot.slane %v2074, 2
      %v2374 = vsel %vm625, %v2371, %v2373
      %v2375 = vrot.slane %v2075, 2
      %v2376 = vrot.slane %v2076, 2
      %v2377 = vsel %vm625, %v2375, %v2376
      %v2378 = vrot.slane %v2077, 2
      %v2379 = vsel %vm625, %v2376, %v2378
      %v2380 = vrot.slane %v2078, 2
      %v2381 = vrot.slane %v2079, 2
      %v2382 = vsel %vm625, %v2380, %v2381
      %v2383 = vrot.slane %v2080, 2
      %v2384 = vsel %vm625, %v2381, %v2383
      %v2385 = vrot.slane %v2081, 2
      %v2386 = vrot.slane %v2082, 2
      %v2387 = vsel %vm625, %v2385, %v2386
      %v2388 = vrot.slane %v2083, 2
      %v2389 = vsel %vm625, %v2386, %v2388
      %v2390 = vrot.slane %v2084, 2
      %v2391 = vrot.slane %v2085, 2
      %v2392 = vsel %vm625, %v2390, %v2391
      %v2393 = vrot.slane %v2086, 2
      %v2394 = vsel %vm625, %v2391, %v2393
      %v2395 = vrot.slane %v2087, 2
      %v2396 = vrot.slane %v2088, 2
      %v2397 = vsel %vm625, %v2395, %v2396
      %v2398 = vrot.slane %v2089, 2
      %v2399 = vsel %vm625, %v2396, %v2398
      %2400 = vrot.lane.b32.xlu0 %v2322, 16
      %v2401 = vpop.permute.xlu0 %2400
      %2402 = vrot.lane.b32.xlu0 %v2324, 16
      %v2403 = vpop.permute.xlu0 %2402
      %2404 = vrot.lane.b32.xlu0 %v2327, 16
      %v2405 = vpop.permute.xlu0 %2404
      %2406 = vrot.lane.b32.xlu0 %v2329, 16
      %v2407 = vpop.permute.xlu0 %2406
      %2408 = vrot.lane.b32.xlu0 %v2332, 16
      %v2409 = vpop.permute.xlu0 %2408
      %2410 = vrot.lane.b32.xlu0 %v2334, 16
      %v2411 = vpop.permute.xlu0 %2410
      %2412 = vrot.lane.b32.xlu0 %v2337, 16
      %v2413 = vpop.permute.xlu0 %2412
      %2414 = vrot.lane.b32.xlu0 %v2339, 16
      %v2415 = vpop.permute.xlu0 %2414
      %2416 = vrot.lane.b32.xlu0 %v2342, 16
      %v2417 = vpop.permute.xlu0 %2416
      %2418 = vrot.lane.b32.xlu0 %v2344, 16
      %v2419 = vpop.permute.xlu0 %2418
      %2420 = vrot.lane.b32.xlu0 %v2347, 16
      %v2421 = vpop.permute.xlu0 %2420
      %2422 = vrot.lane.b32.xlu0 %v2349, 16
      %v2423 = vpop.permute.xlu0 %2422
      %2424 = vrot.lane.b32.xlu0 %v2352, 16
      %v2425 = vpop.permute.xlu0 %2424
      %2426 = vrot.lane.b32.xlu0 %v2354, 16
      %v2427 = vpop.permute.xlu0 %2426
      %2428 = vrot.lane.b32.xlu0 %v2357, 16
      %v2429 = vpop.permute.xlu0 %2428
      %2430 = vrot.lane.b32.xlu0 %v2359, 16
      %v2431 = vpop.permute.xlu0 %2430
      %2432 = vrot.lane.b32.xlu0 %v2362, 16
      %v2433 = vpop.permute.xlu0 %2432
      %2434 = vrot.lane.b32.xlu0 %v2364, 16
      %v2435 = vpop.permute.xlu0 %2434
      %2436 = vrot.lane.b32.xlu0 %v2367, 16
      %v2437 = vpop.permute.xlu0 %2436
      %2438 = vrot.lane.b32.xlu0 %v2369, 16
      %v2439 = vpop.permute.xlu0 %2438
      %2440 = vrot.lane.b32.xlu0 %v2372, 16
      %v2441 = vpop.permute.xlu0 %2440
      %2442 = vrot.lane.b32.xlu0 %v2374, 16
      %v2443 = vpop.permute.xlu0 %2442
      %2444 = vrot.lane.b32.xlu0 %v2377, 16
      %v2445 = vpop.permute.xlu0 %2444
      %2446 = vrot.lane.b32.xlu0 %v2379, 16
      %v2447 = vpop.permute.xlu0 %2446
      %2448 = vrot.lane.b32.xlu0 %v2382, 16
      %v2449 = vpop.permute.xlu0 %2448
      %2450 = vrot.lane.b32.xlu0 %v2384, 16
      %v2451 = vpop.permute.xlu0 %2450
      %2452 = vrot.lane.b32.xlu0 %v2387, 16
      %v2453 = vpop.permute.xlu0 %2452
      %2454 = vrot.lane.b32.xlu0 %v2389, 16
      %v2455 = vpop.permute.xlu0 %2454
      %2456 = vrot.lane.b32.xlu0 %v2392, 16
      %v2457 = vpop.permute.xlu0 %2456
      %2458 = vrot.lane.b32.xlu0 %v2394, 16
      %v2459 = vpop.permute.xlu0 %2458
      %2460 = vrot.lane.b32.xlu0 %v2397, 16
      %v2461 = vpop.permute.xlu0 %2460
      %2462 = vrot.lane.b32.xlu0 %v2399, 16
      %v2463 = vpop.permute.xlu0 %2462
      %2498 = vrot.lane.b32.xlu0 %v2045, 24
      %v2499 = vpop.permute.xlu0 %2498
      %2500 = vrot.lane.b32.xlu0 %v2046, 24
      %v2501 = vpop.permute.xlu0 %2500
      %2502 = vrot.lane.b32.xlu0 %v2048, 24
      %v2503 = vpop.permute.xlu0 %2502
      %2504 = vrot.lane.b32.xlu0 %v2049, 24
      %v2505 = vpop.permute.xlu0 %2504
      %2506 = vrot.lane.b32.xlu0 %v2051, 24
      %v2507 = vpop.permute.xlu0 %2506
      %2508 = vrot.lane.b32.xlu0 %v2052, 24
      %v2509 = vpop.permute.xlu0 %2508
      %2510 = vrot.lane.b32.xlu0 %v2054, 24
      %v2511 = vpop.permute.xlu0 %2510
      %2512 = vrot.lane.b32.xlu0 %v2055, 24
      %v2513 = vpop.permute.xlu0 %2512
      %2514 = vrot.lane.b32.xlu0 %v2057, 24
      %v2515 = vpop.permute.xlu0 %2514
      %2516 = vrot.lane.b32.xlu0 %v2058, 24
      %v2517 = vpop.permute.xlu0 %2516
      %2518 = vrot.lane.b32.xlu0 %v2060, 24
      %v2519 = vpop.permute.xlu0 %2518
      %2520 = vrot.lane.b32.xlu0 %v2061, 24
      %v2521 = vpop.permute.xlu0 %2520
      %2522 = vrot.lane.b32.xlu0 %v2063, 24
      %v2523 = vpop.permute.xlu0 %2522
      %2524 = vrot.lane.b32.xlu0 %v2064, 24
      %v2525 = vpop.permute.xlu0 %2524
      %2526 = vrot.lane.b32.xlu0 %v2066, 24
      %v2527 = vpop.permute.xlu0 %2526
      %2528 = vrot.lane.b32.xlu0 %v2067, 24
      %v2529 = vpop.permute.xlu0 %2528
      %2530 = vrot.lane.b32.xlu0 %v2069, 24
      %v2531 = vpop.permute.xlu0 %2530
      %2532 = vrot.lane.b32.xlu0 %v2070, 24
      %v2533 = vpop.permute.xlu0 %2532
      %2534 = vrot.lane.b32.xlu0 %v2072, 24
      %v2535 = vpop.permute.xlu0 %2534
      %2536 = vrot.lane.b32.xlu0 %v2073, 24
      %v2537 = vpop.permute.xlu0 %2536
      %2538 = vrot.lane.b32.xlu0 %v2075, 24
      %v2539 = vpop.permute.xlu0 %2538
      %2540 = vrot.lane.b32.xlu0 %v2076, 24
      %v2541 = vpop.permute.xlu0 %2540
      %2542 = vrot.lane.b32.xlu0 %v2078, 24
      %v2543 = vpop.permute.xlu0 %2542
      %2544 = vrot.lane.b32.xlu0 %v2079, 24
      %v2545 = vpop.permute.xlu0 %2544
      %2546 = vrot.lane.b32.xlu0 %v2081, 24
      %v2547 = vpop.permute.xlu0 %2546
      %2548 = vrot.lane.b32.xlu0 %v2082, 24
      %v2549 = vpop.permute.xlu0 %2548
      %2550 = vrot.lane.b32.xlu0 %v2084, 24
      %v2551 = vpop.permute.xlu0 %2550
      %2552 = vrot.lane.b32.xlu0 %v2085, 24
      %v2553 = vpop.permute.xlu0 %2552
      %2554 = vrot.lane.b32.xlu0 %v2087, 24
      %v2555 = vpop.permute.xlu0 %2554
      %2556 = vrot.lane.b32.xlu0 %v2088, 24
      %v2557 = vpop.permute.xlu0 %2556
      %2558 = vrot.lane.b32.xlu0 %v2090, 24
      %v2559 = vpop.permute.xlu0 %2558
      %2560 = vrot.lane.b32.xlu0 %v2091, 24
      %v2561 = vpop.permute.xlu0 %2560
      %v2595 = vrot.slane %v2090, 1
      %v2596 = vrot.slane %v2091, 1
      %v2597 = vsel %vm448, %v2595, %v2596
      %v2598 = vrot.slane %v2092, 1
      %v2599 = vsel %vm448, %v2596, %v2598
      %2600 = vrot.lane.b32.xlu0 %v2151, 32
      %v2601 = vpop.permute.xlu0 %2600
      %2602 = vrot.lane.b32.xlu0 %v2153, 32
      %v2603 = vpop.permute.xlu0 %2602
      %2604 = vrot.lane.b32.xlu0 %v2156, 32
      %v2605 = vpop.permute.xlu0 %2604
      %2606 = vrot.lane.b32.xlu0 %v2158, 32
      %v2607 = vpop.permute.xlu0 %2606
      %2608 = vrot.lane.b32.xlu0 %v2161, 32
      %v2609 = vpop.permute.xlu0 %2608
      %2610 = vrot.lane.b32.xlu0 %v2163, 32
      %v2611 = vpop.permute.xlu0 %2610
      %2612 = vrot.lane.b32.xlu0 %v2166, 32
      %v2613 = vpop.permute.xlu0 %2612
      %2614 = vrot.lane.b32.xlu0 %v2168, 32
      %v2615 = vpop.permute.xlu0 %2614
      %2616 = vrot.lane.b32.xlu0 %v2171, 32
      %v2617 = vpop.permute.xlu0 %2616
      %2618 = vrot.lane.b32.xlu0 %v2173, 32
      %v2619 = vpop.permute.xlu0 %2618
      %2620 = vrot.lane.b32.xlu0 %v2176, 32
      %v2621 = vpop.permute.xlu0 %2620
      %2622 = vrot.lane.b32.xlu0 %v2178, 32
      %v2623 = vpop.permute.xlu0 %2622
      %2624 = vrot.lane.b32.xlu0 %v2181, 32
      %v2625 = vpop.permute.xlu0 %2624
      %2626 = vrot.lane.b32.xlu0 %v2183, 32
      %v2627 = vpop.permute.xlu0 %2626
      %2628 = vrot.lane.b32.xlu0 %v2186, 32
      %v2629 = vpop.permute.xlu0 %2628
      %2630 = vrot.lane.b32.xlu0 %v2188, 32
      %v2631 = vpop.permute.xlu0 %2630
      %2632 = vrot.lane.b32.xlu0 %v2191, 32
      %v2633 = vpop.permute.xlu0 %2632
      %2634 = vrot.lane.b32.xlu0 %v2193, 32
      %v2635 = vpop.permute.xlu0 %2634
      %2636 = vrot.lane.b32.xlu0 %v2196, 32
      %v2637 = vpop.permute.xlu0 %2636
      %2638 = vrot.lane.b32.xlu0 %v2198, 32
      %v2639 = vpop.permute.xlu0 %2638
      %2640 = vrot.lane.b32.xlu0 %v2201, 32
      %v2641 = vpop.permute.xlu0 %2640
      %2642 = vrot.lane.b32.xlu0 %v2203, 32
      %v2643 = vpop.permute.xlu0 %2642
      %2644 = vrot.lane.b32.xlu0 %v2206, 32
      %v2645 = vpop.permute.xlu0 %2644
      %2646 = vrot.lane.b32.xlu0 %v2208, 32
      %v2647 = vpop.permute.xlu0 %2646
      %2648 = vrot.lane.b32.xlu0 %v2211, 32
      %v2649 = vpop.permute.xlu0 %2648
      %2650 = vrot.lane.b32.xlu0 %v2213, 32
      %v2651 = vpop.permute.xlu0 %2650
      %2652 = vrot.lane.b32.xlu0 %v2216, 32
      %v2653 = vpop.permute.xlu0 %2652
      %2654 = vrot.lane.b32.xlu0 %v2218, 32
      %v2655 = vpop.permute.xlu0 %2654
      %2656 = vrot.lane.b32.xlu0 %v2221, 32
      %v2657 = vpop.permute.xlu0 %2656
      %2658 = vrot.lane.b32.xlu0 %v2223, 32
      %v2659 = vpop.permute.xlu0 %2658
      %2660 = vrot.lane.b32.xlu0 %v2597, 32
      %v2661 = vpop.permute.xlu0 %2660
      %2662 = vrot.lane.b32.xlu0 %v2599, 32
      %v2663 = vpop.permute.xlu0 %2662
      %v2696 = vrot.slane %v2090, 2
      %v2697 = vrot.slane %v2091, 2
      %v2698 = vsel %vm625, %v2696, %v2697
      %v2699 = vrot.slane %v2092, 2
      %v2700 = vsel %vm625, %v2697, %v2699
      %2701 = vrot.lane.b32.xlu0 %v2327, 40
      %v2702 = vpop.permute.xlu0 %2701
      %2703 = vrot.lane.b32.xlu0 %v2329, 40
      %v2704 = vpop.permute.xlu0 %2703
      %2705 = vrot.lane.b32.xlu0 %v2332, 40
      %v2706 = vpop.permute.xlu0 %2705
      %2707 = vrot.lane.b32.xlu0 %v2334, 40
      %v2708 = vpop.permute.xlu0 %2707
      %2709 = vrot.lane.b32.xlu0 %v2337, 40
      %v2710 = vpop.permute.xlu0 %2709
      %2711 = vrot.lane.b32.xlu0 %v2339, 40
      %v2712 = vpop.permute.xlu0 %2711
      %2713 = vrot.lane.b32.xlu0 %v2342, 40
      %v2714 = vpop.permute.xlu0 %2713
      %2715 = vrot.lane.b32.xlu0 %v2344, 40
      %v2716 = vpop.permute.xlu0 %2715
      %2717 = vrot.lane.b32.xlu0 %v2347, 40
      %v2718 = vpop.permute.xlu0 %2717
      %2719 = vrot.lane.b32.xlu0 %v2349, 40
      %v2720 = vpop.permute.xlu0 %2719
      %2721 = vrot.lane.b32.xlu0 %v2352, 40
      %v2722 = vpop.permute.xlu0 %2721
      %2723 = vrot.lane.b32.xlu0 %v2354, 40
      %v2724 = vpop.permute.xlu0 %2723
      %2725 = vrot.lane.b32.xlu0 %v2357, 40
      %v2726 = vpop.permute.xlu0 %2725
      %2727 = vrot.lane.b32.xlu0 %v2359, 40
      %v2728 = vpop.permute.xlu0 %2727
      %2729 = vrot.lane.b32.xlu0 %v2362, 40
      %v2730 = vpop.permute.xlu0 %2729
      %2731 = vrot.lane.b32.xlu0 %v2364, 40
      %v2732 = vpop.permute.xlu0 %2731
      %2733 = vrot.lane.b32.xlu0 %v2367, 40
      %v2734 = vpop.permute.xlu0 %2733
      %2735 = vrot.lane.b32.xlu0 %v2369, 40
      %v2736 = vpop.permute.xlu0 %2735
      %2737 = vrot.lane.b32.xlu0 %v2372, 40
      %v2738 = vpop.permute.xlu0 %2737
      %2739 = vrot.lane.b32.xlu0 %v2374, 40
      %v2740 = vpop.permute.xlu0 %2739
      %2741 = vrot.lane.b32.xlu0 %v2377, 40
      %v2742 = vpop.permute.xlu0 %2741
      %2743 = vrot.lane.b32.xlu0 %v2379, 40
      %v2744 = vpop.permute.xlu0 %2743
      %2745 = vrot.lane.b32.xlu0 %v2382, 40
      %v2746 = vpop.permute.xlu0 %2745
      %2747 = vrot.lane.b32.xlu0 %v2384, 40
      %v2748 = vpop.permute.xlu0 %2747
      %2749 = vrot.lane.b32.xlu0 %v2387, 40
      %v2750 = vpop.permute.xlu0 %2749
      %2751 = vrot.lane.b32.xlu0 %v2389, 40
      %v2752 = vpop.permute.xlu0 %2751
      %2753 = vrot.lane.b32.xlu0 %v2392, 40
      %v2754 = vpop.permute.xlu0 %2753
      %2755 = vrot.lane.b32.xlu0 %v2394, 40
      %v2756 = vpop.permute.xlu0 %2755
      %2757 = vrot.lane.b32.xlu0 %v2397, 40
      %v2758 = vpop.permute.xlu0 %2757
      %2759 = vrot.lane.b32.xlu0 %v2399, 40
      %v2760 = vpop.permute.xlu0 %2759
      %2761 = vrot.lane.b32.xlu0 %v2698, 40
      %v2762 = vpop.permute.xlu0 %2761
      %2763 = vrot.lane.b32.xlu0 %v2700, 40
      %v2764 = vpop.permute.xlu0 %2763
      %2799 = vrot.lane.b32.xlu0 %v2048, 48
      %v2800 = vpop.permute.xlu0 %2799
      %2801 = vrot.lane.b32.xlu0 %v2049, 48
      %v2802 = vpop.permute.xlu0 %2801
      %2803 = vrot.lane.b32.xlu0 %v2051, 48
      %v2804 = vpop.permute.xlu0 %2803
      %2805 = vrot.lane.b32.xlu0 %v2052, 48
      %v2806 = vpop.permute.xlu0 %2805
      %2807 = vrot.lane.b32.xlu0 %v2054, 48
      %v2808 = vpop.permute.xlu0 %2807
      %2809 = vrot.lane.b32.xlu0 %v2055, 48
      %v2810 = vpop.permute.xlu0 %2809
      %2811 = vrot.lane.b32.xlu0 %v2057, 48
      %v2812 = vpop.permute.xlu0 %2811
      %2813 = vrot.lane.b32.xlu0 %v2058, 48
      %v2814 = vpop.permute.xlu0 %2813
      %2815 = vrot.lane.b32.xlu0 %v2060, 48
      %v2816 = vpop.permute.xlu0 %2815
      %2817 = vrot.lane.b32.xlu0 %v2061, 48
      %v2818 = vpop.permute.xlu0 %2817
      %2819 = vrot.lane.b32.xlu0 %v2063, 48
      %v2820 = vpop.permute.xlu0 %2819
      %2821 = vrot.lane.b32.xlu0 %v2064, 48
      %v2822 = vpop.permute.xlu0 %2821
      %2823 = vrot.lane.b32.xlu0 %v2066, 48
      %v2824 = vpop.permute.xlu0 %2823
      %2825 = vrot.lane.b32.xlu0 %v2067, 48
      %v2826 = vpop.permute.xlu0 %2825
      %2827 = vrot.lane.b32.xlu0 %v2069, 48
      %v2828 = vpop.permute.xlu0 %2827
      %2829 = vrot.lane.b32.xlu0 %v2070, 48
      %v2830 = vpop.permute.xlu0 %2829
      %2831 = vrot.lane.b32.xlu0 %v2072, 48
      %v2832 = vpop.permute.xlu0 %2831
      %2833 = vrot.lane.b32.xlu0 %v2073, 48
      %v2834 = vpop.permute.xlu0 %2833
      %2835 = vrot.lane.b32.xlu0 %v2075, 48
      %v2836 = vpop.permute.xlu0 %2835
      %2837 = vrot.lane.b32.xlu0 %v2076, 48
      %v2838 = vpop.permute.xlu0 %2837
      %2839 = vrot.lane.b32.xlu0 %v2078, 48
      %v2840 = vpop.permute.xlu0 %2839
      %2841 = vrot.lane.b32.xlu0 %v2079, 48
      %v2842 = vpop.permute.xlu0 %2841
      %2843 = vrot.lane.b32.xlu0 %v2081, 48
      %v2844 = vpop.permute.xlu0 %2843
      %2845 = vrot.lane.b32.xlu0 %v2082, 48
      %v2846 = vpop.permute.xlu0 %2845
      %2847 = vrot.lane.b32.xlu0 %v2084, 48
      %v2848 = vpop.permute.xlu0 %2847
      %2849 = vrot.lane.b32.xlu0 %v2085, 48
      %v2850 = vpop.permute.xlu0 %2849
      %2851 = vrot.lane.b32.xlu0 %v2087, 48
      %v2852 = vpop.permute.xlu0 %2851
      %2853 = vrot.lane.b32.xlu0 %v2088, 48
      %v2854 = vpop.permute.xlu0 %2853
      %2855 = vrot.lane.b32.xlu0 %v2090, 48
      %v2856 = vpop.permute.xlu0 %2855
      %2857 = vrot.lane.b32.xlu0 %v2091, 48
      %v2858 = vpop.permute.xlu0 %2857
      %2859 = vrot.lane.b32.xlu0 %v2093, 48
      %v2860 = vpop.permute.xlu0 %2859
      %2861 = vrot.lane.b32.xlu0 %v2094, 48
      %v2862 = vpop.permute.xlu0 %2861
      %v2896 = vrot.slane %v2093, 1
      %v2897 = vrot.slane %v2094, 1
      %v2898 = vsel %vm448, %v2896, %v2897
      %v2899 = vrot.slane %v2095, 1
      %v2900 = vsel %vm448, %v2897, %v2899
      %2901 = vrot.lane.b32.xlu0 %v2156, 56
      %v2902 = vpop.permute.xlu0 %2901
      %2903 = vrot.lane.b32.xlu0 %v2158, 56
      %v2904 = vpop.permute.xlu0 %2903
      %2905 = vrot.lane.b32.xlu0 %v2161, 56
      %v2906 = vpop.permute.xlu0 %2905
      %2907 = vrot.lane.b32.xlu0 %v2163, 56
      %v2908 = vpop.permute.xlu0 %2907
      %2909 = vrot.lane.b32.xlu0 %v2166, 56
      %v2910 = vpop.permute.xlu0 %2909
      %2911 = vrot.lane.b32.xlu0 %v2168, 56
      %v2912 = vpop.permute.xlu0 %2911
      %2913 = vrot.lane.b32.xlu0 %v2171, 56
      %v2914 = vpop.permute.xlu0 %2913
      %2915 = vrot.lane.b32.xlu0 %v2173, 56
      %v2916 = vpop.permute.xlu0 %2915
      %2917 = vrot.lane.b32.xlu0 %v2176, 56
      %v2918 = vpop.permute.xlu0 %2917
      %2919 = vrot.lane.b32.xlu0 %v2178, 56
      %v2920 = vpop.permute.xlu0 %2919
      %2921 = vrot.lane.b32.xlu0 %v2181, 56
      %v2922 = vpop.permute.xlu0 %2921
      %2923 = vrot.lane.b32.xlu0 %v2183, 56
      %v2924 = vpop.permute.xlu0 %2923
      %2925 = vrot.lane.b32.xlu0 %v2186, 56
      %v2926 = vpop.permute.xlu0 %2925
      %2927 = vrot.lane.b32.xlu0 %v2188, 56
      %v2928 = vpop.permute.xlu0 %2927
      %2929 = vrot.lane.b32.xlu0 %v2191, 56
      %v2930 = vpop.permute.xlu0 %2929
      %2931 = vrot.lane.b32.xlu0 %v2193, 56
      %v2932 = vpop.permute.xlu0 %2931
      %2933 = vrot.lane.b32.xlu0 %v2196, 56
      %v2934 = vpop.permute.xlu0 %2933
      %2935 = vrot.lane.b32.xlu0 %v2198, 56
      %v2936 = vpop.permute.xlu0 %2935
      %2937 = vrot.lane.b32.xlu0 %v2201, 56
      %v2938 = vpop.permute.xlu0 %2937
      %2939 = vrot.lane.b32.xlu0 %v2203, 56
      %v2940 = vpop.permute.xlu0 %2939
      %2941 = vrot.lane.b32.xlu0 %v2206, 56
      %v2942 = vpop.permute.xlu0 %2941
      %2943 = vrot.lane.b32.xlu0 %v2208, 56
      %v2944 = vpop.permute.xlu0 %2943
      %2945 = vrot.lane.b32.xlu0 %v2211, 56
      %v2946 = vpop.permute.xlu0 %2945
      %2947 = vrot.lane.b32.xlu0 %v2213, 56
      %v2948 = vpop.permute.xlu0 %2947
      %2949 = vrot.lane.b32.xlu0 %v2216, 56
      %v2950 = vpop.permute.xlu0 %2949
      %2951 = vrot.lane.b32.xlu0 %v2218, 56
      %v2952 = vpop.permute.xlu0 %2951
      %2953 = vrot.lane.b32.xlu0 %v2221, 56
      %v2954 = vpop.permute.xlu0 %2953
      %2955 = vrot.lane.b32.xlu0 %v2223, 56
      %v2956 = vpop.permute.xlu0 %2955
      %2957 = vrot.lane.b32.xlu0 %v2597, 56
      %v2958 = vpop.permute.xlu0 %2957
      %2959 = vrot.lane.b32.xlu0 %v2599, 56
      %v2960 = vpop.permute.xlu0 %2959
      %2961 = vrot.lane.b32.xlu0 %v2898, 56
      %v2962 = vpop.permute.xlu0 %2961
      %2963 = vrot.lane.b32.xlu0 %v2900, 56
      %v2964 = vpop.permute.xlu0 %2963
      %v2997 = vrot.slane %v2093, 2
      %v2998 = vrot.slane %v2094, 2
      %v2999 = vsel %vm625, %v2997, %v2998
      %v3000 = vrot.slane %v2095, 2
      %v3001 = vsel %vm625, %v2998, %v3000
      %3002 = vrot.lane.b32.xlu0 %v2332, 64
      %v3003 = vpop.permute.xlu0 %3002
      %3004 = vrot.lane.b32.xlu0 %v2334, 64
      %v3005 = vpop.permute.xlu0 %3004
      %3006 = vrot.lane.b32.xlu0 %v2337, 64
      %v3007 = vpop.permute.xlu0 %3006
      %3008 = vrot.lane.b32.xlu0 %v2339, 64
      %v3009 = vpop.permute.xlu0 %3008
      %3010 = vrot.lane.b32.xlu0 %v2342, 64
      %v3011 = vpop.permute.xlu0 %3010
      %3012 = vrot.lane.b32.xlu0 %v2344, 64
      %v3013 = vpop.permute.xlu0 %3012
      %3014 = vrot.lane.b32.xlu0 %v2347, 64
      %v3015 = vpop.permute.xlu0 %3014
      %3016 = vrot.lane.b32.xlu0 %v2349, 64
      %v3017 = vpop.permute.xlu0 %3016
      %3018 = vrot.lane.b32.xlu0 %v2352, 64
      %v3019 = vpop.permute.xlu0 %3018
      %3020 = vrot.lane.b32.xlu0 %v2354, 64
      %v3021 = vpop.permute.xlu0 %3020
      %3022 = vrot.lane.b32.xlu0 %v2357, 64
      %v3023 = vpop.permute.xlu0 %3022
      %3024 = vrot.lane.b32.xlu0 %v2359, 64
      %v3025 = vpop.permute.xlu0 %3024
      %3026 = vrot.lane.b32.xlu0 %v2362, 64
      %v3027 = vpop.permute.xlu0 %3026
      %3028 = vrot.lane.b32.xlu0 %v2364, 64
      %v3029 = vpop.permute.xlu0 %3028
      %3030 = vrot.lane.b32.xlu0 %v2367, 64
      %v3031 = vpop.permute.xlu0 %3030
      %3032 = vrot.lane.b32.xlu0 %v2369, 64
      %v3033 = vpop.permute.xlu0 %3032
      %3034 = vrot.lane.b32.xlu0 %v2372, 64
      %v3035 = vpop.permute.xlu0 %3034
      %3036 = vrot.lane.b32.xlu0 %v2374, 64
      %v3037 = vpop.permute.xlu0 %3036
      %3038 = vrot.lane.b32.xlu0 %v2377, 64
      %v3039 = vpop.permute.xlu0 %3038
      %3040 = vrot.lane.b32.xlu0 %v2379, 64
      %v3041 = vpop.permute.xlu0 %3040
      %3042 = vrot.lane.b32.xlu0 %v2382, 64
      %v3043 = vpop.permute.xlu0 %3042
      %3044 = vrot.lane.b32.xlu0 %v2384, 64
      %v3045 = vpop.permute.xlu0 %3044
      %3046 = vrot.lane.b32.xlu0 %v2387, 64
      %v3047 = vpop.permute.xlu0 %3046
      %3048 = vrot.lane.b32.xlu0 %v2389, 64
      %v3049 = vpop.permute.xlu0 %3048
      %3050 = vrot.lane.b32.xlu0 %v2392, 64
      %v3051 = vpop.permute.xlu0 %3050
      %3052 = vrot.lane.b32.xlu0 %v2394, 64
      %v3053 = vpop.permute.xlu0 %3052
      %3054 = vrot.lane.b32.xlu0 %v2397, 64
      %v3055 = vpop.permute.xlu0 %3054
      %3056 = vrot.lane.b32.xlu0 %v2399, 64
      %v3057 = vpop.permute.xlu0 %3056
      %3058 = vrot.lane.b32.xlu0 %v2698, 64
      %v3059 = vpop.permute.xlu0 %3058
      %3060 = vrot.lane.b32.xlu0 %v2700, 64
      %v3061 = vpop.permute.xlu0 %3060
      %3062 = vrot.lane.b32.xlu0 %v2999, 64
      %v3063 = vpop.permute.xlu0 %3062
      %3064 = vrot.lane.b32.xlu0 %v3001, 64
      %v3065 = vpop.permute.xlu0 %3064
      %v3098 = vsel %vm1436, %v2042, %v2225
      %v3099 = vsel %vm1436, %v2043, %v2227
      %v3100 = vsel %vm1436, %v2045, %v2229
      %v3101 = vsel %vm1436, %v2046, %v2231
      %v3102 = vsel %vm1436, %v2048, %v2233
      %v3103 = vsel %vm1436, %v2049, %v2235
      %v3104 = vsel %vm1436, %v2051, %v2237
      %v3105 = vsel %vm1436, %v2052, %v2239
      %v3106 = vsel %vm1436, %v2054, %v2241
      %v3107 = vsel %vm1436, %v2055, %v2243
      %v3108 = vsel %vm1436, %v2057, %v2245
      %v3109 = vsel %vm1436, %v2058, %v2247
      %v3110 = vsel %vm1436, %v2060, %v2249
      %v3111 = vsel %vm1436, %v2061, %v2251
      %v3112 = vsel %vm1436, %v2063, %v2253
      %v3113 = vsel %vm1436, %v2064, %v2255
      %v3114 = vsel %vm1436, %v2066, %v2257
      %v3115 = vsel %vm1436, %v2067, %v2259
      %v3116 = vsel %vm1436, %v2069, %v2261
      %v3117 = vsel %vm1436, %v2070, %v2263
      %v3118 = vsel %vm1436, %v2072, %v2265
      %v3119 = vsel %vm1436, %v2073, %v2267
      %v3120 = vsel %vm1436, %v2075, %v2269
      %v3121 = vsel %vm1436, %v2076, %v2271
      %v3122 = vsel %vm1436, %v2078, %v2273
      %v3123 = vsel %vm1436, %v2079, %v2275
      %v3124 = vsel %vm1436, %v2081, %v2277
      %v3125 = vsel %vm1436, %v2082, %v2279
      %v3126 = vsel %vm1436, %v2084, %v2281
      %v3127 = vsel %vm1436, %v2085, %v2283
      %v3128 = vsel %vm1436, %v2087, %v2285
      %v3129 = vsel %vm1436, %v2088, %v2287
      %v3130 = vsel %vm1502, %v3098, %v2401
      %v3131 = vsel %vm1502, %v3099, %v2403
      %v3132 = vsel %vm1502, %v3100, %v2405
      %v3133 = vsel %vm1502, %v3101, %v2407
      %v3134 = vsel %vm1502, %v3102, %v2409
      %v3135 = vsel %vm1502, %v3103, %v2411
      %v3136 = vsel %vm1502, %v3104, %v2413
      %v3137 = vsel %vm1502, %v3105, %v2415
      %v3138 = vsel %vm1502, %v3106, %v2417
      %v3139 = vsel %vm1502, %v3107, %v2419
      %v3140 = vsel %vm1502, %v3108, %v2421
      %v3141 = vsel %vm1502, %v3109, %v2423
      %v3142 = vsel %vm1502, %v3110, %v2425
      %v3143 = vsel %vm1502, %v3111, %v2427
      %v3144 = vsel %vm1502, %v3112, %v2429
      %v3145 = vsel %vm1502, %v3113, %v2431
      %v3146 = vsel %vm1502, %v3114, %v2433
      %v3147 = vsel %vm1502, %v3115, %v2435
      %v3148 = vsel %vm1502, %v3116, %v2437
      %v3149 = vsel %vm1502, %v3117, %v2439
      %v3150 = vsel %vm1502, %v3118, %v2441
      %v3151 = vsel %vm1502, %v3119, %v2443
      %v3152 = vsel %vm1502, %v3120, %v2445
      %v3153 = vsel %vm1502, %v3121, %v2447
      %v3154 = vsel %vm1502, %v3122, %v2449
      %v3155 = vsel %vm1502, %v3123, %v2451
      %v3156 = vsel %vm1502, %v3124, %v2453
      %v3157 = vsel %vm1502, %v3125, %v2455
      %v3158 = vsel %vm1502, %v3126, %v2457
      %v3159 = vsel %vm1502, %v3127, %v2459
      %v3160 = vsel %vm1502, %v3128, %v2461
      %v3161 = vsel %vm1502, %v3129, %v2463
      %v3162 = vsel %vm1568, %v3130, %v2499
      %v3163 = vsel %vm1568, %v3131, %v2501
      %v3164 = vsel %vm1568, %v3132, %v2503
      %v3165 = vsel %vm1568, %v3133, %v2505
      %v3166 = vsel %vm1568, %v3134, %v2507
      %v3167 = vsel %vm1568, %v3135, %v2509
      %v3168 = vsel %vm1568, %v3136, %v2511
      %v3169 = vsel %vm1568, %v3137, %v2513
      %v3170 = vsel %vm1568, %v3138, %v2515
      %v3171 = vsel %vm1568, %v3139, %v2517
      %v3172 = vsel %vm1568, %v3140, %v2519
      %v3173 = vsel %vm1568, %v3141, %v2521
      %v3174 = vsel %vm1568, %v3142, %v2523
      %v3175 = vsel %vm1568, %v3143, %v2525
      %v3176 = vsel %vm1568, %v3144, %v2527
      %v3177 = vsel %vm1568, %v3145, %v2529
      %v3178 = vsel %vm1568, %v3146, %v2531
      %v3179 = vsel %vm1568, %v3147, %v2533
      %v3180 = vsel %vm1568, %v3148, %v2535
      %v3181 = vsel %vm1568, %v3149, %v2537
      %v3182 = vsel %vm1568, %v3150, %v2539
      %v3183 = vsel %vm1568, %v3151, %v2541
      %v3184 = vsel %vm1568, %v3152, %v2543
      %v3185 = vsel %vm1568, %v3153, %v2545
      %v3186 = vsel %vm1568, %v3154, %v2547
      %v3187 = vsel %vm1568, %v3155, %v2549
      %v3188 = vsel %vm1568, %v3156, %v2551
      %v3189 = vsel %vm1568, %v3157, %v2553
      %v3190 = vsel %vm1568, %v3158, %v2555
      %v3191 = vsel %vm1568, %v3159, %v2557
      %v3192 = vsel %vm1568, %v3160, %v2559
      %v3193 = vsel %vm1568, %v3161, %v2561
      %v3194 = vsel %vm1634, %v3162, %v2601
      %v3195 = vsel %vm1634, %v3163, %v2603
      %v3196 = vsel %vm1634, %v3164, %v2605
      %v3197 = vsel %vm1634, %v3165, %v2607
      %v3198 = vsel %vm1634, %v3166, %v2609
      %v3199 = vsel %vm1634, %v3167, %v2611
      %v3200 = vsel %vm1634, %v3168, %v2613
      %v3201 = vsel %vm1634, %v3169, %v2615
      %v3202 = vsel %vm1634, %v3170, %v2617
      %v3203 = vsel %vm1634, %v3171, %v2619
      %v3204 = vsel %vm1634, %v3172, %v2621
      %v3205 = vsel %vm1634, %v3173, %v2623
      %v3206 = vsel %vm1634, %v3174, %v2625
      %v3207 = vsel %vm1634, %v3175, %v2627
      %v3208 = vsel %vm1634, %v3176, %v2629
      %v3209 = vsel %vm1634, %v3177, %v2631
      %v3210 = vsel %vm1634, %v3178, %v2633
      %v3211 = vsel %vm1634, %v3179, %v2635
      %v3212 = vsel %vm1634, %v3180, %v2637
      %v3213 = vsel %vm1634, %v3181, %v2639
      %v3214 = vsel %vm1634, %v3182, %v2641
      %v3215 = vsel %vm1634, %v3183, %v2643
      %v3216 = vsel %vm1634, %v3184, %v2645
      %v3217 = vsel %vm1634, %v3185, %v2647
      %v3218 = vsel %vm1634, %v3186, %v2649
      %v3219 = vsel %vm1634, %v3187, %v2651
      %v3220 = vsel %vm1634, %v3188, %v2653
      %v3221 = vsel %vm1634, %v3189, %v2655
      %v3222 = vsel %vm1634, %v3190, %v2657
      %v3223 = vsel %vm1634, %v3191, %v2659
      %v3224 = vsel %vm1634, %v3192, %v2661
      %v3225 = vsel %vm1634, %v3193, %v2663
      %vm3226 = vcmask 326656
      %v3227 = vsel %vm3226, %v3194, %v2702
      %v3228 = vsel %vm3226, %v3195, %v2704
      %v3229 = vsel %vm3226, %v3196, %v2706
      %v3230 = vsel %vm3226, %v3197, %v2708
      %v3231 = vsel %vm3226, %v3198, %v2710
      %v3232 = vsel %vm3226, %v3199, %v2712
      %v3233 = vsel %vm3226, %v3200, %v2714
      %v3234 = vsel %vm3226, %v3201, %v2716
      %v3235 = vsel %vm3226, %v3202, %v2718
      %v3236 = vsel %vm3226, %v3203, %v2720
      %v3237 = vsel %vm3226, %v3204, %v2722
      %v3238 = vsel %vm3226, %v3205, %v2724
      %v3239 = vsel %vm3226, %v3206, %v2726
      %v3240 = vsel %vm3226, %v3207, %v2728
      %v3241 = vsel %vm3226, %v3208, %v2730
      %v3242 = vsel %vm3226, %v3209, %v2732
      %v3243 = vsel %vm3226, %v3210, %v2734
      %v3244 = vsel %vm3226, %v3211, %v2736
      %v3245 = vsel %vm3226, %v3212, %v2738
      %v3246 = vsel %vm3226, %v3213, %v2740
      %v3247 = vsel %vm3226, %v3214, %v2742
      %v3248 = vsel %vm3226, %v3215, %v2744
      %v3249 = vsel %vm3226, %v3216, %v2746
      %v3250 = vsel %vm3226, %v3217, %v2748
      %v3251 = vsel %vm3226, %v3218, %v2750
      %v3252 = vsel %vm3226, %v3219, %v2752
      %v3253 = vsel %vm3226, %v3220, %v2754
      %v3254 = vsel %vm3226, %v3221, %v2756
      %v3255 = vsel %vm3226, %v3222, %v2758
      %v3256 = vsel %vm3226, %v3223, %v2760
      %v3257 = vsel %vm3226, %v3224, %v2762
      %v3258 = vsel %vm3226, %v3225, %v2764
      %vm3259 = vcmask 392192
      %v3260 = vsel %vm3259, %v3227, %v2800
      %v3261 = vsel %vm3259, %v3228, %v2802
      %v3262 = vsel %vm3259, %v3229, %v2804
      %v3263 = vsel %vm3259, %v3230, %v2806
      %v3264 = vsel %vm3259, %v3231, %v2808
      %v3265 = vsel %vm3259, %v3232, %v2810
      %v3266 = vsel %vm3259, %v3233, %v2812
      %v3267 = vsel %vm3259, %v3234, %v2814
      %v3268 = vsel %vm3259, %v3235, %v2816
      %v3269 = vsel %vm3259, %v3236, %v2818
      %v3270 = vsel %vm3259, %v3237, %v2820
      %v3271 = vsel %vm3259, %v3238, %v2822
      %v3272 = vsel %vm3259, %v3239, %v2824
      %v3273 = vsel %vm3259, %v3240, %v2826
      %v3274 = vsel %vm3259, %v3241, %v2828
      %v3275 = vsel %vm3259, %v3242, %v2830
      %v3276 = vsel %vm3259, %v3243, %v2832
      %v3277 = vsel %vm3259, %v3244, %v2834
      %v3278 = vsel %vm3259, %v3245, %v2836
      %v3279 = vsel %vm3259, %v3246, %v2838
      %v3280 = vsel %vm3259, %v3247, %v2840
      %v3281 = vsel %vm3259, %v3248, %v2842
      %v3282 = vsel %vm3259, %v3249, %v2844
      %v3283 = vsel %vm3259, %v3250, %v2846
      %v3284 = vsel %vm3259, %v3251, %v2848
      %v3285 = vsel %vm3259, %v3252, %v2850
      %v3286 = vsel %vm3259, %v3253, %v2852
      %v3287 = vsel %vm3259, %v3254, %v2854
      %v3288 = vsel %vm3259, %v3255, %v2856
      %v3289 = vsel %vm3259, %v3256, %v2858
      %v3290 = vsel %vm3259, %v3257, %v2860
      %v3291 = vsel %vm3259, %v3258, %v2862
      %vm3292 = vcmask 457728
      %v3293 = vsel %vm3292, %v3260, %v2902
      %v3294 = vsel %vm3292, %v3261, %v2904
      %v3295 = vsel %vm3292, %v3262, %v2906
      %v3296 = vsel %vm3292, %v3263, %v2908
      %v3297 = vsel %vm3292, %v3264, %v2910
      %v3298 = vsel %vm3292, %v3265, %v2912
      %v3299 = vsel %vm3292, %v3266, %v2914
      %v3300 = vsel %vm3292, %v3267, %v2916
      %v3301 = vsel %vm3292, %v3268, %v2918
      %v3302 = vsel %vm3292, %v3269, %v2920
      %v3303 = vsel %vm3292, %v3270, %v2922
      %v3304 = vsel %vm3292, %v3271, %v2924
      %v3305 = vsel %vm3292, %v3272, %v2926
      %v3306 = vsel %vm3292, %v3273, %v2928
      %v3307 = vsel %vm3292, %v3274, %v2930
      %v3308 = vsel %vm3292, %v3275, %v2932
      %v3309 = vsel %vm3292, %v3276, %v2934
      %v3310 = vsel %vm3292, %v3277, %v2936
      %v3311 = vsel %vm3292, %v3278, %v2938
      %v3312 = vsel %vm3292, %v3279, %v2940
      %v3313 = vsel %vm3292, %v3280, %v2942
      %v3314 = vsel %vm3292, %v3281, %v2944
      %v3315 = vsel %vm3292, %v3282, %v2946
      %v3316 = vsel %vm3292, %v3283, %v2948
      %v3317 = vsel %vm3292, %v3284, %v2950
      %v3318 = vsel %vm3292, %v3285, %v2952
      %v3319 = vsel %vm3292, %v3286, %v2954
      %v3320 = vsel %vm3292, %v3287, %v2956
      %v3321 = vsel %vm3292, %v3288, %v2958
      %v3322 = vsel %vm3292, %v3289, %v2960
      %v3323 = vsel %vm3292, %v3290, %v2962
      %v3324 = vsel %vm3292, %v3291, %v2964
      %vm3325 = vcmask 523264
      %v3326 = vsel %vm3325, %v3293, %v3003
      %v3327 = vsel %vm3325, %v3294, %v3005
      %v3328 = vsel %vm3325, %v3295, %v3007
      %v3329 = vsel %vm3325, %v3296, %v3009
      %v3330 = vsel %vm3325, %v3297, %v3011
      %v3331 = vsel %vm3325, %v3298, %v3013
      %v3332 = vsel %vm3325, %v3299, %v3015
      %v3333 = vsel %vm3325, %v3300, %v3017
      %v3334 = vsel %vm3325, %v3301, %v3019
      %v3335 = vsel %vm3325, %v3302, %v3021
      %v3336 = vsel %vm3325, %v3303, %v3023
      %v3337 = vsel %vm3325, %v3304, %v3025
      %v3338 = vsel %vm3325, %v3305, %v3027
      %v3339 = vsel %vm3325, %v3306, %v3029
      %v3340 = vsel %vm3325, %v3307, %v3031
      %v3341 = vsel %vm3325, %v3308, %v3033
      %v3342 = vsel %vm3325, %v3309, %v3035
      %v3343 = vsel %vm3325, %v3310, %v3037
      %v3344 = vsel %vm3325, %v3311, %v3039
      %v3345 = vsel %vm3325, %v3312, %v3041
      %v3346 = vsel %vm3325, %v3313, %v3043
      %v3347 = vsel %vm3325, %v3314, %v3045
      %v3348 = vsel %vm3325, %v3315, %v3047
      %v3349 = vsel %vm3325, %v3316, %v3049
      %v3350 = vsel %vm3325, %v3317, %v3051
      %v3351 = vsel %vm3325, %v3318, %v3053
      %v3352 = vsel %vm3325, %v3319, %v3055
      %v3353 = vsel %vm3325, %v3320, %v3057
      %v3354 = vsel %vm3325, %v3321, %v3059
      %v3355 = vsel %vm3325, %v3322, %v3061
      %v3356 = vsel %vm3325, %v3323, %v3063
      %v3357 = vsel %vm3325, %v3324, %v3065
      %v3358 = vld [vmem:[%s3] sm:$0xff]
      %v3359 = vld [vmem:[%s3 + $0x8] sm:$0xff]
      %v3360 = vld [vmem:[%s3 + $0x10] sm:$0xff]
      %v3361 = vld [vmem:[%s3 + $0x18] sm:$0xff]
      %v3362 = vld [vmem:[%s3 + $0x20] sm:$0xff]
      %v3363 = vld [vmem:[%s3 + $0x28] sm:$0xff]
      %v3364 = vld [vmem:[%s3 + $0x30] sm:$0xff]
      %v3365 = vld [vmem:[%s3 + $0x38] sm:$0xff]
      %v3366 = vld [vmem:[%s3 + $0x40] sm:$0xff]
      %v3367 = vld [vmem:[%s4] sm:$0x1]
      %v3369 = vperm.slane %v3367, 0
      %vm3371 = vcmask 588800
      %v3373 = vsel %vm3371, %v3326, 0
      %v3376 = vsel %vm3371, %v3327, 0
      %v3379 = vsel %vm3371, %v3328, 0
      %v3382 = vsel %vm3371, %v3329, 0
      %v3385 = vsel %vm3371, %v3330, 0
      %v3388 = vsel %vm3371, %v3331, 0
      %v3391 = vsel %vm3371, %v3332, 0
      %v3394 = vsel %vm3371, %v3333, 0
      %v3397 = vsel %vm3371, %v3334, 0
      %v3400 = vsel %vm3371, %v3335, 0
      %v3403 = vsel %vm3371, %v3336, 0
      %v3406 = vsel %vm3371, %v3337, 0
      %v3409 = vsel %vm3371, %v3338, 0
      %v3412 = vsel %vm3371, %v3339, 0
      %v3415 = vsel %vm3371, %v3340, 0
      %v3418 = vsel %vm3371, %v3341, 0
      %v3421 = vsel %vm3371, %v3342, 0
      %v3424 = vsel %vm3371, %v3343, 0
      %v3427 = vsel %vm3371, %v3344, 0
      %v3430 = vsel %vm3371, %v3345, 0
      %v3433 = vsel %vm3371, %v3346, 0
      %v3436 = vsel %vm3371, %v3347, 0
      %v3439 = vsel %vm3371, %v3348, 0
      %v3442 = vsel %vm3371, %v3349, 0
      %v3445 = vsel %vm3371, %v3350, 0
      %v3448 = vsel %vm3371, %v3351, 0
      %v3451 = vsel %vm3371, %v3352, 0
      %v3454 = vsel %vm3371, %v3353, 0
      %v3457 = vsel %vm3371, %v3354, 0
      %v3460 = vsel %vm3371, %v3355, 0
      %v3463 = vsel %vm3371, %v3356, 0
      %v3466 = vsel %vm3371, %v3357, 0
      %3468 = vmatpush.msra.mxu0 0.0
      %3469 = vmatpush.msra.mxu0 0.0
      %3470 = vmatpush.msra.mxu0 0.0
      %3471 = vmatpush.msra.mxu0 0.0
      %3472 = vmatpush.msra.mxu0 0.0
      %3473 = vmatpush.msra.mxu0 0.0
      %3474 = vmatpush.msra.mxu0 0.0
      %3475 = vmatpush.msra.mxu0 %v3366
      %3476 = vmatpush.msra.mxu0 %v3365
      %3477 = vmatpush.msra.mxu0 %v3364
      %3478 = vmatpush.msra.mxu0 %v3363
      %3479 = vmatpush.msra.mxu0 %v3362
      %3480 = vmatpush.msra.mxu0 %v3361
      %3481 = vmatpush.msra.mxu0 %v3360
      %3482 = vmatpush.msra.mxu0 %v3359
      %3483 = vmatpush.msra.mxu0 %v3358
      %3484 = vmatmul.f32.gmra.mxu0 %v3373
      %v3485 = vpop.f32.mrf.mxu0
      %v3486 = vadd.f32 %v3369, %v3485
      %3487 = vmatmul.f32.gmra.mxu0 %v3376
      %v3488 = vpop.f32.mrf.mxu0
      %v3489 = vadd.f32 %v3369, %v3488
      %3490 = vmatmul.f32.gmra.mxu0 %v3379
      %v3491 = vpop.f32.mrf.mxu0
      %v3492 = vadd.f32 %v3369, %v3491
      %3493 = vmatmul.f32.gmra.mxu0 %v3382
      %v3494 = vpop.f32.mrf.mxu0
      %v3495 = vadd.f32 %v3369, %v3494
      %3496 = vmatmul.f32.gmra.mxu0 %v3385
      %v3497 = vpop.f32.mrf.mxu0
      %v3498 = vadd.f32 %v3369, %v3497
      %3499 = vmatmul.f32.gmra.mxu0 %v3388
      %v3500 = vpop.f32.mrf.mxu0
      %v3501 = vadd.f32 %v3369, %v3500
      %3502 = vmatmul.f32.gmra.mxu0 %v3391
      %v3503 = vpop.f32.mrf.mxu0
      %v3504 = vadd.f32 %v3369, %v3503
      %3505 = vmatmul.f32.gmra.mxu0 %v3394
      %v3506 = vpop.f32.mrf.mxu0
      %v3507 = vadd.f32 %v3369, %v3506
      %3508 = vmatmul.f32.gmra.mxu0 %v3397
      %v3509 = vpop.f32.mrf.mxu0
      %v3510 = vadd.f32 %v3369, %v3509
      %3511 = vmatmul.f32.gmra.mxu0 %v3400
      %v3512 = vpop.f32.mrf.mxu0
      %v3513 = vadd.f32 %v3369, %v3512
      %3514 = vmatmul.f32.gmra.mxu0 %v3403
      %v3515 = vpop.f32.mrf.mxu0
      %v3516 = vadd.f32 %v3369, %v3515
      %3517 = vmatmul.f32.gmra.mxu0 %v3406
      %v3518 = vpop.f32.mrf.mxu0
      %v3519 = vadd.f32 %v3369, %v3518
      %3520 = vmatmul.f32.gmra.mxu0 %v3409
      %v3521 = vpop.f32.mrf.mxu0
      %v3522 = vadd.f32 %v3369, %v3521
      %3523 = vmatmul.f32.gmra.mxu0 %v3412
      %v3524 = vpop.f32.mrf.mxu0
      %v3525 = vadd.f32 %v3369, %v3524
      %3526 = vmatmul.f32.gmra.mxu0 %v3415
      %v3527 = vpop.f32.mrf.mxu0
      %v3528 = vadd.f32 %v3369, %v3527
      %3529 = vmatmul.f32.gmra.mxu0 %v3418
      %v3530 = vpop.f32.mrf.mxu0
      %v3531 = vadd.f32 %v3369, %v3530
      %3532 = vmatmul.f32.gmra.mxu0 %v3421
      %v3533 = vpop.f32.mrf.mxu0
      %v3534 = vadd.f32 %v3369, %v3533
      %3535 = vmatmul.f32.gmra.mxu0 %v3424
      %v3536 = vpop.f32.mrf.mxu0
      %v3537 = vadd.f32 %v3369, %v3536
      %3538 = vmatmul.f32.gmra.mxu0 %v3427
      %v3539 = vpop.f32.mrf.mxu0
      %v3540 = vadd.f32 %v3369, %v3539
      %3541 = vmatmul.f32.gmra.mxu0 %v3430
      %v3542 = vpop.f32.mrf.mxu0
      %v3543 = vadd.f32 %v3369, %v3542
      %3544 = vmatmul.f32.gmra.mxu0 %v3433
      %v3545 = vpop.f32.mrf.mxu0
      %v3546 = vadd.f32 %v3369, %v3545
      %3547 = vmatmul.f32.gmra.mxu0 %v3436
      %v3548 = vpop.f32.mrf.mxu0
      %v3549 = vadd.f32 %v3369, %v3548
      %3550 = vmatmul.f32.gmra.mxu0 %v3439
      %v3551 = vpop.f32.mrf.mxu0
      %v3552 = vadd.f32 %v3369, %v3551
      %3553 = vmatmul.f32.gmra.mxu0 %v3442
      %v3554 = vpop.f32.mrf.mxu0
      %v3555 = vadd.f32 %v3369, %v3554
      %3556 = vmatmul.f32.gmra.mxu0 %v3445
      %v3557 = vpop.f32.mrf.mxu0
      %v3558 = vadd.f32 %v3369, %v3557
      %3559 = vmatmul.f32.gmra.mxu0 %v3448
      %v3560 = vpop.f32.mrf.mxu0
      %v3561 = vadd.f32 %v3369, %v3560
      %3562 = vmatmul.f32.gmra.mxu0 %v3451
      %v3563 = vpop.f32.mrf.mxu0
      %v3564 = vadd.f32 %v3369, %v3563
      %3565 = vmatmul.f32.gmra.mxu0 %v3454
      %v3566 = vpop.f32.mrf.mxu0
      %v3567 = vadd.f32 %v3369, %v3566
      %3568 = vmatmul.f32.gmra.mxu0 %v3457
      %v3569 = vpop.f32.mrf.mxu0
      %v3570 = vadd.f32 %v3369, %v3569
      %3571 = vmatmul.f32.gmra.mxu0 %v3460
      %v3572 = vpop.f32.mrf.mxu0
      %v3573 = vadd.f32 %v3369, %v3572
      %3574 = vmatmul.f32.gmra.mxu0 %v3463
      %v3575 = vpop.f32.mrf.mxu0
      %v3576 = vadd.f32 %v3369, %v3575
      %3577 = vmatmul.f32.gmra.mxu0 %v3466
      %v3578 = vpop.f32.mrf.mxu0
      %v3579 = vadd.f32 %v3369, %v3578
      %3580 = vdwg.mxu0
      %v3581 = vmul.f32 %v3486, 0.2
      %v3582 = vmul.f32 %v3489, 0.2
      %v3583 = vmul.f32 %v3492, 0.2
      %v3584 = vmul.f32 %v3495, 0.2
      %v3585 = vmul.f32 %v3498, 0.2
      %v3586 = vmul.f32 %v3501, 0.2
      %v3587 = vmul.f32 %v3504, 0.2
      %v3588 = vmul.f32 %v3507, 0.2
      %v3589 = vmul.f32 %v3510, 0.2
      %v3590 = vmul.f32 %v3513, 0.2
      %v3591 = vmul.f32 %v3516, 0.2
      %v3592 = vmul.f32 %v3519, 0.2
      %v3593 = vmul.f32 %v3522, 0.2
      %v3594 = vmul.f32 %v3525, 0.2
      %v3595 = vmul.f32 %v3528, 0.2
      %v3596 = vmul.f32 %v3531, 0.2
      %v3597 = vmul.f32 %v3534, 0.2
      %v3598 = vmul.f32 %v3537, 0.2
      %v3599 = vmul.f32 %v3540, 0.2
      %v3600 = vmul.f32 %v3543, 0.2
      %v3601 = vmul.f32 %v3546, 0.2
      %v3602 = vmul.f32 %v3549, 0.2
      %v3603 = vmul.f32 %v3552, 0.2
      %v3604 = vmul.f32 %v3555, 0.2
      %v3605 = vmul.f32 %v3558, 0.2
      %v3606 = vmul.f32 %v3561, 0.2
      %v3607 = vmul.f32 %v3564, 0.2
      %v3608 = vmul.f32 %v3567, 0.2
      %v3609 = vmul.f32 %v3570, 0.2
      %v3610 = vmul.f32 %v3573, 0.2
      %v3611 = vmul.f32 %v3576, 0.2
      %v3612 = vmul.f32 %v3579, 0.2
      %v3613 = vmax.f32 %v3486, %v3581
      %v3614 = vmax.f32 %v3489, %v3582
      %v3615 = vmax.f32 %v3492, %v3583
      %v3616 = vmax.f32 %v3495, %v3584
      %v3617 = vmax.f32 %v3498, %v3585
      %v3618 = vmax.f32 %v3501, %v3586
      %v3619 = vmax.f32 %v3504, %v3587
      %v3620 = vmax.f32 %v3507, %v3588
      %v3621 = vmax.f32 %v3510, %v3589
      %v3622 = vmax.f32 %v3513, %v3590
      %v3623 = vmax.f32 %v3516, %v3591
      %v3624 = vmax.f32 %v3519, %v3592
      %v3625 = vmax.f32 %v3522, %v3593
      %v3626 = vmax.f32 %v3525, %v3594
      %v3627 = vmax.f32 %v3528, %v3595
      %v3628 = vmax.f32 %v3531, %v3596
      %v3629 = vmax.f32 %v3534, %v3597
      %v3630 = vmax.f32 %v3537, %v3598
      %v3631 = vmax.f32 %v3540, %v3599
      %v3632 = vmax.f32 %v3543, %v3600
      %v3633 = vmax.f32 %v3546, %v3601
      %v3634 = vmax.f32 %v3549, %v3602
      %v3635 = vmax.f32 %v3552, %v3603
      %v3636 = vmax.f32 %v3555, %v3604
      %v3637 = vmax.f32 %v3558, %v3605
      %v3638 = vmax.f32 %v3561, %v3606
      %v3639 = vmax.f32 %v3564, %v3607
      %v3640 = vmax.f32 %v3567, %v3608
      %v3641 = vmax.f32 %v3570, %v3609
      %v3642 = vmax.f32 %v3573, %v3610
      %v3643 = vmax.f32 %v3576, %v3611
      %v3644 = vmax.f32 %v3579, %v3612
      %3645 = vst.msk [vmem:[%s224] sm:$0xff] %vm1436, %v3613
      %3646 = vst.msk [vmem:[%s224 + $0x8] sm:$0xff] %vm1436, %v3614
      %3647 = vst.msk [vmem:[%s224 + $0x10] sm:$0xff] %vm1436, %v3615
      %3648 = vst.msk [vmem:[%s224 + $0x18] sm:$0xff] %vm1436, %v3616
      %3649 = vst.msk [vmem:[%s224 + $0x20] sm:$0xff] %vm1436, %v3617
      %3650 = vst.msk [vmem:[%s224 + $0x28] sm:$0xff] %vm1436, %v3618
      %3651 = vst.msk [vmem:[%s224 + $0x30] sm:$0xff] %vm1436, %v3619
      %3652 = vst.msk [vmem:[%s224 + $0x38] sm:$0xff] %vm1436, %v3620
      %3653 = vst.msk [vmem:[%s224 + $0x40] sm:$0xff] %vm1436, %v3621
      %3654 = vst.msk [vmem:[%s224 + $0x48] sm:$0xff] %vm1436, %v3622
      %3655 = vst.msk [vmem:[%s224 + $0x50] sm:$0xff] %vm1436, %v3623
      %3656 = vst.msk [vmem:[%s224 + $0x58] sm:$0xff] %vm1436, %v3624
      %3657 = vst.msk [vmem:[%s224 + $0x60] sm:$0xff] %vm1436, %v3625
      %3658 = vst.msk [vmem:[%s224 + $0x68] sm:$0xff] %vm1436, %v3626
      %3659 = vst.msk [vmem:[%s224 + $0x70] sm:$0xff] %vm1436, %v3627
      %3660 = vst.msk [vmem:[%s224 + $0x78] sm:$0xff] %vm1436, %v3628
      %3661 = vst.msk [vmem:[%s224 + $0x80] sm:$0xff] %vm1436, %v3629
      %3662 = vst.msk [vmem:[%s224 + $0x88] sm:$0xff] %vm1436, %v3630
      %3663 = vst.msk [vmem:[%s224 + $0x90] sm:$0xff] %vm1436, %v3631
      %3664 = vst.msk [vmem:[%s224 + $0x98] sm:$0xff] %vm1436, %v3632
      %3665 = vst.msk [vmem:[%s224 + $0xa0] sm:$0xff] %vm1436, %v3633
      %3666 = vst.msk [vmem:[%s224 + $0xa8] sm:$0xff] %vm1436, %v3634
      %3667 = vst.msk [vmem:[%s224 + $0xb0] sm:$0xff] %vm1436, %v3635
      %3668 = vst.msk [vmem:[%s224 + $0xb8] sm:$0xff] %vm1436, %v3636
      %3669 = vst.msk [vmem:[%s224 + $0xc0] sm:$0xff] %vm1436, %v3637
      %3670 = vst.msk [vmem:[%s224 + $0xc8] sm:$0xff] %vm1436, %v3638
      %3671 = vst.msk [vmem:[%s224 + $0xd0] sm:$0xff] %vm1436, %v3639
      %3672 = vst.msk [vmem:[%s224 + $0xd8] sm:$0xff] %vm1436, %v3640
      %3673 = vst.msk [vmem:[%s224 + $0xe0] sm:$0xff] %vm1436, %v3641
      %3674 = vst.msk [vmem:[%s224 + $0xe8] sm:$0xff] %vm1436, %v3642
      %3675 = vst.msk [vmem:[%s224 + $0xf0] sm:$0xff] %vm1436, %v3643
      %3676 = vst.msk [vmem:[%s224 + $0xf8] sm:$0xff] %vm1436, %v3644
      %p3677 = scmp.lt.s32.totalorder %s16, 1
      %s3678 = scalar_select %p3677, %s16, 1
      %s3679 = smul.addr %s3678, 32
      %s3680 = smul.addr %s3679, 8
      %s3681 = scalar_lea.vmem %s5, %s3680
      // Predicated region
      $region41: #{tpu_custom_call.1} parent=39 // pred_check
        %p3682 = pneg %p144
      $region42: #{tpu_custom_call.1} parent=39 // pred_check_branch
        %3684 = sbr.rel (%p3682) target = $region44
      $region43: #{tpu_custom_call.1} parent=39 // pred_region
        _
      $region44: #{tpu_custom_call.1} parent=39 // pred_fallthru
        _
    $region40: #{tpu_custom_call.1} parent=5 // pred_fallthru
      _
    %p3685 = scmp.le.s32.totalorder 2, %s11
    // Predicated region
    $region45: #{tpu_custom_call.1} parent=5 // pred_check
      %p3686 = pneg %p3685
    $region46: #{tpu_custom_call.1} parent=5 // pred_check_branch
      %3688 = sbr.rel (%p3686) target = $region48
    $region47: #{tpu_custom_call.1} parent=5 // pred_region
      %s3689 = ssub.s32 %s11, 2
      // Predicated region
      $region49: #{tpu_custom_call.1} parent=47 // pred_check
        %p3690 = pneg %p150
      $region50: #{tpu_custom_call.1} parent=47 // pred_check_branch
        %3692 = sbr.rel (%p3690) target = $region52
      $region51: #{tpu_custom_call.1} parent=47 // pred_region
        %p3693 = scmp.lt.s32.totalorder %s17, 1
        %s3694 = scalar_select %p3693, %s17, 1
        %s3695 = smul.addr %s3694, 32
        %s3696 = smul.addr %s3695, 8
        %s3697 = scalar_lea.vmem %s5, %s3696
      $region52: #{tpu_custom_call.1} parent=47 // pred_fallthru
        _
    $region48: #{tpu_custom_call.1} parent=5 // pred_fallthru
      _
  $region6: #{tpu_custom_call.1} parent=0 // loop_footer
    %s15 = sadd.s32 1, %s11
  $region7: #{tpu_custom_call.1} parent=0 // loop_footer_branch
    %10 = sbr.rel target = $region3
  $region8: #{tpu_custom_call.1} parent=0 // loop_exit
    _

</llo_original>
